<compile_context>
chip_gen: v6e
topology: v6e:2x2x1
jax: 0.10.0
libtpu: 0.0.40
codegen_flags: <defaults>
</compile_context>

<pallas_src>
import jax
import jax.numpy as jnp
from jax.experimental import pallas as pl
from jax.experimental.pallas import tpu as pltpu


BATCH_TILE = 4096      # default rows per grid step (review: 2048-4096)
OUT_COLS = 8           # kernel output columns (real 5, padded to 8); wrapper slices :5


def prey_brain_kernel(x_ref, w1_ref, w2_ref, w3_ref, b_ref, o_ref):
    # x_ref:(TB,12)  w1_ref:(12,128)  w2_ref:(128,128)  w3_ref:(128,8)  b_ref:(8,128)
    # o_ref:(TB,8)
    hp = jax.lax.Precision.HIGHEST

    x = x_ref[...]
    w1 = w1_ref[...]                 # cols >= 32 are zero
    w2 = w2_ref[...]                 # rows >= 32 and cols >= 16 are zero
    w3 = w3_ref[...]                 # rows >= 16 and cols >= 5 are zero
    b = b_ref[...]                   # (8, 128)
    b1 = b[0:1, :]                   # (1, 128), cols >= 32 zero
    b2 = b[1:2, :]                   # (1, 128), cols >= 16 zero
    b3 = b[2:3, 0:OUT_COLS]          # (1, 8),   cols >= 5 zero

    # fc1 + relu : (TB,12) @ (12,128) -> padded lanes stay exactly zero.
    h1 = jnp.maximum(
        jnp.dot(x, w1, preferred_element_type=jnp.float32, precision=hp) + b1, 0.0)
    # fc2 + relu : (TB,128) @ (128,128)
    h2 = jnp.maximum(
        jnp.dot(h1, w2, preferred_element_type=jnp.float32, precision=hp) + b2, 0.0)
    # fc3 : (TB,128) @ (128,8) -> narrow result, narrow store.
    z = jnp.dot(h2, w3, preferred_element_type=jnp.float32, precision=hp) + b3
    y = jnp.tanh(z)

    # y[:, 4] = sigmoid(y[:, 4])  (sigmoid applied to the tanh'd value, as in PyTorch)
    col = jax.lax.broadcasted_iota(jnp.int32, y.shape, dimension=1)
    y = jnp.where(col == 4, jax.nn.sigmoid(y), y)

    o_ref[...] = y.astype(o_ref.dtype)


def pack_params(params):
    """Pack (w1,b1,w2,b2,w3,b3) — weights stored (in, out) — into padded f32 arrays.

    All four arrays use constant index_maps in the pallas_call, so they are DMA'd once
    and stay VMEM-resident across the whole batch grid.
    """
    w1, b1, w2, b2, w3, b3 = params
    w1p = jnp.zeros((12, 128), jnp.float32).at[:, 0:32].set(w1.astype(jnp.float32))
    w2p = jnp.zeros((128, 128), jnp.float32).at[0:32, 0:16].set(w2.astype(jnp.float32))
    w3p = jnp.zeros((128, OUT_COLS), jnp.float32).at[0:16, 0:5].set(w3.astype(jnp.float32))
    bp = jnp.zeros((8, 128), jnp.float32)
    bp = bp.at[0, 0:32].set(b1.astype(jnp.float32))
    bp = bp.at[1, 0:16].set(b2.astype(jnp.float32))
    bp = bp.at[2, 0:5].set(b3.astype(jnp.float32))
    return w1p, w2p, w3p, bp


def _round_up(n, m):
    return ((n + m - 1) // m) * m


def prey_brain_forward(x, packed_params, *, block_b=BATCH_TILE):
    """x: (12,) or (B, 12) float32 -> (5,) or (B, 5) float32."""
    w1p, w2p, w3p, bp = packed_params
    x = jnp.asarray(x, jnp.float32)
    single = x.ndim == 1
    if single:
        x = x[None, :]
    B = x.shape[0]

    # Tile selection: big tiles amortize per-step overhead; but if the batch fits in a
    # single default tile, split it in two so v7x's 2 TensorCores both get a grid step.
    if B > block_b:
        bb = block_b
    else:
        bb = max(8, min(block_b, _round_up(pl.cdiv(B, 2), 8)))
    num_tiles = pl.cdiv(B, bb)

    param_bytes = (12 * 128 + 128 * 128 + 128 * OUT_COLS + 8 * 128) * 4
    cost = pl.CostEstimate(
        flops=2 * B * (12 * 128 + 128 * 128 + 128 * OUT_COLS),
        transcendentals=2 * B * OUT_COLS,
        bytes_accessed=B * (12 + OUT_COLS) * 4 + param_bytes,
    )

    out = pl.pallas_call(
        prey_brain_kernel,
        out_shape=jax.ShapeDtypeStruct((B, OUT_COLS), jnp.float32),
        grid=(num_tiles,),
        in_specs=[
            pl.BlockSpec((bb, 12), lambda i: (i, 0)),        # x tile (ragged last block OK)
            pl.BlockSpec((12, 128), lambda i: (0, 0)),       # W1: VMEM-resident
            pl.BlockSpec((128, 128), lambda i: (0, 0)),      # W2: VMEM-resident
            pl.BlockSpec((128, OUT_COLS), lambda i: (0, 0)), # W3: VMEM-resident
            pl.BlockSpec((8, 128), lambda i: (0, 0)),        # biases: VMEM-resident
        ],
        out_specs=pl.BlockSpec((bb, OUT_COLS), lambda i: (i, 0)),   # narrow output
        compiler_params=pltpu.CompilerParams(
            dimension_semantics=("parallel",),
        ),
        cost_estimate=cost,
    )(x, w1p, w2p, w3p, bp)

    y = out[:, :5]
    return y[0] if single else y


def init_params(key):
    """Deterministic init matching PyTorch nn.Linear default U(-1/sqrt(fan_in), +)."""
    def linear(key, fan_in, fan_out):
        kw, kb = jax.random.split(key)
        bound = 1.0 / jnp.sqrt(jnp.float32(fan_in))
        # stored as (in, out) == transpose of PyTorch's (out, in)
        w = jax.random.uniform(kw, (fan_in, fan_out), jnp.float32, -bound, bound)
        b = jax.random.uniform(kb, (fan_out,), jnp.float32, -bound, bound)
        return w, b

    k1, k2, k3 = jax.random.split(key, 3)
    w1, b1 = linear(k1, 12, 32)
    w2, b2 = linear(k2, 32, 16)
    w3, b3 = linear(k3, 16, 5)
    return (w1, b1, w2, b2, w3, b3)


def reference_forward(x, params):
    """Pure-JAX reference of the PyTorch forward (works for (12,) or (B,12))."""
    w1, b1, w2, b2, w3, b3 = params
    hp = jax.lax.Precision.HIGHEST
    h1 = jnp.maximum(jnp.dot(x, w1, precision=hp) + b1, 0.0)
    h2 = jnp.maximum(jnp.dot(h1, w2, precision=hp) + b2, 0.0)
    y = jnp.tanh(jnp.dot(h2, w3, precision=hp) + b3)
    y = y.at[..., 4].set(jax.nn.sigmoid(y[..., 4]))
    return y


if __name__ == "__main__":
    key = jax.random.PRNGKey(0)
    kp, kx = jax.random.split(key)
    params = init_params(kp)
    packed = pack_params(params)

    # Batched path: B=300 exercises the 2-step grid and a ragged final block.
    xb = jax.random.normal(kx, (300, 12), jnp.float32)
    out_b = jax.block_until_ready(prey_brain_forward(xb, packed))
    ref_b = reference_forward(xb, params)
    assert out_b.shape == (300, 5)
    assert jnp.allclose(out_b, ref_b, atol=1e-5, rtol=1e-5), (out_b[:2], ref_b[:2])

    # Single-observation path (original module call signature).
    x1 = xb[0]
    out_1 = jax.block_until_ready(prey_brain_forward(x1, packed))
    ref_1 = reference_forward(x1, params)
    assert out_1.shape == (5,)
    assert jnp.allclose(out_1, ref_1, atol=1e-5, rtol=1e-5), (out_1, ref_1)

    print("KERNEL_OK")
</pallas_src>

<mosaic_0001>
module attributes {stable_mosaic.version = 11 : i64} {
  func.func @prey_brain_kernel(%arg0: i32, %arg1: memref<152x12xf32, #tpu.memory_space<vmem>>, %arg2: memref<12x128xf32, #tpu.memory_space<vmem>>, %arg3: memref<128x128xf32, #tpu.memory_space<vmem>>, %arg4: memref<128x8xf32, #tpu.memory_space<vmem>>, %arg5: memref<8x128xf32, #tpu.memory_space<vmem>>, %arg6: memref<152x8xf32, #tpu.memory_space<vmem>>) attributes {dimension_semantics = [#tpu.dimension_semantics<parallel>], iteration_bounds = array<i64: 2>, scalar_prefetch = 0 : i64, scratch_operands = 0 : i64, tpu.core_type = #tpu.core_type<tc>, window_params = [{transform_indices = @transform_0, window_bounds = array<i64: 152, 12>}, {pipeline_mode = #tpu.pipeline_mode<synchronous>, transform_indices = @transform_1, window_bounds = array<i64: 12, 128>}, {pipeline_mode = #tpu.pipeline_mode<synchronous>, transform_indices = @transform_2, window_bounds = array<i64: 128, 128>}, {pipeline_mode = #tpu.pipeline_mode<synchronous>, transform_indices = @transform_3, window_bounds = array<i64: 128, 8>}, {pipeline_mode = #tpu.pipeline_mode<synchronous>, transform_indices = @transform_4, window_bounds = array<i64: 8, 128>}, {transform_indices = @transform_5, window_bounds = array<i64: 152, 8>}]} {
    %c0 = arith.constant 0 : index
    %c0_0 = arith.constant 0 : index
    %0 = vector.load %arg1[%c0, %c0_0] : memref<152x12xf32, #tpu.memory_space<vmem>>, vector<152x12xf32>
    %c0_1 = arith.constant 0 : index
    %c0_2 = arith.constant 0 : index
    %1 = vector.load %arg2[%c0_1, %c0_2] : memref<12x128xf32, #tpu.memory_space<vmem>>, vector<12x128xf32>
    %c0_3 = arith.constant 0 : index
    %c0_4 = arith.constant 0 : index
    %2 = vector.load %arg3[%c0_3, %c0_4] : memref<128x128xf32, #tpu.memory_space<vmem>>, vector<128x128xf32>
    %c0_5 = arith.constant 0 : index
    %c0_6 = arith.constant 0 : index
    %3 = vector.load %arg4[%c0_5, %c0_6] : memref<128x8xf32, #tpu.memory_space<vmem>>, vector<128x8xf32>
    %c0_7 = arith.constant 0 : index
    %c0_8 = arith.constant 0 : index
    %4 = vector.load %arg5[%c0_7, %c0_8] : memref<8x128xf32, #tpu.memory_space<vmem>>, vector<8x128xf32>
    %5 = vector.extract_strided_slice %4 {offsets = [0, 0], sizes = [1, 128], strides = [1, 1]} : vector<8x128xf32> to vector<1x128xf32>
    %6 = vector.extract_strided_slice %4 {offsets = [1, 0], sizes = [1, 128], strides = [1, 1]} : vector<8x128xf32> to vector<1x128xf32>
    %7 = vector.extract_strided_slice %4 {offsets = [2, 0], sizes = [1, 8], strides = [1, 1]} : vector<8x128xf32> to vector<1x8xf32>
    %cst = arith.constant dense<0.000000e+00> : vector<152x128xf32>
    %8 = tpu.matmul %0, %1, %cst {dimension_numbers = #tpu.dot_dimension_numbers<[1], [0], [0], [1], [0, 0, 1, 1], [], []>, precision = #tpu.contract_precision<fp32>} : vector<152x12xf32>, vector<12x128xf32>, vector<152x128xf32> -> vector<152x128xf32>
    %9 = vector.broadcast %5 : vector<1x128xf32> to vector<152x128xf32>
    %10 = arith.addf %8, %9 : vector<152x128xf32>
    %cst_9 = arith.constant 0.000000e+00 : f32
    %11 = vector.broadcast %cst_9 : f32 to vector<152x128xf32>
    %12 = arith.maximumf %10, %11 : vector<152x128xf32>
    %cst_10 = arith.constant dense<0.000000e+00> : vector<152x128xf32>
    %13 = tpu.matmul %12, %2, %cst_10 {dimension_numbers = #tpu.dot_dimension_numbers<[1], [0], [0], [1], [0, 0, 1, 1], [], []>, precision = #tpu.contract_precision<fp32>} : vector<152x128xf32>, vector<128x128xf32>, vector<152x128xf32> -> vector<152x128xf32>
    %14 = vector.broadcast %6 : vector<1x128xf32> to vector<152x128xf32>
    %15 = arith.addf %13, %14 : vector<152x128xf32>
    %cst_11 = arith.constant 0.000000e+00 : f32
    %16 = vector.broadcast %cst_11 : f32 to vector<152x128xf32>
    %17 = arith.maximumf %15, %16 : vector<152x128xf32>
    %cst_12 = arith.constant dense<0.000000e+00> : vector<152x8xf32>
    %18 = tpu.matmul %17, %3, %cst_12 {dimension_numbers = #tpu.dot_dimension_numbers<[1], [0], [0], [1], [0, 0, 1, 1], [], []>, precision = #tpu.contract_precision<fp32>} : vector<152x128xf32>, vector<128x8xf32>, vector<152x8xf32> -> vector<152x8xf32>
    %19 = vector.broadcast %7 : vector<1x8xf32> to vector<152x8xf32>
    %20 = arith.addf %18, %19 : vector<152x8xf32>
    %21 = math.tanh %20 : vector<152x8xf32>
    %22 = tpu.iota {dimensions = array<i32: 1>} : vector<152x8xi32>
    %c4_i32 = arith.constant 4 : i32
    %23 = vector.broadcast %c4_i32 : i32 to vector<152x8xi32>
    %24 = arith.cmpi eq, %22, %23 : vector<152x8xi32>
    %25 = arith.negf %21 : vector<152x8xf32>
    %26 = math.exp %25 : vector<152x8xf32>
    %cst_13 = arith.constant 1.000000e+00 : f32
    %27 = vector.broadcast %cst_13 : f32 to vector<152x8xf32>
    %28 = arith.addf %27, %26 : vector<152x8xf32>
    %29 = arith.divf %27, %28 : vector<152x8xf32>
    %30 = arith.select %24, %29, %21 : vector<152x8xi1>, vector<152x8xf32>
    %c0_14 = arith.constant 0 : index
    %c0_15 = arith.constant 0 : index
    %31 = vector.load %arg6[%c0_14, %c0_15] : memref<152x8xf32, #tpu.memory_space<vmem>>, vector<152x8xf32>
    tpu.vector_store %arg6[%c0_14, %c0_15], %30 {strides = array<i32>} : memref<152x8xf32, #tpu.memory_space<vmem>>, vector<152x8xf32>,
    return
  }
  func.func @transform_0(%arg0: i32) -> (i32, i32) {
    %c0_i32 = arith.constant 0 : i32
    %c0_i32_0 = arith.constant 0 : i32
    return %arg0, %c0_i32 : i32, i32
  }
  func.func @transform_1(%arg0: i32) -> (i32, i32) {
    %c0_i32 = arith.constant 0 : i32
    %c0_i32_0 = arith.constant 0 : i32
    %c0_i32_1 = arith.constant 0 : i32
    return %c0_i32, %c0_i32_0 : i32, i32
  }
  func.func @transform_2(%arg0: i32) -> (i32, i32) {
    %c0_i32 = arith.constant 0 : i32
    %c0_i32_0 = arith.constant 0 : i32
    %c0_i32_1 = arith.constant 0 : i32
    return %c0_i32, %c0_i32_0 : i32, i32
  }
  func.func @transform_3(%arg0: i32) -> (i32, i32) {
    %c0_i32 = arith.constant 0 : i32
    %c0_i32_0 = arith.constant 0 : i32
    %c0_i32_1 = arith.constant 0 : i32
    return %c0_i32, %c0_i32_0 : i32, i32
  }
  func.func @transform_4(%arg0: i32) -> (i32, i32) {
    %c0_i32 = arith.constant 0 : i32
    %c0_i32_0 = arith.constant 0 : i32
    %c0_i32_1 = arith.constant 0 : i32
    return %c0_i32, %c0_i32_0 : i32, i32
  }
  func.func @transform_5(%arg0: i32) -> (i32, i32) {
    %c0_i32 = arith.constant 0 : i32
    %c0_i32_0 = arith.constant 0 : i32
    return %arg0, %c0_i32 : i32, i32
  }
}

</mosaic_0001>

<llo_original>
// kernel: tpu_custom_call.1
$region0: #{tpu_custom_call.1}
  #allocation0 [shape = 'u32[]', space=smem, size = 0x4, offset = 0x4, fixed_abs, tag = 'smem constant byte address 0x4 - core index']
  #allocation1 [shape = 'u32[144,128]{1,0:T(1,128)}', space=vmem, size = 0x12000, scoped, tag = 'internal scratch']
  %s0 = inlined_call_operand.vmem [shape: f32[300,12], index: 0, kind: input, shape index: {}]
  %s1 = inlined_call_operand.vmem [shape: f32[12,128], index: 1, kind: input, shape index: {}]
  %s2 = inlined_call_operand.vmem [shape: f32[128,128], index: 2, kind: input, shape index: {}]
  %s3 = inlined_call_operand.vmem [shape: f32[128,8], index: 3, kind: input, shape index: {}]
  %s4 = inlined_call_operand.vmem [shape: f32[8,128], index: 4, kind: input, shape index: {}]
  %s5 = inlined_call_operand.vmem [shape: f32[300,8], index: 5, kind: output, shape index: {}]
  %s6 = sld [smem:[#allocation0]]
  $region53: #{tpu_custom_call.1} parent=0
    _
  %s8 = ssub.s32 1, %s6
  %s9 = scalar_select 0, %s8, %s6
  loop: start=0, step=1, limit=4
  $region2: #{tpu_custom_call.1} parent=0 // loop_pre_header
    _
  $region3: #{tpu_custom_call.1} parent=0 // loop_header
    %s11 = sphi 0, %s15
    %p12 = scmp.ge.s32.totalorder %s11, 4
    %s21 = sphi 0, %s23
    %s24 = sphi 0, %s21
    %s25 = sphi 0, %s24
    %s41 = sphi 0, %s25
    %s45 = sphi 0, %s45
    %s47 = sphi 0, %s45
    %s48 = sphi 0, %s47
    %s62 = sphi 0, %s48
    %s66 = sphi 0, %s66
    %s68 = sphi 0, %s66
    %s69 = sphi 0, %s68
    %s83 = sphi 0, %s69
    %s87 = sphi 0, %s87
    %s89 = sphi 0, %s87
    %s90 = sphi 0, %s89
    %s104 = sphi 0, %s90
    %s108 = sphi 0, %s108
    %s110 = sphi 0, %s108
    %s111 = sphi 0, %s110
    %s125 = sphi 0, %s111
    %s131 = sphi 0, %s133
    %s134 = sphi 0, %s131
    %s135 = sphi 0, %s134
    %s151 = sphi 0, %s135
  $region4: #{tpu_custom_call.1} parent=0 // loop_header_branch
    %14 = sbr.rel (%p12) target = $region8
  $region5: #{tpu_custom_call.1} parent=0 // loop_body
    %s16 = ssub.s32 %s11, 1
    %s17 = ssub.s32 %s11, 2
    %s18 = sadd.s32 %s11, 1
    %s19 = ssub.s32 %s11, %s18
    %p20 = scmp.eq.s32.totalorder %s19, 0
    %s22 = sadd.s32 %s21, 1
    %s23 = scalar_select %p20, %s21, %s22
    %p26 = pneg %p20
    %p27 = scmp.eq.s32.totalorder %s11, 1
    %p28 = por %p26, %p27
    %p29 = scmp.ne.s32.totalorder %s21, %s24
    %p30 = scmp.eq.s32.totalorder %s11, 0
    %p31 = por %p29, %p30
    %p32 = scmp.ne.s32.totalorder %s21, %s24
    %p33 = scmp.eq.s32.totalorder %s16, 1
    %p34 = por %p32, %p33
    %p35 = scmp.ne.s32.totalorder %s24, %s25
    %p36 = scmp.eq.s32.totalorder %s16, 0
    %p37 = por %p35, %p36
    %p38 = scmp.ne.s32.totalorder %s24, %s25
    %p39 = scmp.eq.s32.totalorder %s17, 1
    %p40 = por %p38, %p39
    %p42 = scmp.ne.s32.totalorder %s25, %s41
    %p43 = scmp.eq.s32.totalorder %s17, 0
    %p44 = por %p42, %p43
    %s46 = sadd.s32 %s45, 1
    %p49 = scmp.eq.s32.totalorder %s11, 1
    %p50 = scmp.ne.s32.totalorder %s45, %s47
    %p51 = scmp.eq.s32.totalorder %s11, 0
    %p52 = por %p50, %p51
    %p53 = scmp.ne.s32.totalorder %s45, %s47
    %p54 = scmp.eq.s32.totalorder %s16, 1
    %p55 = por %p53, %p54
    %p56 = scmp.ne.s32.totalorder %s47, %s48
    %p57 = scmp.eq.s32.totalorder %s16, 0
    %p58 = por %p56, %p57
    %p59 = scmp.ne.s32.totalorder %s47, %s48
    %p60 = scmp.eq.s32.totalorder %s17, 1
    %p61 = por %p59, %p60
    %p63 = scmp.ne.s32.totalorder %s48, %s62
    %p64 = scmp.eq.s32.totalorder %s17, 0
    %p65 = por %p63, %p64
    %s67 = sadd.s32 %s66, 1
    %p70 = scmp.eq.s32.totalorder %s11, 1
    %p71 = scmp.ne.s32.totalorder %s66, %s68
    %p72 = scmp.eq.s32.totalorder %s11, 0
    %p73 = por %p71, %p72
    %p74 = scmp.ne.s32.totalorder %s66, %s68
    %p75 = scmp.eq.s32.totalorder %s16, 1
    %p76 = por %p74, %p75
    %p77 = scmp.ne.s32.totalorder %s68, %s69
    %p78 = scmp.eq.s32.totalorder %s16, 0
    %p79 = por %p77, %p78
    %p80 = scmp.ne.s32.totalorder %s68, %s69
    %p81 = scmp.eq.s32.totalorder %s17, 1
    %p82 = por %p80, %p81
    %p84 = scmp.ne.s32.totalorder %s69, %s83
    %p85 = scmp.eq.s32.totalorder %s17, 0
    %p86 = por %p84, %p85
    %s88 = sadd.s32 %s87, 1
    %p91 = scmp.eq.s32.totalorder %s11, 1
    %p92 = scmp.ne.s32.totalorder %s87, %s89
    %p93 = scmp.eq.s32.totalorder %s11, 0
    %p94 = por %p92, %p93
    %p95 = scmp.ne.s32.totalorder %s87, %s89
    %p96 = scmp.eq.s32.totalorder %s16, 1
    %p97 = por %p95, %p96
    %p98 = scmp.ne.s32.totalorder %s89, %s90
    %p99 = scmp.eq.s32.totalorder %s16, 0
    %p100 = por %p98, %p99
    %p101 = scmp.ne.s32.totalorder %s89, %s90
    %p102 = scmp.eq.s32.totalorder %s17, 1
    %p103 = por %p101, %p102
    %p105 = scmp.ne.s32.totalorder %s90, %s104
    %p106 = scmp.eq.s32.totalorder %s17, 0
    %p107 = por %p105, %p106
    %s109 = sadd.s32 %s108, 1
    %p112 = scmp.eq.s32.totalorder %s11, 1
    %p113 = scmp.ne.s32.totalorder %s108, %s110
    %p114 = scmp.eq.s32.totalorder %s11, 0
    %p115 = por %p113, %p114
    %p116 = scmp.ne.s32.totalorder %s108, %s110
    %p117 = scmp.eq.s32.totalorder %s16, 1
    %p118 = por %p116, %p117
    %p119 = scmp.ne.s32.totalorder %s110, %s111
    %p120 = scmp.eq.s32.totalorder %s16, 0
    %p121 = por %p119, %p120
    %p122 = scmp.ne.s32.totalorder %s110, %s111
    %p123 = scmp.eq.s32.totalorder %s17, 1
    %p124 = por %p122, %p123
    %p126 = scmp.ne.s32.totalorder %s111, %s125
    %p127 = scmp.eq.s32.totalorder %s17, 0
    %p128 = por %p126, %p127
    %s129 = ssub.s32 %s11, %s18
    %p130 = scmp.eq.s32.totalorder %s129, 0
    %s132 = sadd.s32 %s131, 1
    %s133 = scalar_select %p130, %s131, %s132
    %p136 = pneg %p130
    %p137 = scmp.eq.s32.totalorder %s11, 1
    %p138 = por %p136, %p137
    %p139 = scmp.ne.s32.totalorder %s131, %s134
    %p140 = scmp.eq.s32.totalorder %s11, 0
    %p141 = por %p139, %p140
    %p142 = scmp.ne.s32.totalorder %s131, %s134
    %p143 = scmp.eq.s32.totalorder %s16, 1
    %p144 = por %p142, %p143
    %p145 = scmp.ne.s32.totalorder %s134, %s135
    %p146 = scmp.eq.s32.totalorder %s16, 0
    %p147 = por %p145, %p146
    %p148 = scmp.ne.s32.totalorder %s134, %s135
    %p149 = scmp.eq.s32.totalorder %s17, 1
    %p150 = por %p148, %p149
    %p152 = scmp.ne.s32.totalorder %s135, %s151
    %p153 = scmp.eq.s32.totalorder %s17, 0
    %p154 = por %p152, %p153
    %p155 = scmp.le.s32.totalorder 1, %s11
    %p156 = scmp.lt.s32.totalorder %s11, 3
    %p157 = pnand %p155, %p156
    %p158 = pneg %p157
    // Predicated region
    $region9: #{tpu_custom_call.1} parent=5 // pred_check
      _
    $region10: #{tpu_custom_call.1} parent=5 // pred_check_branch
      %160 = sbr.rel (%p157) target = $region12
    $region11: #{tpu_custom_call.1} parent=5 // pred_region
      %s161 = ssub.s32 %s11, 1
      // Predicated region
      $region13: #{tpu_custom_call.1} parent=11 // pred_check
        %p162 = pneg %p58
      $region14: #{tpu_custom_call.1} parent=11 // pred_check_branch
        %164 = sbr.rel (%p162) target = $region16
      $region15: #{tpu_custom_call.1} parent=11 // pred_region
        _
      $region16: #{tpu_custom_call.1} parent=11 // pred_fallthru
        _
      // Predicated region
      $region17: #{tpu_custom_call.1} parent=11 // pred_check
        %p165 = pneg %p79
      $region18: #{tpu_custom_call.1} parent=11 // pred_check_branch
        %167 = sbr.rel (%p165) target = $region20
      $region19: #{tpu_custom_call.1} parent=11 // pred_region
        _
      $region20: #{tpu_custom_call.1} parent=11 // pred_fallthru
        _
      // Predicated region
      $region21: #{tpu_custom_call.1} parent=11 // pred_check
        %p168 = pneg %p100
      $region22: #{tpu_custom_call.1} parent=11 // pred_check_branch
        %170 = sbr.rel (%p168) target = $region24
      $region23: #{tpu_custom_call.1} parent=11 // pred_region
        _
      $region24: #{tpu_custom_call.1} parent=11 // pred_fallthru
        _
      // Predicated region
      $region25: #{tpu_custom_call.1} parent=11 // pred_check
        %p171 = pneg %p121
      $region26: #{tpu_custom_call.1} parent=11 // pred_check_branch
        %173 = sbr.rel (%p171) target = $region28
      $region27: #{tpu_custom_call.1} parent=11 // pred_region
        _
      $region28: #{tpu_custom_call.1} parent=11 // pred_fallthru
        _
    $region12: #{tpu_custom_call.1} parent=5 // pred_fallthru
      _
    %p174 = scmp.lt.s32.totalorder %s11, 2
    // Predicated region
    $region29: #{tpu_custom_call.1} parent=5 // pred_check
      %p175 = pneg %p174
    $region30: #{tpu_custom_call.1} parent=5 // pred_check_branch
      %177 = sbr.rel (%p175) target = $region32
    $region31: #{tpu_custom_call.1} parent=5 // pred_region
      // Predicated region
      $region33: #{tpu_custom_call.1} parent=31 // pred_check
        %p178 = pneg %p31
      $region34: #{tpu_custom_call.1} parent=31 // pred_check_branch
        %180 = sbr.rel (%p178) target = $region36
      $region35: #{tpu_custom_call.1} parent=31 // pred_region
        %s181 = smul.u32 19, %s11
        %p182 = scmp.lt.s32.totalorder %s181, 37
        %s183 = scalar_select %p182, %s181, 37
        %s184 = smul.addr %s183, 8
        %s185 = scalar_lea.vmem %s0, %s184
        %s186 = smul.u32 19, %s11
      $region36: #{tpu_custom_call.1} parent=31 // pred_fallthru
        _
    $region32: #{tpu_custom_call.1} parent=5 // pred_fallthru
      _
    %p187 = scmp.le.s32.totalorder 1, %s11
    %p188 = scmp.lt.s32.totalorder %s11, 3
    %p189 = pnand %p187, %p188
    %p190 = pneg %p189
    // Predicated region
    $region37: #{tpu_custom_call.1} parent=5 // pred_check
      _
    $region38: #{tpu_custom_call.1} parent=5 // pred_check_branch
      %192 = sbr.rel (%p189) target = $region40
    $region39: #{tpu_custom_call.1} parent=5 // pred_region
      %s193 = ssub.s32 %s11, 1
      %s194 = smul.u32 19, %s16
      %p195 = scmp.lt.s32.totalorder %s194, 37
      %s196 = scalar_select %p195, %s194, 37
      %s197 = smul.addr %s196, 8
      %s198 = scalar_lea.vmem %s0, %s197
      %p199 = pneg %p37
      %p200 = pneg %p34
      %p201 = pneg %p58
      %p202 = pneg %p55
      %p203 = pneg %p79
      %p204 = pneg %p76
      %p205 = pneg %p100
      %p206 = pneg %p97
      %p207 = pneg %p121
      %p208 = pneg %p118
      %p209 = pneg %p147
      %p210 = pneg %p144
      %s211 = smul.u32 19, %s16
      %p212 = scmp.lt.s32.totalorder %s211, 37
      %s213 = scalar_select %p212, %s211, 37
      %s214 = smul.addr %s213, 8
      %s215 = scalar_lea.vmem %s5, %s214
      %s216 = smul.u32 19, %s16
      %p217 = scmp.lt.s32.totalorder %s216, 37
      %s218 = scalar_select %p217, %s216, 37
      %s219 = smul.addr %s218, 8
      %s220 = scalar_lea.vmem %s0, %s219
      %s221 = smul.u32 19, %s16
      %s222 = smul.u32 19, %s16
      %p223 = scmp.lt.s32.totalorder %s222, 37
      %s224 = scalar_select %p223, %s222, 37
      %s225 = smul.addr %s224, 8
      %s226 = scalar_lea.vmem %s5, %s225
      %s227 = smul.u32 19, %s16
      %v228 = vld [vmem:[%s220] sm:$0xff]
      %v229 = vld [vmem:[%s220 + $0x8] sm:$0xff]
      %v230 = vld [vmem:[%s220 + $0x10] sm:$0xff]
      %v231 = vld [vmem:[%s220 + $0x18] sm:$0xff]
      %v232 = vld [vmem:[%s220 + $0x20] sm:$0xff]
      %v233 = vld [vmem:[%s220 + $0x28] sm:$0xff]
      %v234 = vld [vmem:[%s220 + $0x30] sm:$0xff]
      %v235 = vld [vmem:[%s220 + $0x38] sm:$0xff]
      %v236 = vld [vmem:[%s220 + $0x40] sm:$0xff]
      %v237 = vld [vmem:[%s220 + $0x48] sm:$0xff]
      %v238 = vld [vmem:[%s220 + $0x50] sm:$0xff]
      %v239 = vld [vmem:[%s220 + $0x58] sm:$0xff]
      %v240 = vld [vmem:[%s220 + $0x60] sm:$0xff]
      %v241 = vld [vmem:[%s220 + $0x68] sm:$0xff]
      %v242 = vld [vmem:[%s220 + $0x70] sm:$0xff]
      %v243 = vld [vmem:[%s220 + $0x78] sm:$0xff]
      %v244 = vld [vmem:[%s220 + $0x80] sm:$0xff]
      %v245 = vld [vmem:[%s220 + $0x88] sm:$0xff]
      %v246 = vld [vmem:[%s220 + $0x90] sm:$0xff]
      %v247 = vld [vmem:[%s1] sm:$0xff]
      %v248 = vld [vmem:[%s1 + $0x8] sm:$0xf]
      %v249 = vld [vmem:[%s2] sm:$0xff]
      %v250 = vld [vmem:[%s2 + $0x8] sm:$0xff]
      %v251 = vld [vmem:[%s2 + $0x10] sm:$0xff]
      %v252 = vld [vmem:[%s2 + $0x18] sm:$0xff]
      %v253 = vld [vmem:[%s2 + $0x20] sm:$0xff]
      %v254 = vld [vmem:[%s2 + $0x28] sm:$0xff]
      %v255 = vld [vmem:[%s2 + $0x30] sm:$0xff]
      %v256 = vld [vmem:[%s2 + $0x38] sm:$0xff]
      %v257 = vld [vmem:[%s2 + $0x40] sm:$0xff]
      %v258 = vld [vmem:[%s2 + $0x48] sm:$0xff]
      %v259 = vld [vmem:[%s2 + $0x50] sm:$0xff]
      %v260 = vld [vmem:[%s2 + $0x58] sm:$0xff]
      %v261 = vld [vmem:[%s2 + $0x60] sm:$0xff]
      %v262 = vld [vmem:[%s2 + $0x68] sm:$0xff]
      %v263 = vld [vmem:[%s2 + $0x70] sm:$0xff]
      %v264 = vld [vmem:[%s2 + $0x78] sm:$0xff]
      %v265 = vld [vmem:[%s3] sm:$0xff]
      %v266 = vld [vmem:[%s3 + $0x8] sm:$0xff]
      %v267 = vld [vmem:[%s3 + $0x10] sm:$0xff]
      %v268 = vld [vmem:[%s3 + $0x18] sm:$0xff]
      %v269 = vld [vmem:[%s3 + $0x20] sm:$0xff]
      %v270 = vld [vmem:[%s3 + $0x28] sm:$0xff]
      %v271 = vld [vmem:[%s3 + $0x30] sm:$0xff]
      %v272 = vld [vmem:[%s3 + $0x38] sm:$0xff]
      %v273 = vld [vmem:[%s3 + $0x40] sm:$0xff]
      %v274 = vld [vmem:[%s3 + $0x48] sm:$0xff]
      %v275 = vld [vmem:[%s3 + $0x50] sm:$0xff]
      %v276 = vld [vmem:[%s3 + $0x58] sm:$0xff]
      %v277 = vld [vmem:[%s3 + $0x60] sm:$0xff]
      %v278 = vld [vmem:[%s3 + $0x68] sm:$0xff]
      %v279 = vld [vmem:[%s3 + $0x70] sm:$0xff]
      %v280 = vld [vmem:[%s3 + $0x78] sm:$0xff]
      %v281 = vld [vmem:[%s4] sm:$0xff]
      %v282 = vlaneseq
      %v283 = vshrl.u32 %v282, 7
      %v284 = vsub.s32 0, %v283
      %v285 = vrot.slane %v281, %v284
      %vm286 = vcmask 97280
      %v288 = vsel %vm286, %v228, 0
      %v291 = vsel %vm286, %v229, 0
      %v294 = vsel %vm286, %v230, 0
      %v297 = vsel %vm286, %v231, 0
      %v300 = vsel %vm286, %v232, 0
      %v303 = vsel %vm286, %v233, 0
      %v306 = vsel %vm286, %v234, 0
      %v309 = vsel %vm286, %v235, 0
      %v312 = vsel %vm286, %v236, 0
      %v315 = vsel %vm286, %v237, 0
      %v318 = vsel %vm286, %v238, 0
      %v321 = vsel %vm286, %v239, 0
      %v324 = vsel %vm286, %v240, 0
      %v327 = vsel %vm286, %v241, 0
      %v330 = vsel %vm286, %v242, 0
      %v333 = vsel %vm286, %v243, 0
      %v336 = vsel %vm286, %v244, 0
      %v339 = vsel %vm286, %v245, 0
      %v342 = vsel %vm286, %v246, 0
      %vm344 = vcmask 1043456
      %v346 = vsel %vm344, %v248, 0
      %348 = vmatprep.subr.mxu0 0.0
      %349 = vmatpush1.msra.mxu0 0.0
      %350 = vmatprep.subr.mxu0 0.0
      %351 = vmatpush1.msra.mxu0 0.0
      %352 = vmatprep.subr.mxu0 0.0
      %353 = vmatpush1.msra.mxu0 0.0
      %354 = vmatprep.subr.mxu0 0.0
      %355 = vmatpush1.msra.mxu0 0.0
      %356 = vmatprep.subr.mxu0 0.0
      %357 = vmatpush1.msra.mxu0 0.0
      %358 = vmatprep.subr.mxu0 0.0
      %359 = vmatpush1.msra.mxu0 0.0
      %360 = vmatprep.subr.mxu0 0.0
      %361 = vmatpush1.msra.mxu0 0.0
      %362 = vmatprep.subr.mxu0 0.0
      %363 = vmatpush1.msra.mxu0 0.0
      %364 = vmatprep.subr.mxu0 0.0
      %365 = vmatpush1.msra.mxu0 0.0
      %366 = vmatprep.subr.mxu0 0.0
      %367 = vmatpush1.msra.mxu0 0.0
      %368 = vmatprep.subr.mxu0 0.0
      %369 = vmatpush1.msra.mxu0 0.0
      %370 = vmatprep.subr.mxu0 0.0
      %371 = vmatpush1.msra.mxu0 0.0
      %372 = vmatprep.subr.mxu0 0.0
      %373 = vmatpush1.msra.mxu0 0.0
      %374 = vmatprep.subr.mxu0 0.0
      %375 = vmatpush1.msra.mxu0 0.0
      %376 = vmatprep.subr.mxu0 0.0
      %v377 = vand.u32 %v346, 4294901760
      %378 = vmatpush1.msra.mxu0 %v377
      %379 = vmatprep.subr.mxu0 0.0
      %v380 = vand.u32 %v247, 4294901760
      %381 = vmatpush1.msra.mxu0 %v380
      %382 = vmatprep.subr.mxu0 0.0
      %383 = vmatpush2.msra.mxu0 0.0
      %384 = vmatprep.subr.mxu0 0.0
      %385 = vmatpush2.msra.mxu0 0.0
      %386 = vmatprep.subr.mxu0 0.0
      %387 = vmatpush2.msra.mxu0 0.0
      %388 = vmatprep.subr.mxu0 0.0
      %389 = vmatpush2.msra.mxu0 0.0
      %390 = vmatprep.subr.mxu0 0.0
      %391 = vmatpush2.msra.mxu0 0.0
      %392 = vmatprep.subr.mxu0 0.0
      %393 = vmatpush2.msra.mxu0 0.0
      %394 = vmatprep.subr.mxu0 0.0
      %395 = vmatpush2.msra.mxu0 0.0
      %396 = vmatprep.subr.mxu0 0.0
      %397 = vmatpush2.msra.mxu0 0.0
      %398 = vmatprep.subr.mxu0 0.0
      %399 = vmatpush2.msra.mxu0 0.0
      %400 = vmatprep.subr.mxu0 0.0
      %401 = vmatpush2.msra.mxu0 0.0
      %402 = vmatprep.subr.mxu0 0.0
      %403 = vmatpush2.msra.mxu0 0.0
      %404 = vmatprep.subr.mxu0 0.0
      %405 = vmatpush2.msra.mxu0 0.0
      %406 = vmatprep.subr.mxu0 0.0
      %407 = vmatpush2.msra.mxu0 0.0
      %408 = vmatprep.subr.mxu0 0.0
      %409 = vmatpush2.msra.mxu0 0.0
      %410 = vmatprep.subr.mxu0 0.0
      %411 = vmatpush2.msra.mxu0 0.0
      %412 = vmatprep.subr.mxu0 0.0
      %413 = vmatpush2.msra.mxu0 0.0
      %414 = vmatprep.mubr.f32.mxu0 0.0
      %v415 = vand.u32 %v288, 4294901760
      %v416 = vsub.f32 %v288, %v415
      %v417 = vand.u32 %v416, 4294901760
      %v418 = vsub.f32 %v416, %v417
      %v419 = vand.u32 %v418, 4294901760
      %420 = vmatmul.mubr.f32.gmra.mxu0 %v419
      %v421 = vpop.f32.mrf.mxu0
      %v422 = vadd.f32 %v285, %v421
      %v423 = vpop.f32.mrf.mxu0
      %424 = vmatprep.mubr.f32.mxu0 0.0
      %v425 = vand.u32 %v291, 4294901760
      %v426 = vsub.f32 %v291, %v425
      %v427 = vand.u32 %v426, 4294901760
      %v428 = vsub.f32 %v426, %v427
      %v429 = vand.u32 %v428, 4294901760
      %430 = vmatmul.mubr.f32.gmra.mxu0 %v429
      %v431 = vpop.f32.mrf.mxu0
      %v432 = vadd.f32 %v285, %v431
      %v433 = vpop.f32.mrf.mxu0
      %434 = vmatprep.mubr.f32.mxu0 0.0
      %v435 = vand.u32 %v294, 4294901760
      %v436 = vsub.f32 %v294, %v435
      %v437 = vand.u32 %v436, 4294901760
      %v438 = vsub.f32 %v436, %v437
      %v439 = vand.u32 %v438, 4294901760
      %440 = vmatmul.mubr.f32.gmra.mxu0 %v439
      %v441 = vpop.f32.mrf.mxu0
      %v442 = vadd.f32 %v285, %v441
      %v443 = vpop.f32.mrf.mxu0
      %444 = vmatprep.mubr.f32.mxu0 0.0
      %v445 = vand.u32 %v297, 4294901760
      %v446 = vsub.f32 %v297, %v445
      %v447 = vand.u32 %v446, 4294901760
      %v448 = vsub.f32 %v446, %v447
      %v449 = vand.u32 %v448, 4294901760
      %450 = vmatmul.mubr.f32.gmra.mxu0 %v449
      %v451 = vpop.f32.mrf.mxu0
      %v452 = vadd.f32 %v285, %v451
      %v453 = vpop.f32.mrf.mxu0
      %454 = vmatprep.mubr.f32.mxu0 0.0
      %v455 = vand.u32 %v300, 4294901760
      %v456 = vsub.f32 %v300, %v455
      %v457 = vand.u32 %v456, 4294901760
      %v458 = vsub.f32 %v456, %v457
      %v459 = vand.u32 %v458, 4294901760
      %460 = vmatmul.mubr.f32.gmra.mxu0 %v459
      %v461 = vpop.f32.mrf.mxu0
      %v462 = vadd.f32 %v285, %v461
      %v463 = vpop.f32.mrf.mxu0
      %464 = vmatprep.mubr.f32.mxu0 0.0
      %v465 = vand.u32 %v303, 4294901760
      %v466 = vsub.f32 %v303, %v465
      %v467 = vand.u32 %v466, 4294901760
      %v468 = vsub.f32 %v466, %v467
      %v469 = vand.u32 %v468, 4294901760
      %470 = vmatmul.mubr.f32.gmra.mxu0 %v469
      %v471 = vpop.f32.mrf.mxu0
      %v472 = vadd.f32 %v285, %v471
      %v473 = vpop.f32.mrf.mxu0
      %474 = vmatprep.mubr.f32.mxu0 0.0
      %v475 = vand.u32 %v306, 4294901760
      %v476 = vsub.f32 %v306, %v475
      %v477 = vand.u32 %v476, 4294901760
      %v478 = vsub.f32 %v476, %v477
      %v479 = vand.u32 %v478, 4294901760
      %480 = vmatmul.mubr.f32.gmra.mxu0 %v479
      %v481 = vpop.f32.mrf.mxu0
      %v482 = vadd.f32 %v285, %v481
      %v483 = vpop.f32.mrf.mxu0
      %484 = vmatprep.mubr.f32.mxu0 0.0
      %v485 = vand.u32 %v309, 4294901760
      %v486 = vsub.f32 %v309, %v485
      %v487 = vand.u32 %v486, 4294901760
      %v488 = vsub.f32 %v486, %v487
      %v489 = vand.u32 %v488, 4294901760
      %490 = vmatmul.mubr.f32.gmra.mxu0 %v489
      %v491 = vpop.f32.mrf.mxu0
      %v492 = vadd.f32 %v285, %v491
      %v493 = vpop.f32.mrf.mxu0
      %494 = vmatprep.mubr.f32.mxu0 0.0
      %v495 = vand.u32 %v312, 4294901760
      %v496 = vsub.f32 %v312, %v495
      %v497 = vand.u32 %v496, 4294901760
      %v498 = vsub.f32 %v496, %v497
      %v499 = vand.u32 %v498, 4294901760
      %500 = vmatmul.mubr.f32.gmra.mxu0 %v499
      %v501 = vpop.f32.mrf.mxu0
      %v502 = vadd.f32 %v285, %v501
      %v503 = vpop.f32.mrf.mxu0
      %504 = vmatprep.mubr.f32.mxu0 0.0
      %v505 = vand.u32 %v315, 4294901760
      %v506 = vsub.f32 %v315, %v505
      %v507 = vand.u32 %v506, 4294901760
      %v508 = vsub.f32 %v506, %v507
      %v509 = vand.u32 %v508, 4294901760
      %510 = vmatmul.mubr.f32.gmra.mxu0 %v509
      %v511 = vpop.f32.mrf.mxu0
      %v512 = vadd.f32 %v285, %v511
      %v513 = vpop.f32.mrf.mxu0
      %514 = vmatprep.mubr.f32.mxu0 0.0
      %v515 = vand.u32 %v318, 4294901760
      %v516 = vsub.f32 %v318, %v515
      %v517 = vand.u32 %v516, 4294901760
      %v518 = vsub.f32 %v516, %v517
      %v519 = vand.u32 %v518, 4294901760
      %520 = vmatmul.mubr.f32.gmra.mxu0 %v519
      %v521 = vpop.f32.mrf.mxu0
      %v522 = vadd.f32 %v285, %v521
      %v523 = vpop.f32.mrf.mxu0
      %524 = vmatprep.mubr.f32.mxu0 0.0
      %v525 = vand.u32 %v321, 4294901760
      %v526 = vsub.f32 %v321, %v525
      %v527 = vand.u32 %v526, 4294901760
      %v528 = vsub.f32 %v526, %v527
      %v529 = vand.u32 %v528, 4294901760
      %530 = vmatmul.mubr.f32.gmra.mxu0 %v529
      %v531 = vpop.f32.mrf.mxu0
      %v532 = vadd.f32 %v285, %v531
      %v533 = vpop.f32.mrf.mxu0
      %534 = vmatprep.mubr.f32.mxu0 0.0
      %v535 = vand.u32 %v324, 4294901760
      %v536 = vsub.f32 %v324, %v535
      %v537 = vand.u32 %v536, 4294901760
      %v538 = vsub.f32 %v536, %v537
      %v539 = vand.u32 %v538, 4294901760
      %540 = vmatmul.mubr.f32.gmra.mxu0 %v539
      %v541 = vpop.f32.mrf.mxu0
      %v542 = vadd.f32 %v285, %v541
      %v543 = vpop.f32.mrf.mxu0
      %544 = vmatprep.mubr.f32.mxu0 0.0
      %v545 = vand.u32 %v327, 4294901760
      %v546 = vsub.f32 %v327, %v545
      %v547 = vand.u32 %v546, 4294901760
      %v548 = vsub.f32 %v546, %v547
      %v549 = vand.u32 %v548, 4294901760
      %550 = vmatmul.mubr.f32.gmra.mxu0 %v549
      %v551 = vpop.f32.mrf.mxu0
      %v552 = vadd.f32 %v285, %v551
      %v553 = vpop.f32.mrf.mxu0
      %554 = vmatprep.mubr.f32.mxu0 0.0
      %v555 = vand.u32 %v330, 4294901760
      %v556 = vsub.f32 %v330, %v555
      %v557 = vand.u32 %v556, 4294901760
      %v558 = vsub.f32 %v556, %v557
      %v559 = vand.u32 %v558, 4294901760
      %560 = vmatmul.mubr.f32.gmra.mxu0 %v559
      %v561 = vpop.f32.mrf.mxu0
      %v562 = vadd.f32 %v285, %v561
      %v563 = vpop.f32.mrf.mxu0
      %564 = vmatprep.mubr.f32.mxu0 0.0
      %v565 = vand.u32 %v333, 4294901760
      %v566 = vsub.f32 %v333, %v565
      %v567 = vand.u32 %v566, 4294901760
      %v568 = vsub.f32 %v566, %v567
      %v569 = vand.u32 %v568, 4294901760
      %570 = vmatmul.mubr.f32.gmra.mxu0 %v569
      %v571 = vpop.f32.mrf.mxu0
      %v572 = vadd.f32 %v285, %v571
      %v573 = vpop.f32.mrf.mxu0
      %574 = vmatprep.mubr.f32.mxu0 0.0
      %v575 = vand.u32 %v336, 4294901760
      %v576 = vsub.f32 %v336, %v575
      %v577 = vand.u32 %v576, 4294901760
      %v578 = vsub.f32 %v576, %v577
      %v579 = vand.u32 %v578, 4294901760
      %580 = vmatmul.mubr.f32.gmra.mxu0 %v579
      %v581 = vpop.f32.mrf.mxu0
      %v582 = vadd.f32 %v285, %v581
      %v583 = vpop.f32.mrf.mxu0
      %584 = vmatprep.mubr.f32.mxu0 0.0
      %v585 = vand.u32 %v339, 4294901760
      %v586 = vsub.f32 %v339, %v585
      %v587 = vand.u32 %v586, 4294901760
      %v588 = vsub.f32 %v586, %v587
      %v589 = vand.u32 %v588, 4294901760
      %590 = vmatmul.mubr.f32.gmra.mxu0 %v589
      %v591 = vpop.f32.mrf.mxu0
      %v592 = vadd.f32 %v285, %v591
      %v593 = vpop.f32.mrf.mxu0
      %594 = vmatprep.mubr.f32.mxu0 0.0
      %v595 = vand.u32 %v342, 4294901760
      %v596 = vsub.f32 %v342, %v595
      %v597 = vand.u32 %v596, 4294901760
      %v598 = vsub.f32 %v596, %v597
      %v599 = vand.u32 %v598, 4294901760
      %600 = vmatmul.mubr.f32.gmra.mxu0 %v599
      %v601 = vpop.f32.mrf.mxu0
      %v602 = vadd.f32 %v285, %v601
      %v603 = vpop.f32.mrf.mxu0
      %604 = vdwg.mxu0
      %605 = vmatprep.subr.mxu0 0.0
      %606 = vmatpush1.msra.mxu0 0.0
      %607 = vmatprep.subr.mxu0 0.0
      %608 = vmatpush1.msra.mxu0 0.0
      %609 = vmatprep.subr.mxu0 0.0
      %610 = vmatpush1.msra.mxu0 0.0
      %611 = vmatprep.subr.mxu0 0.0
      %612 = vmatpush1.msra.mxu0 0.0
      %613 = vmatprep.subr.mxu0 0.0
      %614 = vmatpush1.msra.mxu0 0.0
      %615 = vmatprep.subr.mxu0 0.0
      %616 = vmatpush1.msra.mxu0 0.0
      %617 = vmatprep.subr.mxu0 0.0
      %618 = vmatpush1.msra.mxu0 0.0
      %619 = vmatprep.subr.mxu0 0.0
      %620 = vmatpush1.msra.mxu0 0.0
      %621 = vmatprep.subr.mxu0 0.0
      %622 = vmatpush1.msra.mxu0 0.0
      %623 = vmatprep.subr.mxu0 0.0
      %624 = vmatpush1.msra.mxu0 0.0
      %625 = vmatprep.subr.mxu0 0.0
      %626 = vmatpush1.msra.mxu0 0.0
      %627 = vmatprep.subr.mxu0 0.0
      %628 = vmatpush1.msra.mxu0 0.0
      %629 = vmatprep.subr.mxu0 0.0
      %630 = vmatpush1.msra.mxu0 0.0
      %631 = vmatprep.subr.mxu0 0.0
      %632 = vmatpush1.msra.mxu0 0.0
      %633 = vmatprep.subr.mxu0 0.0
      %v634 = vand.u32 %v346, 4294901760
      %v635 = vsub.f32 %v346, %v634
      %v636 = vand.u32 %v635, 4294901760
      %v637 = vsub.f32 %v635, %v636
      %v638 = vand.u32 %v637, 4294901760
      %639 = vmatpush1.msra.mxu0 %v638
      %640 = vmatprep.subr.mxu0 0.0
      %v641 = vand.u32 %v247, 4294901760
      %v642 = vsub.f32 %v247, %v641
      %v643 = vand.u32 %v642, 4294901760
      %v644 = vsub.f32 %v642, %v643
      %v645 = vand.u32 %v644, 4294901760
      %646 = vmatpush1.msra.mxu0 %v645
      %647 = vmatprep.subr.mxu0 0.0
      %648 = vmatpush2.msra.mxu0 0.0
      %649 = vmatprep.subr.mxu0 0.0
      %650 = vmatpush2.msra.mxu0 0.0
      %651 = vmatprep.subr.mxu0 0.0
      %652 = vmatpush2.msra.mxu0 0.0
      %653 = vmatprep.subr.mxu0 0.0
      %654 = vmatpush2.msra.mxu0 0.0
      %655 = vmatprep.subr.mxu0 0.0
      %656 = vmatpush2.msra.mxu0 0.0
      %657 = vmatprep.subr.mxu0 0.0
      %658 = vmatpush2.msra.mxu0 0.0
      %659 = vmatprep.subr.mxu0 0.0
      %660 = vmatpush2.msra.mxu0 0.0
      %661 = vmatprep.subr.mxu0 0.0
      %662 = vmatpush2.msra.mxu0 0.0
      %663 = vmatprep.subr.mxu0 0.0
      %664 = vmatpush2.msra.mxu0 0.0
      %665 = vmatprep.subr.mxu0 0.0
      %666 = vmatpush2.msra.mxu0 0.0
      %667 = vmatprep.subr.mxu0 0.0
      %668 = vmatpush2.msra.mxu0 0.0
      %669 = vmatprep.subr.mxu0 0.0
      %670 = vmatpush2.msra.mxu0 0.0
      %671 = vmatprep.subr.mxu0 0.0
      %672 = vmatpush2.msra.mxu0 0.0
      %673 = vmatprep.subr.mxu0 0.0
      %674 = vmatpush2.msra.mxu0 0.0
      %675 = vmatprep.subr.mxu0 0.0
      %676 = vmatpush2.msra.mxu0 0.0
      %677 = vmatprep.subr.mxu0 0.0
      %678 = vmatpush2.msra.mxu0 0.0
      %679 = vmatprep.mubr.f32.mxu0 0.0
      %v680 = vand.u32 %v288, 4294901760
      %681 = vmatmul.mubr.f32.gmra.mxu0 %v680
      %v682 = vpop.f32.mrf.mxu0
      %v683 = vadd.f32 %v422, %v682
      %v684 = vpop.f32.mrf.mxu0
      %685 = vmatprep.mubr.f32.mxu0 0.0
      %v686 = vand.u32 %v291, 4294901760
      %687 = vmatmul.mubr.f32.gmra.mxu0 %v686
      %v688 = vpop.f32.mrf.mxu0
      %v689 = vadd.f32 %v432, %v688
      %v690 = vpop.f32.mrf.mxu0
      %691 = vmatprep.mubr.f32.mxu0 0.0
      %v692 = vand.u32 %v294, 4294901760
      %693 = vmatmul.mubr.f32.gmra.mxu0 %v692
      %v694 = vpop.f32.mrf.mxu0
      %v695 = vadd.f32 %v442, %v694
      %v696 = vpop.f32.mrf.mxu0
      %697 = vmatprep.mubr.f32.mxu0 0.0
      %v698 = vand.u32 %v297, 4294901760
      %699 = vmatmul.mubr.f32.gmra.mxu0 %v698
      %v700 = vpop.f32.mrf.mxu0
      %v701 = vadd.f32 %v452, %v700
      %v702 = vpop.f32.mrf.mxu0
      %703 = vmatprep.mubr.f32.mxu0 0.0
      %v704 = vand.u32 %v300, 4294901760
      %705 = vmatmul.mubr.f32.gmra.mxu0 %v704
      %v706 = vpop.f32.mrf.mxu0
      %v707 = vadd.f32 %v462, %v706
      %v708 = vpop.f32.mrf.mxu0
      %709 = vmatprep.mubr.f32.mxu0 0.0
      %v710 = vand.u32 %v303, 4294901760
      %711 = vmatmul.mubr.f32.gmra.mxu0 %v710
      %v712 = vpop.f32.mrf.mxu0
      %v713 = vadd.f32 %v472, %v712
      %v714 = vpop.f32.mrf.mxu0
      %715 = vmatprep.mubr.f32.mxu0 0.0
      %v716 = vand.u32 %v306, 4294901760
      %717 = vmatmul.mubr.f32.gmra.mxu0 %v716
      %v718 = vpop.f32.mrf.mxu0
      %v719 = vadd.f32 %v482, %v718
      %v720 = vpop.f32.mrf.mxu0
      %721 = vmatprep.mubr.f32.mxu0 0.0
      %v722 = vand.u32 %v309, 4294901760
      %723 = vmatmul.mubr.f32.gmra.mxu0 %v722
      %v724 = vpop.f32.mrf.mxu0
      %v725 = vadd.f32 %v492, %v724
      %v726 = vpop.f32.mrf.mxu0
      %727 = vmatprep.mubr.f32.mxu0 0.0
      %v728 = vand.u32 %v312, 4294901760
      %729 = vmatmul.mubr.f32.gmra.mxu0 %v728
      %v730 = vpop.f32.mrf.mxu0
      %v731 = vadd.f32 %v502, %v730
      %v732 = vpop.f32.mrf.mxu0
      %733 = vmatprep.mubr.f32.mxu0 0.0
      %v734 = vand.u32 %v315, 4294901760
      %735 = vmatmul.mubr.f32.gmra.mxu0 %v734
      %v736 = vpop.f32.mrf.mxu0
      %v737 = vadd.f32 %v512, %v736
      %v738 = vpop.f32.mrf.mxu0
      %739 = vmatprep.mubr.f32.mxu0 0.0
      %v740 = vand.u32 %v318, 4294901760
      %741 = vmatmul.mubr.f32.gmra.mxu0 %v740
      %v742 = vpop.f32.mrf.mxu0
      %v743 = vadd.f32 %v522, %v742
      %v744 = vpop.f32.mrf.mxu0
      %745 = vmatprep.mubr.f32.mxu0 0.0
      %v746 = vand.u32 %v321, 4294901760
      %747 = vmatmul.mubr.f32.gmra.mxu0 %v746
      %v748 = vpop.f32.mrf.mxu0
      %v749 = vadd.f32 %v532, %v748
      %v750 = vpop.f32.mrf.mxu0
      %751 = vmatprep.mubr.f32.mxu0 0.0
      %v752 = vand.u32 %v324, 4294901760
      %753 = vmatmul.mubr.f32.gmra.mxu0 %v752
      %v754 = vpop.f32.mrf.mxu0
      %v755 = vadd.f32 %v542, %v754
      %v756 = vpop.f32.mrf.mxu0
      %757 = vmatprep.mubr.f32.mxu0 0.0
      %v758 = vand.u32 %v327, 4294901760
      %759 = vmatmul.mubr.f32.gmra.mxu0 %v758
      %v760 = vpop.f32.mrf.mxu0
      %v761 = vadd.f32 %v552, %v760
      %v762 = vpop.f32.mrf.mxu0
      %763 = vmatprep.mubr.f32.mxu0 0.0
      %v764 = vand.u32 %v330, 4294901760
      %765 = vmatmul.mubr.f32.gmra.mxu0 %v764
      %v766 = vpop.f32.mrf.mxu0
      %v767 = vadd.f32 %v562, %v766
      %v768 = vpop.f32.mrf.mxu0
      %769 = vmatprep.mubr.f32.mxu0 0.0
      %v770 = vand.u32 %v333, 4294901760
      %771 = vmatmul.mubr.f32.gmra.mxu0 %v770
      %v772 = vpop.f32.mrf.mxu0
      %v773 = vadd.f32 %v572, %v772
      %v774 = vpop.f32.mrf.mxu0
      %775 = vmatprep.mubr.f32.mxu0 0.0
      %v776 = vand.u32 %v336, 4294901760
      %777 = vmatmul.mubr.f32.gmra.mxu0 %v776
      %v778 = vpop.f32.mrf.mxu0
      %v779 = vadd.f32 %v582, %v778
      %v780 = vpop.f32.mrf.mxu0
      %781 = vmatprep.mubr.f32.mxu0 0.0
      %v782 = vand.u32 %v339, 4294901760
      %783 = vmatmul.mubr.f32.gmra.mxu0 %v782
      %v784 = vpop.f32.mrf.mxu0
      %v785 = vadd.f32 %v592, %v784
      %v786 = vpop.f32.mrf.mxu0
      %787 = vmatprep.mubr.f32.mxu0 0.0
      %v788 = vand.u32 %v342, 4294901760
      %789 = vmatmul.mubr.f32.gmra.mxu0 %v788
      %v790 = vpop.f32.mrf.mxu0
      %v791 = vadd.f32 %v602, %v790
      %v792 = vpop.f32.mrf.mxu0
      %793 = vdwg.mxu0
      %794 = vmatprep.subr.mxu0 0.0
      %795 = vmatpush1.msra.mxu0 0.0
      %796 = vmatprep.subr.mxu0 0.0
      %797 = vmatpush1.msra.mxu0 0.0
      %798 = vmatprep.subr.mxu0 0.0
      %799 = vmatpush1.msra.mxu0 0.0
      %800 = vmatprep.subr.mxu0 0.0
      %801 = vmatpush1.msra.mxu0 0.0
      %802 = vmatprep.subr.mxu0 0.0
      %803 = vmatpush1.msra.mxu0 0.0
      %804 = vmatprep.subr.mxu0 0.0
      %805 = vmatpush1.msra.mxu0 0.0
      %806 = vmatprep.subr.mxu0 0.0
      %807 = vmatpush1.msra.mxu0 0.0
      %808 = vmatprep.subr.mxu0 0.0
      %809 = vmatpush1.msra.mxu0 0.0
      %810 = vmatprep.subr.mxu0 0.0
      %811 = vmatpush1.msra.mxu0 0.0
      %812 = vmatprep.subr.mxu0 0.0
      %813 = vmatpush1.msra.mxu0 0.0
      %814 = vmatprep.subr.mxu0 0.0
      %815 = vmatpush1.msra.mxu0 0.0
      %816 = vmatprep.subr.mxu0 0.0
      %817 = vmatpush1.msra.mxu0 0.0
      %818 = vmatprep.subr.mxu0 0.0
      %819 = vmatpush1.msra.mxu0 0.0
      %820 = vmatprep.subr.mxu0 0.0
      %821 = vmatpush1.msra.mxu0 0.0
      %822 = vmatprep.subr.mxu0 0.0
      %v823 = vand.u32 %v346, 4294901760
      %v824 = vsub.f32 %v346, %v823
      %825 = vmatpush1.msra.mxu0 %v824
      %826 = vmatprep.subr.mxu0 0.0
      %v827 = vand.u32 %v247, 4294901760
      %v828 = vsub.f32 %v247, %v827
      %829 = vmatpush1.msra.mxu0 %v828
      %830 = vmatprep.subr.mxu0 0.0
      %831 = vmatpush2.msra.mxu0 0.0
      %832 = vmatprep.subr.mxu0 0.0
      %833 = vmatpush2.msra.mxu0 0.0
      %834 = vmatprep.subr.mxu0 0.0
      %835 = vmatpush2.msra.mxu0 0.0
      %836 = vmatprep.subr.mxu0 0.0
      %837 = vmatpush2.msra.mxu0 0.0
      %838 = vmatprep.subr.mxu0 0.0
      %839 = vmatpush2.msra.mxu0 0.0
      %840 = vmatprep.subr.mxu0 0.0
      %841 = vmatpush2.msra.mxu0 0.0
      %842 = vmatprep.subr.mxu0 0.0
      %843 = vmatpush2.msra.mxu0 0.0
      %844 = vmatprep.subr.mxu0 0.0
      %845 = vmatpush2.msra.mxu0 0.0
      %846 = vmatprep.subr.mxu0 0.0
      %847 = vmatpush2.msra.mxu0 0.0
      %848 = vmatprep.subr.mxu0 0.0
      %849 = vmatpush2.msra.mxu0 0.0
      %850 = vmatprep.subr.mxu0 0.0
      %851 = vmatpush2.msra.mxu0 0.0
      %852 = vmatprep.subr.mxu0 0.0
      %853 = vmatpush2.msra.mxu0 0.0
      %854 = vmatprep.subr.mxu0 0.0
      %855 = vmatpush2.msra.mxu0 0.0
      %856 = vmatprep.subr.mxu0 0.0
      %857 = vmatpush2.msra.mxu0 0.0
      %858 = vmatprep.subr.mxu0 0.0
      %859 = vmatpush2.msra.mxu0 0.0
      %860 = vmatprep.subr.mxu0 0.0
      %861 = vmatpush2.msra.mxu0 0.0
      %862 = vmatprep.mubr.f32.mxu0 0.0
      %v863 = vand.u32 %v288, 4294901760
      %v864 = vsub.f32 %v288, %v863
      %865 = vmatmul.mubr.f32.gmra.mxu0 %v864
      %v866 = vpop.f32.mrf.mxu0
      %v867 = vadd.f32 %v683, %v866
      %v868 = vpop.f32.mrf.mxu0
      %869 = vmatprep.mubr.f32.mxu0 0.0
      %v870 = vand.u32 %v291, 4294901760
      %v871 = vsub.f32 %v291, %v870
      %872 = vmatmul.mubr.f32.gmra.mxu0 %v871
      %v873 = vpop.f32.mrf.mxu0
      %v874 = vadd.f32 %v689, %v873
      %v875 = vpop.f32.mrf.mxu0
      %876 = vmatprep.mubr.f32.mxu0 0.0
      %v877 = vand.u32 %v294, 4294901760
      %v878 = vsub.f32 %v294, %v877
      %879 = vmatmul.mubr.f32.gmra.mxu0 %v878
      %v880 = vpop.f32.mrf.mxu0
      %v881 = vadd.f32 %v695, %v880
      %v882 = vpop.f32.mrf.mxu0
      %883 = vmatprep.mubr.f32.mxu0 0.0
      %v884 = vand.u32 %v297, 4294901760
      %v885 = vsub.f32 %v297, %v884
      %886 = vmatmul.mubr.f32.gmra.mxu0 %v885
      %v887 = vpop.f32.mrf.mxu0
      %v888 = vadd.f32 %v701, %v887
      %v889 = vpop.f32.mrf.mxu0
      %890 = vmatprep.mubr.f32.mxu0 0.0
      %v891 = vand.u32 %v300, 4294901760
      %v892 = vsub.f32 %v300, %v891
      %893 = vmatmul.mubr.f32.gmra.mxu0 %v892
      %v894 = vpop.f32.mrf.mxu0
      %v895 = vadd.f32 %v707, %v894
      %v896 = vpop.f32.mrf.mxu0
      %897 = vmatprep.mubr.f32.mxu0 0.0
      %v898 = vand.u32 %v303, 4294901760
      %v899 = vsub.f32 %v303, %v898
      %900 = vmatmul.mubr.f32.gmra.mxu0 %v899
      %v901 = vpop.f32.mrf.mxu0
      %v902 = vadd.f32 %v713, %v901
      %v903 = vpop.f32.mrf.mxu0
      %904 = vmatprep.mubr.f32.mxu0 0.0
      %v905 = vand.u32 %v306, 4294901760
      %v906 = vsub.f32 %v306, %v905
      %907 = vmatmul.mubr.f32.gmra.mxu0 %v906
      %v908 = vpop.f32.mrf.mxu0
      %v909 = vadd.f32 %v719, %v908
      %v910 = vpop.f32.mrf.mxu0
      %911 = vmatprep.mubr.f32.mxu0 0.0
      %v912 = vand.u32 %v309, 4294901760
      %v913 = vsub.f32 %v309, %v912
      %914 = vmatmul.mubr.f32.gmra.mxu0 %v913
      %v915 = vpop.f32.mrf.mxu0
      %v916 = vadd.f32 %v725, %v915
      %v917 = vpop.f32.mrf.mxu0
      %918 = vmatprep.mubr.f32.mxu0 0.0
      %v919 = vand.u32 %v312, 4294901760
      %v920 = vsub.f32 %v312, %v919
      %921 = vmatmul.mubr.f32.gmra.mxu0 %v920
      %v922 = vpop.f32.mrf.mxu0
      %v923 = vadd.f32 %v731, %v922
      %v924 = vpop.f32.mrf.mxu0
      %925 = vmatprep.mubr.f32.mxu0 0.0
      %v926 = vand.u32 %v315, 4294901760
      %v927 = vsub.f32 %v315, %v926
      %928 = vmatmul.mubr.f32.gmra.mxu0 %v927
      %v929 = vpop.f32.mrf.mxu0
      %v930 = vadd.f32 %v737, %v929
      %v931 = vpop.f32.mrf.mxu0
      %932 = vmatprep.mubr.f32.mxu0 0.0
      %v933 = vand.u32 %v318, 4294901760
      %v934 = vsub.f32 %v318, %v933
      %935 = vmatmul.mubr.f32.gmra.mxu0 %v934
      %v936 = vpop.f32.mrf.mxu0
      %v937 = vadd.f32 %v743, %v936
      %v938 = vpop.f32.mrf.mxu0
      %939 = vmatprep.mubr.f32.mxu0 0.0
      %v940 = vand.u32 %v321, 4294901760
      %v941 = vsub.f32 %v321, %v940
      %942 = vmatmul.mubr.f32.gmra.mxu0 %v941
      %v943 = vpop.f32.mrf.mxu0
      %v944 = vadd.f32 %v749, %v943
      %v945 = vpop.f32.mrf.mxu0
      %946 = vmatprep.mubr.f32.mxu0 0.0
      %v947 = vand.u32 %v324, 4294901760
      %v948 = vsub.f32 %v324, %v947
      %949 = vmatmul.mubr.f32.gmra.mxu0 %v948
      %v950 = vpop.f32.mrf.mxu0
      %v951 = vadd.f32 %v755, %v950
      %v952 = vpop.f32.mrf.mxu0
      %953 = vmatprep.mubr.f32.mxu0 0.0
      %v954 = vand.u32 %v327, 4294901760
      %v955 = vsub.f32 %v327, %v954
      %956 = vmatmul.mubr.f32.gmra.mxu0 %v955
      %v957 = vpop.f32.mrf.mxu0
      %v958 = vadd.f32 %v761, %v957
      %v959 = vpop.f32.mrf.mxu0
      %960 = vmatprep.mubr.f32.mxu0 0.0
      %v961 = vand.u32 %v330, 4294901760
      %v962 = vsub.f32 %v330, %v961
      %963 = vmatmul.mubr.f32.gmra.mxu0 %v962
      %v964 = vpop.f32.mrf.mxu0
      %v965 = vadd.f32 %v767, %v964
      %v966 = vpop.f32.mrf.mxu0
      %967 = vmatprep.mubr.f32.mxu0 0.0
      %v968 = vand.u32 %v333, 4294901760
      %v969 = vsub.f32 %v333, %v968
      %970 = vmatmul.mubr.f32.gmra.mxu0 %v969
      %v971 = vpop.f32.mrf.mxu0
      %v972 = vadd.f32 %v773, %v971
      %v973 = vpop.f32.mrf.mxu0
      %974 = vmatprep.mubr.f32.mxu0 0.0
      %v975 = vand.u32 %v336, 4294901760
      %v976 = vsub.f32 %v336, %v975
      %977 = vmatmul.mubr.f32.gmra.mxu0 %v976
      %v978 = vpop.f32.mrf.mxu0
      %v979 = vadd.f32 %v779, %v978
      %v980 = vpop.f32.mrf.mxu0
      %981 = vmatprep.mubr.f32.mxu0 0.0
      %v982 = vand.u32 %v339, 4294901760
      %v983 = vsub.f32 %v339, %v982
      %984 = vmatmul.mubr.f32.gmra.mxu0 %v983
      %v985 = vpop.f32.mrf.mxu0
      %v986 = vadd.f32 %v785, %v985
      %v987 = vpop.f32.mrf.mxu0
      %988 = vmatprep.mubr.f32.mxu0 0.0
      %v989 = vand.u32 %v342, 4294901760
      %v990 = vsub.f32 %v342, %v989
      %991 = vmatmul.mubr.f32.gmra.mxu0 %v990
      %v992 = vpop.f32.mrf.mxu0
      %v993 = vadd.f32 %v791, %v992
      %v994 = vpop.f32.mrf.mxu0
      %995 = vdwg.mxu0
      %996 = vmatprep.subr.mxu0 0.0
      %997 = vmatpush1.msra.mxu0 0.0
      %998 = vmatprep.subr.mxu0 0.0
      %999 = vmatpush1.msra.mxu0 0.0
      %1000 = vmatprep.subr.mxu0 0.0
      %1001 = vmatpush1.msra.mxu0 0.0
      %1002 = vmatprep.subr.mxu0 0.0
      %1003 = vmatpush1.msra.mxu0 0.0
      %1004 = vmatprep.subr.mxu0 0.0
      %1005 = vmatpush1.msra.mxu0 0.0
      %1006 = vmatprep.subr.mxu0 0.0
      %1007 = vmatpush1.msra.mxu0 0.0
      %1008 = vmatprep.subr.mxu0 0.0
      %1009 = vmatpush1.msra.mxu0 0.0
      %1010 = vmatprep.subr.mxu0 0.0
      %1011 = vmatpush1.msra.mxu0 0.0
      %1012 = vmatprep.subr.mxu0 0.0
      %1013 = vmatpush1.msra.mxu0 0.0
      %1014 = vmatprep.subr.mxu0 0.0
      %1015 = vmatpush1.msra.mxu0 0.0
      %1016 = vmatprep.subr.mxu0 0.0
      %1017 = vmatpush1.msra.mxu0 0.0
      %1018 = vmatprep.subr.mxu0 0.0
      %1019 = vmatpush1.msra.mxu0 0.0
      %1020 = vmatprep.subr.mxu0 0.0
      %1021 = vmatpush1.msra.mxu0 0.0
      %1022 = vmatprep.subr.mxu0 0.0
      %1023 = vmatpush1.msra.mxu0 0.0
      %1024 = vmatprep.subr.mxu0 0.0
      %v1025 = vand.u32 %v346, 4294901760
      %1026 = vmatpush1.msra.mxu0 %v1025
      %1027 = vmatprep.subr.mxu0 0.0
      %v1028 = vand.u32 %v247, 4294901760
      %1029 = vmatpush1.msra.mxu0 %v1028
      %1030 = vmatprep.subr.mxu0 0.0
      %1031 = vmatpush2.msra.mxu0 0.0
      %1032 = vmatprep.subr.mxu0 0.0
      %1033 = vmatpush2.msra.mxu0 0.0
      %1034 = vmatprep.subr.mxu0 0.0
      %1035 = vmatpush2.msra.mxu0 0.0
      %1036 = vmatprep.subr.mxu0 0.0
      %1037 = vmatpush2.msra.mxu0 0.0
      %1038 = vmatprep.subr.mxu0 0.0
      %1039 = vmatpush2.msra.mxu0 0.0
      %1040 = vmatprep.subr.mxu0 0.0
      %1041 = vmatpush2.msra.mxu0 0.0
      %1042 = vmatprep.subr.mxu0 0.0
      %1043 = vmatpush2.msra.mxu0 0.0
      %1044 = vmatprep.subr.mxu0 0.0
      %1045 = vmatpush2.msra.mxu0 0.0
      %1046 = vmatprep.subr.mxu0 0.0
      %1047 = vmatpush2.msra.mxu0 0.0
      %1048 = vmatprep.subr.mxu0 0.0
      %1049 = vmatpush2.msra.mxu0 0.0
      %1050 = vmatprep.subr.mxu0 0.0
      %1051 = vmatpush2.msra.mxu0 0.0
      %1052 = vmatprep.subr.mxu0 0.0
      %1053 = vmatpush2.msra.mxu0 0.0
      %1054 = vmatprep.subr.mxu0 0.0
      %1055 = vmatpush2.msra.mxu0 0.0
      %1056 = vmatprep.subr.mxu0 0.0
      %1057 = vmatpush2.msra.mxu0 0.0
      %1058 = vmatprep.subr.mxu0 0.0
      %1059 = vmatpush2.msra.mxu0 0.0
      %1060 = vmatprep.subr.mxu0 0.0
      %1061 = vmatpush2.msra.mxu0 0.0
      %1062 = vmatprep.mubr.f32.mxu0 0.0
      %v1063 = vand.u32 %v288, 4294901760
      %v1064 = vsub.f32 %v288, %v1063
      %v1065 = vand.u32 %v1064, 4294901760
      %1066 = vmatmul.mubr.f32.gmra.mxu0 %v1065
      %v1067 = vpop.f32.mrf.mxu0
      %v1068 = vadd.f32 %v867, %v1067
      %v1069 = vpop.f32.mrf.mxu0
      %1070 = vmatprep.mubr.f32.mxu0 0.0
      %v1071 = vand.u32 %v291, 4294901760
      %v1072 = vsub.f32 %v291, %v1071
      %v1073 = vand.u32 %v1072, 4294901760
      %1074 = vmatmul.mubr.f32.gmra.mxu0 %v1073
      %v1075 = vpop.f32.mrf.mxu0
      %v1076 = vadd.f32 %v874, %v1075
      %v1077 = vpop.f32.mrf.mxu0
      %1078 = vmatprep.mubr.f32.mxu0 0.0
      %v1079 = vand.u32 %v294, 4294901760
      %v1080 = vsub.f32 %v294, %v1079
      %v1081 = vand.u32 %v1080, 4294901760
      %1082 = vmatmul.mubr.f32.gmra.mxu0 %v1081
      %v1083 = vpop.f32.mrf.mxu0
      %v1084 = vadd.f32 %v881, %v1083
      %v1085 = vpop.f32.mrf.mxu0
      %1086 = vmatprep.mubr.f32.mxu0 0.0
      %v1087 = vand.u32 %v297, 4294901760
      %v1088 = vsub.f32 %v297, %v1087
      %v1089 = vand.u32 %v1088, 4294901760
      %1090 = vmatmul.mubr.f32.gmra.mxu0 %v1089
      %v1091 = vpop.f32.mrf.mxu0
      %v1092 = vadd.f32 %v888, %v1091
      %v1093 = vpop.f32.mrf.mxu0
      %1094 = vmatprep.mubr.f32.mxu0 0.0
      %v1095 = vand.u32 %v300, 4294901760
      %v1096 = vsub.f32 %v300, %v1095
      %v1097 = vand.u32 %v1096, 4294901760
      %1098 = vmatmul.mubr.f32.gmra.mxu0 %v1097
      %v1099 = vpop.f32.mrf.mxu0
      %v1100 = vadd.f32 %v895, %v1099
      %v1101 = vpop.f32.mrf.mxu0
      %1102 = vmatprep.mubr.f32.mxu0 0.0
      %v1103 = vand.u32 %v303, 4294901760
      %v1104 = vsub.f32 %v303, %v1103
      %v1105 = vand.u32 %v1104, 4294901760
      %1106 = vmatmul.mubr.f32.gmra.mxu0 %v1105
      %v1107 = vpop.f32.mrf.mxu0
      %v1108 = vadd.f32 %v902, %v1107
      %v1109 = vpop.f32.mrf.mxu0
      %1110 = vmatprep.mubr.f32.mxu0 0.0
      %v1111 = vand.u32 %v306, 4294901760
      %v1112 = vsub.f32 %v306, %v1111
      %v1113 = vand.u32 %v1112, 4294901760
      %1114 = vmatmul.mubr.f32.gmra.mxu0 %v1113
      %v1115 = vpop.f32.mrf.mxu0
      %v1116 = vadd.f32 %v909, %v1115
      %v1117 = vpop.f32.mrf.mxu0
      %1118 = vmatprep.mubr.f32.mxu0 0.0
      %v1119 = vand.u32 %v309, 4294901760
      %v1120 = vsub.f32 %v309, %v1119
      %v1121 = vand.u32 %v1120, 4294901760
      %1122 = vmatmul.mubr.f32.gmra.mxu0 %v1121
      %v1123 = vpop.f32.mrf.mxu0
      %v1124 = vadd.f32 %v916, %v1123
      %v1125 = vpop.f32.mrf.mxu0
      %1126 = vmatprep.mubr.f32.mxu0 0.0
      %v1127 = vand.u32 %v312, 4294901760
      %v1128 = vsub.f32 %v312, %v1127
      %v1129 = vand.u32 %v1128, 4294901760
      %1130 = vmatmul.mubr.f32.gmra.mxu0 %v1129
      %v1131 = vpop.f32.mrf.mxu0
      %v1132 = vadd.f32 %v923, %v1131
      %v1133 = vpop.f32.mrf.mxu0
      %1134 = vmatprep.mubr.f32.mxu0 0.0
      %v1135 = vand.u32 %v315, 4294901760
      %v1136 = vsub.f32 %v315, %v1135
      %v1137 = vand.u32 %v1136, 4294901760
      %1138 = vmatmul.mubr.f32.gmra.mxu0 %v1137
      %v1139 = vpop.f32.mrf.mxu0
      %v1140 = vadd.f32 %v930, %v1139
      %v1141 = vpop.f32.mrf.mxu0
      %1142 = vmatprep.mubr.f32.mxu0 0.0
      %v1143 = vand.u32 %v318, 4294901760
      %v1144 = vsub.f32 %v318, %v1143
      %v1145 = vand.u32 %v1144, 4294901760
      %1146 = vmatmul.mubr.f32.gmra.mxu0 %v1145
      %v1147 = vpop.f32.mrf.mxu0
      %v1148 = vadd.f32 %v937, %v1147
      %v1149 = vpop.f32.mrf.mxu0
      %1150 = vmatprep.mubr.f32.mxu0 0.0
      %v1151 = vand.u32 %v321, 4294901760
      %v1152 = vsub.f32 %v321, %v1151
      %v1153 = vand.u32 %v1152, 4294901760
      %1154 = vmatmul.mubr.f32.gmra.mxu0 %v1153
      %v1155 = vpop.f32.mrf.mxu0
      %v1156 = vadd.f32 %v944, %v1155
      %v1157 = vpop.f32.mrf.mxu0
      %1158 = vmatprep.mubr.f32.mxu0 0.0
      %v1159 = vand.u32 %v324, 4294901760
      %v1160 = vsub.f32 %v324, %v1159
      %v1161 = vand.u32 %v1160, 4294901760
      %1162 = vmatmul.mubr.f32.gmra.mxu0 %v1161
      %v1163 = vpop.f32.mrf.mxu0
      %v1164 = vadd.f32 %v951, %v1163
      %v1165 = vpop.f32.mrf.mxu0
      %1166 = vmatprep.mubr.f32.mxu0 0.0
      %v1167 = vand.u32 %v327, 4294901760
      %v1168 = vsub.f32 %v327, %v1167
      %v1169 = vand.u32 %v1168, 4294901760
      %1170 = vmatmul.mubr.f32.gmra.mxu0 %v1169
      %v1171 = vpop.f32.mrf.mxu0
      %v1172 = vadd.f32 %v958, %v1171
      %v1173 = vpop.f32.mrf.mxu0
      %1174 = vmatprep.mubr.f32.mxu0 0.0
      %v1175 = vand.u32 %v330, 4294901760
      %v1176 = vsub.f32 %v330, %v1175
      %v1177 = vand.u32 %v1176, 4294901760
      %1178 = vmatmul.mubr.f32.gmra.mxu0 %v1177
      %v1179 = vpop.f32.mrf.mxu0
      %v1180 = vadd.f32 %v965, %v1179
      %v1181 = vpop.f32.mrf.mxu0
      %1182 = vmatprep.mubr.f32.mxu0 0.0
      %v1183 = vand.u32 %v333, 4294901760
      %v1184 = vsub.f32 %v333, %v1183
      %v1185 = vand.u32 %v1184, 4294901760
      %1186 = vmatmul.mubr.f32.gmra.mxu0 %v1185
      %v1187 = vpop.f32.mrf.mxu0
      %v1188 = vadd.f32 %v972, %v1187
      %v1189 = vpop.f32.mrf.mxu0
      %1190 = vmatprep.mubr.f32.mxu0 0.0
      %v1191 = vand.u32 %v336, 4294901760
      %v1192 = vsub.f32 %v336, %v1191
      %v1193 = vand.u32 %v1192, 4294901760
      %1194 = vmatmul.mubr.f32.gmra.mxu0 %v1193
      %v1195 = vpop.f32.mrf.mxu0
      %v1196 = vadd.f32 %v979, %v1195
      %v1197 = vpop.f32.mrf.mxu0
      %1198 = vmatprep.mubr.f32.mxu0 0.0
      %v1199 = vand.u32 %v339, 4294901760
      %v1200 = vsub.f32 %v339, %v1199
      %v1201 = vand.u32 %v1200, 4294901760
      %1202 = vmatmul.mubr.f32.gmra.mxu0 %v1201
      %v1203 = vpop.f32.mrf.mxu0
      %v1204 = vadd.f32 %v986, %v1203
      %v1205 = vpop.f32.mrf.mxu0
      %1206 = vmatprep.mubr.f32.mxu0 0.0
      %v1207 = vand.u32 %v342, 4294901760
      %v1208 = vsub.f32 %v342, %v1207
      %v1209 = vand.u32 %v1208, 4294901760
      %1210 = vmatmul.mubr.f32.gmra.mxu0 %v1209
      %v1211 = vpop.f32.mrf.mxu0
      %v1212 = vadd.f32 %v993, %v1211
      %v1213 = vpop.f32.mrf.mxu0
      %1214 = vdwg.mxu0
      %1215 = vmatprep.subr.mxu0 0.0
      %1216 = vmatpush1.msra.mxu0 0.0
      %1217 = vmatprep.subr.mxu0 0.0
      %1218 = vmatpush1.msra.mxu0 0.0
      %1219 = vmatprep.subr.mxu0 0.0
      %1220 = vmatpush1.msra.mxu0 0.0
      %1221 = vmatprep.subr.mxu0 0.0
      %1222 = vmatpush1.msra.mxu0 0.0
      %1223 = vmatprep.subr.mxu0 0.0
      %1224 = vmatpush1.msra.mxu0 0.0
      %1225 = vmatprep.subr.mxu0 0.0
      %1226 = vmatpush1.msra.mxu0 0.0
      %1227 = vmatprep.subr.mxu0 0.0
      %1228 = vmatpush1.msra.mxu0 0.0
      %1229 = vmatprep.subr.mxu0 0.0
      %1230 = vmatpush1.msra.mxu0 0.0
      %1231 = vmatprep.subr.mxu0 0.0
      %1232 = vmatpush1.msra.mxu0 0.0
      %1233 = vmatprep.subr.mxu0 0.0
      %1234 = vmatpush1.msra.mxu0 0.0
      %1235 = vmatprep.subr.mxu0 0.0
      %1236 = vmatpush1.msra.mxu0 0.0
      %1237 = vmatprep.subr.mxu0 0.0
      %1238 = vmatpush1.msra.mxu0 0.0
      %1239 = vmatprep.subr.mxu0 0.0
      %1240 = vmatpush1.msra.mxu0 0.0
      %1241 = vmatprep.subr.mxu0 0.0
      %1242 = vmatpush1.msra.mxu0 0.0
      %1243 = vmatprep.subr.mxu0 0.0
      %v1244 = vand.u32 %v346, 4294901760
      %v1245 = vsub.f32 %v346, %v1244
      %v1246 = vand.u32 %v1245, 4294901760
      %1247 = vmatpush1.msra.mxu0 %v1246
      %1248 = vmatprep.subr.mxu0 0.0
      %v1249 = vand.u32 %v247, 4294901760
      %v1250 = vsub.f32 %v247, %v1249
      %v1251 = vand.u32 %v1250, 4294901760
      %1252 = vmatpush1.msra.mxu0 %v1251
      %1253 = vmatprep.subr.mxu0 0.0
      %1254 = vmatpush2.msra.mxu0 0.0
      %1255 = vmatprep.subr.mxu0 0.0
      %1256 = vmatpush2.msra.mxu0 0.0
      %1257 = vmatprep.subr.mxu0 0.0
      %1258 = vmatpush2.msra.mxu0 0.0
      %1259 = vmatprep.subr.mxu0 0.0
      %1260 = vmatpush2.msra.mxu0 0.0
      %1261 = vmatprep.subr.mxu0 0.0
      %1262 = vmatpush2.msra.mxu0 0.0
      %1263 = vmatprep.subr.mxu0 0.0
      %1264 = vmatpush2.msra.mxu0 0.0
      %1265 = vmatprep.subr.mxu0 0.0
      %1266 = vmatpush2.msra.mxu0 0.0
      %1267 = vmatprep.subr.mxu0 0.0
      %1268 = vmatpush2.msra.mxu0 0.0
      %1269 = vmatprep.subr.mxu0 0.0
      %1270 = vmatpush2.msra.mxu0 0.0
      %1271 = vmatprep.subr.mxu0 0.0
      %1272 = vmatpush2.msra.mxu0 0.0
      %1273 = vmatprep.subr.mxu0 0.0
      %1274 = vmatpush2.msra.mxu0 0.0
      %1275 = vmatprep.subr.mxu0 0.0
      %1276 = vmatpush2.msra.mxu0 0.0
      %1277 = vmatprep.subr.mxu0 0.0
      %1278 = vmatpush2.msra.mxu0 0.0
      %1279 = vmatprep.subr.mxu0 0.0
      %1280 = vmatpush2.msra.mxu0 0.0
      %1281 = vmatprep.subr.mxu0 0.0
      %1282 = vmatpush2.msra.mxu0 0.0
      %1283 = vmatprep.subr.mxu0 0.0
      %1284 = vmatpush2.msra.mxu0 0.0
      %1285 = vmatprep.mubr.f32.mxu0 0.0
      %v1286 = vand.u32 %v288, 4294901760
      %1287 = vmatmul.mubr.f32.gmra.mxu0 %v1286
      %v1288 = vpop.f32.mrf.mxu0
      %v1289 = vadd.f32 %v1068, %v1288
      %v1290 = vpop.f32.mrf.mxu0
      %1291 = vmatprep.mubr.f32.mxu0 0.0
      %v1292 = vand.u32 %v291, 4294901760
      %1293 = vmatmul.mubr.f32.gmra.mxu0 %v1292
      %v1294 = vpop.f32.mrf.mxu0
      %v1295 = vadd.f32 %v1076, %v1294
      %v1296 = vpop.f32.mrf.mxu0
      %1297 = vmatprep.mubr.f32.mxu0 0.0
      %v1298 = vand.u32 %v294, 4294901760
      %1299 = vmatmul.mubr.f32.gmra.mxu0 %v1298
      %v1300 = vpop.f32.mrf.mxu0
      %v1301 = vadd.f32 %v1084, %v1300
      %v1302 = vpop.f32.mrf.mxu0
      %1303 = vmatprep.mubr.f32.mxu0 0.0
      %v1304 = vand.u32 %v297, 4294901760
      %1305 = vmatmul.mubr.f32.gmra.mxu0 %v1304
      %v1306 = vpop.f32.mrf.mxu0
      %v1307 = vadd.f32 %v1092, %v1306
      %v1308 = vpop.f32.mrf.mxu0
      %1309 = vmatprep.mubr.f32.mxu0 0.0
      %v1310 = vand.u32 %v300, 4294901760
      %1311 = vmatmul.mubr.f32.gmra.mxu0 %v1310
      %v1312 = vpop.f32.mrf.mxu0
      %v1313 = vadd.f32 %v1100, %v1312
      %v1314 = vpop.f32.mrf.mxu0
      %1315 = vmatprep.mubr.f32.mxu0 0.0
      %v1316 = vand.u32 %v303, 4294901760
      %1317 = vmatmul.mubr.f32.gmra.mxu0 %v1316
      %v1318 = vpop.f32.mrf.mxu0
      %v1319 = vadd.f32 %v1108, %v1318
      %v1320 = vpop.f32.mrf.mxu0
      %1321 = vmatprep.mubr.f32.mxu0 0.0
      %v1322 = vand.u32 %v306, 4294901760
      %1323 = vmatmul.mubr.f32.gmra.mxu0 %v1322
      %v1324 = vpop.f32.mrf.mxu0
      %v1325 = vadd.f32 %v1116, %v1324
      %v1326 = vpop.f32.mrf.mxu0
      %1327 = vmatprep.mubr.f32.mxu0 0.0
      %v1328 = vand.u32 %v309, 4294901760
      %1329 = vmatmul.mubr.f32.gmra.mxu0 %v1328
      %v1330 = vpop.f32.mrf.mxu0
      %v1331 = vadd.f32 %v1124, %v1330
      %v1332 = vpop.f32.mrf.mxu0
      %1333 = vmatprep.mubr.f32.mxu0 0.0
      %v1334 = vand.u32 %v312, 4294901760
      %1335 = vmatmul.mubr.f32.gmra.mxu0 %v1334
      %v1336 = vpop.f32.mrf.mxu0
      %v1337 = vadd.f32 %v1132, %v1336
      %v1338 = vpop.f32.mrf.mxu0
      %1339 = vmatprep.mubr.f32.mxu0 0.0
      %v1340 = vand.u32 %v315, 4294901760
      %1341 = vmatmul.mubr.f32.gmra.mxu0 %v1340
      %v1342 = vpop.f32.mrf.mxu0
      %v1343 = vadd.f32 %v1140, %v1342
      %v1344 = vpop.f32.mrf.mxu0
      %1345 = vmatprep.mubr.f32.mxu0 0.0
      %v1346 = vand.u32 %v318, 4294901760
      %1347 = vmatmul.mubr.f32.gmra.mxu0 %v1346
      %v1348 = vpop.f32.mrf.mxu0
      %v1349 = vadd.f32 %v1148, %v1348
      %v1350 = vpop.f32.mrf.mxu0
      %1351 = vmatprep.mubr.f32.mxu0 0.0
      %v1352 = vand.u32 %v321, 4294901760
      %1353 = vmatmul.mubr.f32.gmra.mxu0 %v1352
      %v1354 = vpop.f32.mrf.mxu0
      %v1355 = vadd.f32 %v1156, %v1354
      %v1356 = vpop.f32.mrf.mxu0
      %1357 = vmatprep.mubr.f32.mxu0 0.0
      %v1358 = vand.u32 %v324, 4294901760
      %1359 = vmatmul.mubr.f32.gmra.mxu0 %v1358
      %v1360 = vpop.f32.mrf.mxu0
      %v1361 = vadd.f32 %v1164, %v1360
      %v1362 = vpop.f32.mrf.mxu0
      %1363 = vmatprep.mubr.f32.mxu0 0.0
      %v1364 = vand.u32 %v327, 4294901760
      %1365 = vmatmul.mubr.f32.gmra.mxu0 %v1364
      %v1366 = vpop.f32.mrf.mxu0
      %v1367 = vadd.f32 %v1172, %v1366
      %v1368 = vpop.f32.mrf.mxu0
      %1369 = vmatprep.mubr.f32.mxu0 0.0
      %v1370 = vand.u32 %v330, 4294901760
      %1371 = vmatmul.mubr.f32.gmra.mxu0 %v1370
      %v1372 = vpop.f32.mrf.mxu0
      %v1373 = vadd.f32 %v1180, %v1372
      %v1374 = vpop.f32.mrf.mxu0
      %1375 = vmatprep.mubr.f32.mxu0 0.0
      %v1376 = vand.u32 %v333, 4294901760
      %1377 = vmatmul.mubr.f32.gmra.mxu0 %v1376
      %v1378 = vpop.f32.mrf.mxu0
      %v1379 = vadd.f32 %v1188, %v1378
      %v1380 = vpop.f32.mrf.mxu0
      %1381 = vmatprep.mubr.f32.mxu0 0.0
      %v1382 = vand.u32 %v336, 4294901760
      %1383 = vmatmul.mubr.f32.gmra.mxu0 %v1382
      %v1384 = vpop.f32.mrf.mxu0
      %v1385 = vadd.f32 %v1196, %v1384
      %v1386 = vpop.f32.mrf.mxu0
      %1387 = vmatprep.mubr.f32.mxu0 0.0
      %v1388 = vand.u32 %v339, 4294901760
      %1389 = vmatmul.mubr.f32.gmra.mxu0 %v1388
      %v1390 = vpop.f32.mrf.mxu0
      %v1391 = vadd.f32 %v1204, %v1390
      %v1392 = vpop.f32.mrf.mxu0
      %1393 = vmatprep.mubr.f32.mxu0 0.0
      %v1394 = vand.u32 %v342, 4294901760
      %1395 = vmatmul.mubr.f32.gmra.mxu0 %v1394
      %v1396 = vpop.f32.mrf.mxu0
      %v1397 = vadd.f32 %v1212, %v1396
      %v1398 = vpop.f32.mrf.mxu0
      %1399 = vdwg.mxu0
      %1400 = vmatprep.subr.mxu0 0.0
      %1401 = vmatpush1.msra.mxu0 0.0
      %1402 = vmatprep.subr.mxu0 0.0
      %1403 = vmatpush1.msra.mxu0 0.0
      %1404 = vmatprep.subr.mxu0 0.0
      %1405 = vmatpush1.msra.mxu0 0.0
      %1406 = vmatprep.subr.mxu0 0.0
      %1407 = vmatpush1.msra.mxu0 0.0
      %1408 = vmatprep.subr.mxu0 0.0
      %1409 = vmatpush1.msra.mxu0 0.0
      %1410 = vmatprep.subr.mxu0 0.0
      %1411 = vmatpush1.msra.mxu0 0.0
      %1412 = vmatprep.subr.mxu0 0.0
      %1413 = vmatpush1.msra.mxu0 0.0
      %1414 = vmatprep.subr.mxu0 0.0
      %1415 = vmatpush1.msra.mxu0 0.0
      %1416 = vmatprep.subr.mxu0 0.0
      %1417 = vmatpush1.msra.mxu0 0.0
      %1418 = vmatprep.subr.mxu0 0.0
      %1419 = vmatpush1.msra.mxu0 0.0
      %1420 = vmatprep.subr.mxu0 0.0
      %1421 = vmatpush1.msra.mxu0 0.0
      %1422 = vmatprep.subr.mxu0 0.0
      %1423 = vmatpush1.msra.mxu0 0.0
      %1424 = vmatprep.subr.mxu0 0.0
      %1425 = vmatpush1.msra.mxu0 0.0
      %1426 = vmatprep.subr.mxu0 0.0
      %1427 = vmatpush1.msra.mxu0 0.0
      %1428 = vmatprep.subr.mxu0 0.0
      %v1429 = vand.u32 %v346, 4294901760
      %1430 = vmatpush1.msra.mxu0 %v1429
      %1431 = vmatprep.subr.mxu0 0.0
      %v1432 = vand.u32 %v247, 4294901760
      %1433 = vmatpush1.msra.mxu0 %v1432
      %1434 = vmatprep.subr.mxu0 0.0
      %1435 = vmatpush2.msra.mxu0 0.0
      %1436 = vmatprep.subr.mxu0 0.0
      %1437 = vmatpush2.msra.mxu0 0.0
      %1438 = vmatprep.subr.mxu0 0.0
      %1439 = vmatpush2.msra.mxu0 0.0
      %1440 = vmatprep.subr.mxu0 0.0
      %1441 = vmatpush2.msra.mxu0 0.0
      %1442 = vmatprep.subr.mxu0 0.0
      %1443 = vmatpush2.msra.mxu0 0.0
      %1444 = vmatprep.subr.mxu0 0.0
      %1445 = vmatpush2.msra.mxu0 0.0
      %1446 = vmatprep.subr.mxu0 0.0
      %1447 = vmatpush2.msra.mxu0 0.0
      %1448 = vmatprep.subr.mxu0 0.0
      %1449 = vmatpush2.msra.mxu0 0.0
      %1450 = vmatprep.subr.mxu0 0.0
      %1451 = vmatpush2.msra.mxu0 0.0
      %1452 = vmatprep.subr.mxu0 0.0
      %1453 = vmatpush2.msra.mxu0 0.0
      %1454 = vmatprep.subr.mxu0 0.0
      %1455 = vmatpush2.msra.mxu0 0.0
      %1456 = vmatprep.subr.mxu0 0.0
      %1457 = vmatpush2.msra.mxu0 0.0
      %1458 = vmatprep.subr.mxu0 0.0
      %1459 = vmatpush2.msra.mxu0 0.0
      %1460 = vmatprep.subr.mxu0 0.0
      %1461 = vmatpush2.msra.mxu0 0.0
      %1462 = vmatprep.subr.mxu0 0.0
      %1463 = vmatpush2.msra.mxu0 0.0
      %1464 = vmatprep.subr.mxu0 0.0
      %1465 = vmatpush2.msra.mxu0 0.0
      %1466 = vmatprep.mubr.f32.mxu0 0.0
      %v1467 = vand.u32 %v288, 4294901760
      %1468 = vmatmul.mubr.f32.gmra.mxu0 %v1467
      %v1469 = vpop.f32.mrf.mxu0
      %v1470 = vadd.f32 %v1289, %v1469
      %v1471 = vpop.f32.mrf.mxu0
      %1472 = vmatprep.mubr.f32.mxu0 0.0
      %v1473 = vand.u32 %v291, 4294901760
      %1474 = vmatmul.mubr.f32.gmra.mxu0 %v1473
      %v1475 = vpop.f32.mrf.mxu0
      %v1476 = vadd.f32 %v1295, %v1475
      %v1477 = vpop.f32.mrf.mxu0
      %1478 = vmatprep.mubr.f32.mxu0 0.0
      %v1479 = vand.u32 %v294, 4294901760
      %1480 = vmatmul.mubr.f32.gmra.mxu0 %v1479
      %v1481 = vpop.f32.mrf.mxu0
      %v1482 = vadd.f32 %v1301, %v1481
      %v1483 = vpop.f32.mrf.mxu0
      %1484 = vmatprep.mubr.f32.mxu0 0.0
      %v1485 = vand.u32 %v297, 4294901760
      %1486 = vmatmul.mubr.f32.gmra.mxu0 %v1485
      %v1487 = vpop.f32.mrf.mxu0
      %v1488 = vadd.f32 %v1307, %v1487
      %v1489 = vpop.f32.mrf.mxu0
      %1490 = vmatprep.mubr.f32.mxu0 0.0
      %v1491 = vand.u32 %v300, 4294901760
      %1492 = vmatmul.mubr.f32.gmra.mxu0 %v1491
      %v1493 = vpop.f32.mrf.mxu0
      %v1494 = vadd.f32 %v1313, %v1493
      %v1495 = vpop.f32.mrf.mxu0
      %1496 = vmatprep.mubr.f32.mxu0 0.0
      %v1497 = vand.u32 %v303, 4294901760
      %1498 = vmatmul.mubr.f32.gmra.mxu0 %v1497
      %v1499 = vpop.f32.mrf.mxu0
      %v1500 = vadd.f32 %v1319, %v1499
      %v1501 = vpop.f32.mrf.mxu0
      %1502 = vmatprep.mubr.f32.mxu0 0.0
      %v1503 = vand.u32 %v306, 4294901760
      %1504 = vmatmul.mubr.f32.gmra.mxu0 %v1503
      %v1505 = vpop.f32.mrf.mxu0
      %v1506 = vadd.f32 %v1325, %v1505
      %v1507 = vpop.f32.mrf.mxu0
      %1508 = vmatprep.mubr.f32.mxu0 0.0
      %v1509 = vand.u32 %v309, 4294901760
      %1510 = vmatmul.mubr.f32.gmra.mxu0 %v1509
      %v1511 = vpop.f32.mrf.mxu0
      %v1512 = vadd.f32 %v1331, %v1511
      %v1513 = vpop.f32.mrf.mxu0
      %1514 = vmatprep.mubr.f32.mxu0 0.0
      %v1515 = vand.u32 %v312, 4294901760
      %1516 = vmatmul.mubr.f32.gmra.mxu0 %v1515
      %v1517 = vpop.f32.mrf.mxu0
      %v1518 = vadd.f32 %v1337, %v1517
      %v1519 = vpop.f32.mrf.mxu0
      %1520 = vmatprep.mubr.f32.mxu0 0.0
      %v1521 = vand.u32 %v315, 4294901760
      %1522 = vmatmul.mubr.f32.gmra.mxu0 %v1521
      %v1523 = vpop.f32.mrf.mxu0
      %v1524 = vadd.f32 %v1343, %v1523
      %v1525 = vpop.f32.mrf.mxu0
      %1526 = vmatprep.mubr.f32.mxu0 0.0
      %v1527 = vand.u32 %v318, 4294901760
      %1528 = vmatmul.mubr.f32.gmra.mxu0 %v1527
      %v1529 = vpop.f32.mrf.mxu0
      %v1530 = vadd.f32 %v1349, %v1529
      %v1531 = vpop.f32.mrf.mxu0
      %1532 = vmatprep.mubr.f32.mxu0 0.0
      %v1533 = vand.u32 %v321, 4294901760
      %1534 = vmatmul.mubr.f32.gmra.mxu0 %v1533
      %v1535 = vpop.f32.mrf.mxu0
      %v1536 = vadd.f32 %v1355, %v1535
      %v1537 = vpop.f32.mrf.mxu0
      %1538 = vmatprep.mubr.f32.mxu0 0.0
      %v1539 = vand.u32 %v324, 4294901760
      %1540 = vmatmul.mubr.f32.gmra.mxu0 %v1539
      %v1541 = vpop.f32.mrf.mxu0
      %v1542 = vadd.f32 %v1361, %v1541
      %v1543 = vpop.f32.mrf.mxu0
      %1544 = vmatprep.mubr.f32.mxu0 0.0
      %v1545 = vand.u32 %v327, 4294901760
      %1546 = vmatmul.mubr.f32.gmra.mxu0 %v1545
      %v1547 = vpop.f32.mrf.mxu0
      %v1548 = vadd.f32 %v1367, %v1547
      %v1549 = vpop.f32.mrf.mxu0
      %1550 = vmatprep.mubr.f32.mxu0 0.0
      %v1551 = vand.u32 %v330, 4294901760
      %1552 = vmatmul.mubr.f32.gmra.mxu0 %v1551
      %v1553 = vpop.f32.mrf.mxu0
      %v1554 = vadd.f32 %v1373, %v1553
      %v1555 = vpop.f32.mrf.mxu0
      %1556 = vmatprep.mubr.f32.mxu0 0.0
      %v1557 = vand.u32 %v333, 4294901760
      %1558 = vmatmul.mubr.f32.gmra.mxu0 %v1557
      %v1559 = vpop.f32.mrf.mxu0
      %v1560 = vadd.f32 %v1379, %v1559
      %v1561 = vpop.f32.mrf.mxu0
      %1562 = vmatprep.mubr.f32.mxu0 0.0
      %v1563 = vand.u32 %v336, 4294901760
      %1564 = vmatmul.mubr.f32.gmra.mxu0 %v1563
      %v1565 = vpop.f32.mrf.mxu0
      %v1566 = vadd.f32 %v1385, %v1565
      %v1567 = vpop.f32.mrf.mxu0
      %1568 = vmatprep.mubr.f32.mxu0 0.0
      %v1569 = vand.u32 %v339, 4294901760
      %1570 = vmatmul.mubr.f32.gmra.mxu0 %v1569
      %v1571 = vpop.f32.mrf.mxu0
      %v1572 = vadd.f32 %v1391, %v1571
      %v1573 = vpop.f32.mrf.mxu0
      %1574 = vmatprep.mubr.f32.mxu0 0.0
      %v1575 = vand.u32 %v342, 4294901760
      %1576 = vmatmul.mubr.f32.gmra.mxu0 %v1575
      %v1577 = vpop.f32.mrf.mxu0
      %v1578 = vadd.f32 %v1397, %v1577
      %v1579 = vpop.f32.mrf.mxu0
      %1580 = vdwg.mxu0
      %v1581 = vmax.f32 %v1470, 0.0
      %v1582 = vmax.f32 %v1476, 0.0
      %v1583 = vmax.f32 %v1482, 0.0
      %v1584 = vmax.f32 %v1488, 0.0
      %v1585 = vmax.f32 %v1494, 0.0
      %v1586 = vmax.f32 %v1500, 0.0
      %v1587 = vmax.f32 %v1506, 0.0
      %v1588 = vmax.f32 %v1512, 0.0
      %v1589 = vmax.f32 %v1518, 0.0
      %v1590 = vmax.f32 %v1524, 0.0
      %v1591 = vmax.f32 %v1530, 0.0
      %v1592 = vmax.f32 %v1536, 0.0
      %v1593 = vmax.f32 %v1542, 0.0
      %v1594 = vmax.f32 %v1548, 0.0
      %v1595 = vmax.f32 %v1554, 0.0
      %v1596 = vmax.f32 %v1560, 0.0
      %v1597 = vmax.f32 %v1566, 0.0
      %v1598 = vmax.f32 %v1572, 0.0
      %v1599 = vmax.f32 %v1578, 0.0
      %v1600 = vlaneseq
      %v1601 = vshrl.u32 %v1600, 7
      %v1602 = vsub.s32 1, %v1601
      %v1603 = vrot.slane %v281, %v1602
      %1604 = vmatprep.subr.mxu0 0.0
      %v1605 = vand.u32 %v264, 4294901760
      %1606 = vmatpush1.msra.mxu0 %v1605
      %1607 = vmatprep.subr.mxu0 0.0
      %v1608 = vand.u32 %v263, 4294901760
      %1609 = vmatpush1.msra.mxu0 %v1608
      %1610 = vmatprep.subr.mxu0 0.0
      %v1611 = vand.u32 %v262, 4294901760
      %1612 = vmatpush1.msra.mxu0 %v1611
      %1613 = vmatprep.subr.mxu0 0.0
      %v1614 = vand.u32 %v261, 4294901760
      %1615 = vmatpush1.msra.mxu0 %v1614
      %1616 = vmatprep.subr.mxu0 0.0
      %v1617 = vand.u32 %v260, 4294901760
      %1618 = vmatpush1.msra.mxu0 %v1617
      %1619 = vmatprep.subr.mxu0 0.0
      %v1620 = vand.u32 %v259, 4294901760
      %1621 = vmatpush1.msra.mxu0 %v1620
      %1622 = vmatprep.subr.mxu0 0.0
      %v1623 = vand.u32 %v258, 4294901760
      %1624 = vmatpush1.msra.mxu0 %v1623
      %1625 = vmatprep.subr.mxu0 0.0
      %v1626 = vand.u32 %v257, 4294901760
      %1627 = vmatpush1.msra.mxu0 %v1626
      %1628 = vmatprep.subr.mxu0 0.0
      %v1629 = vand.u32 %v256, 4294901760
      %1630 = vmatpush1.msra.mxu0 %v1629
      %1631 = vmatprep.subr.mxu0 0.0
      %v1632 = vand.u32 %v255, 4294901760
      %1633 = vmatpush1.msra.mxu0 %v1632
      %1634 = vmatprep.subr.mxu0 0.0
      %v1635 = vand.u32 %v254, 4294901760
      %1636 = vmatpush1.msra.mxu0 %v1635
      %1637 = vmatprep.subr.mxu0 0.0
      %v1638 = vand.u32 %v253, 4294901760
      %1639 = vmatpush1.msra.mxu0 %v1638
      %1640 = vmatprep.subr.mxu0 0.0
      %v1641 = vand.u32 %v252, 4294901760
      %1642 = vmatpush1.msra.mxu0 %v1641
      %1643 = vmatprep.subr.mxu0 0.0
      %v1644 = vand.u32 %v251, 4294901760
      %1645 = vmatpush1.msra.mxu0 %v1644
      %1646 = vmatprep.subr.mxu0 0.0
      %v1647 = vand.u32 %v250, 4294901760
      %1648 = vmatpush1.msra.mxu0 %v1647
      %1649 = vmatprep.subr.mxu0 0.0
      %v1650 = vand.u32 %v249, 4294901760
      %1651 = vmatpush1.msra.mxu0 %v1650
      %1652 = vmatprep.subr.mxu0 0.0
      %1653 = vmatpush2.msra.mxu0 0.0
      %1654 = vmatprep.subr.mxu0 0.0
      %1655 = vmatpush2.msra.mxu0 0.0
      %1656 = vmatprep.subr.mxu0 0.0
      %1657 = vmatpush2.msra.mxu0 0.0
      %1658 = vmatprep.subr.mxu0 0.0
      %1659 = vmatpush2.msra.mxu0 0.0
      %1660 = vmatprep.subr.mxu0 0.0
      %1661 = vmatpush2.msra.mxu0 0.0
      %1662 = vmatprep.subr.mxu0 0.0
      %1663 = vmatpush2.msra.mxu0 0.0
      %1664 = vmatprep.subr.mxu0 0.0
      %1665 = vmatpush2.msra.mxu0 0.0
      %1666 = vmatprep.subr.mxu0 0.0
      %1667 = vmatpush2.msra.mxu0 0.0
      %1668 = vmatprep.subr.mxu0 0.0
      %1669 = vmatpush2.msra.mxu0 0.0
      %1670 = vmatprep.subr.mxu0 0.0
      %1671 = vmatpush2.msra.mxu0 0.0
      %1672 = vmatprep.subr.mxu0 0.0
      %1673 = vmatpush2.msra.mxu0 0.0
      %1674 = vmatprep.subr.mxu0 0.0
      %1675 = vmatpush2.msra.mxu0 0.0
      %1676 = vmatprep.subr.mxu0 0.0
      %1677 = vmatpush2.msra.mxu0 0.0
      %1678 = vmatprep.subr.mxu0 0.0
      %1679 = vmatpush2.msra.mxu0 0.0
      %1680 = vmatprep.subr.mxu0 0.0
      %1681 = vmatpush2.msra.mxu0 0.0
      %1682 = vmatprep.subr.mxu0 0.0
      %1683 = vmatpush2.msra.mxu0 0.0
      %1684 = vmatprep.mubr.f32.mxu0 0.0
      %v1685 = vand.u32 %v1581, 4294901760
      %v1686 = vsub.f32 %v1581, %v1685
      %v1687 = vand.u32 %v1686, 4294901760
      %v1688 = vsub.f32 %v1686, %v1687
      %v1689 = vand.u32 %v1688, 4294901760
      %1690 = vmatmul.mubr.f32.gmra.mxu0 %v1689
      %v1691 = vpop.f32.mrf.mxu0
      %v1692 = vadd.f32 %v1603, %v1691
      %v1693 = vpop.f32.mrf.mxu0
      %1694 = vmatprep.mubr.f32.mxu0 0.0
      %v1695 = vand.u32 %v1582, 4294901760
      %v1696 = vsub.f32 %v1582, %v1695
      %v1697 = vand.u32 %v1696, 4294901760
      %v1698 = vsub.f32 %v1696, %v1697
      %v1699 = vand.u32 %v1698, 4294901760
      %1700 = vmatmul.mubr.f32.gmra.mxu0 %v1699
      %v1701 = vpop.f32.mrf.mxu0
      %v1702 = vadd.f32 %v1603, %v1701
      %v1703 = vpop.f32.mrf.mxu0
      %1704 = vmatprep.mubr.f32.mxu0 0.0
      %v1705 = vand.u32 %v1583, 4294901760
      %v1706 = vsub.f32 %v1583, %v1705
      %v1707 = vand.u32 %v1706, 4294901760
      %v1708 = vsub.f32 %v1706, %v1707
      %v1709 = vand.u32 %v1708, 4294901760
      %1710 = vmatmul.mubr.f32.gmra.mxu0 %v1709
      %v1711 = vpop.f32.mrf.mxu0
      %v1712 = vadd.f32 %v1603, %v1711
      %v1713 = vpop.f32.mrf.mxu0
      %1714 = vmatprep.mubr.f32.mxu0 0.0
      %v1715 = vand.u32 %v1584, 4294901760
      %v1716 = vsub.f32 %v1584, %v1715
      %v1717 = vand.u32 %v1716, 4294901760
      %v1718 = vsub.f32 %v1716, %v1717
      %v1719 = vand.u32 %v1718, 4294901760
      %1720 = vmatmul.mubr.f32.gmra.mxu0 %v1719
      %v1721 = vpop.f32.mrf.mxu0
      %v1722 = vadd.f32 %v1603, %v1721
      %v1723 = vpop.f32.mrf.mxu0
      %1724 = vmatprep.mubr.f32.mxu0 0.0
      %v1725 = vand.u32 %v1585, 4294901760
      %v1726 = vsub.f32 %v1585, %v1725
      %v1727 = vand.u32 %v1726, 4294901760
      %v1728 = vsub.f32 %v1726, %v1727
      %v1729 = vand.u32 %v1728, 4294901760
      %1730 = vmatmul.mubr.f32.gmra.mxu0 %v1729
      %v1731 = vpop.f32.mrf.mxu0
      %v1732 = vadd.f32 %v1603, %v1731
      %v1733 = vpop.f32.mrf.mxu0
      %1734 = vmatprep.mubr.f32.mxu0 0.0
      %v1735 = vand.u32 %v1586, 4294901760
      %v1736 = vsub.f32 %v1586, %v1735
      %v1737 = vand.u32 %v1736, 4294901760
      %v1738 = vsub.f32 %v1736, %v1737
      %v1739 = vand.u32 %v1738, 4294901760
      %1740 = vmatmul.mubr.f32.gmra.mxu0 %v1739
      %v1741 = vpop.f32.mrf.mxu0
      %v1742 = vadd.f32 %v1603, %v1741
      %v1743 = vpop.f32.mrf.mxu0
      %1744 = vmatprep.mubr.f32.mxu0 0.0
      %v1745 = vand.u32 %v1587, 4294901760
      %v1746 = vsub.f32 %v1587, %v1745
      %v1747 = vand.u32 %v1746, 4294901760
      %v1748 = vsub.f32 %v1746, %v1747
      %v1749 = vand.u32 %v1748, 4294901760
      %1750 = vmatmul.mubr.f32.gmra.mxu0 %v1749
      %v1751 = vpop.f32.mrf.mxu0
      %v1752 = vadd.f32 %v1603, %v1751
      %v1753 = vpop.f32.mrf.mxu0
      %1754 = vmatprep.mubr.f32.mxu0 0.0
      %v1755 = vand.u32 %v1588, 4294901760
      %v1756 = vsub.f32 %v1588, %v1755
      %v1757 = vand.u32 %v1756, 4294901760
      %v1758 = vsub.f32 %v1756, %v1757
      %v1759 = vand.u32 %v1758, 4294901760
      %1760 = vmatmul.mubr.f32.gmra.mxu0 %v1759
      %v1761 = vpop.f32.mrf.mxu0
      %v1762 = vadd.f32 %v1603, %v1761
      %v1763 = vpop.f32.mrf.mxu0
      %1764 = vmatprep.mubr.f32.mxu0 0.0
      %v1765 = vand.u32 %v1589, 4294901760
      %v1766 = vsub.f32 %v1589, %v1765
      %v1767 = vand.u32 %v1766, 4294901760
      %v1768 = vsub.f32 %v1766, %v1767
      %v1769 = vand.u32 %v1768, 4294901760
      %1770 = vmatmul.mubr.f32.gmra.mxu0 %v1769
      %v1771 = vpop.f32.mrf.mxu0
      %v1772 = vadd.f32 %v1603, %v1771
      %v1773 = vpop.f32.mrf.mxu0
      %1774 = vmatprep.mubr.f32.mxu0 0.0
      %v1775 = vand.u32 %v1590, 4294901760
      %v1776 = vsub.f32 %v1590, %v1775
      %v1777 = vand.u32 %v1776, 4294901760
      %v1778 = vsub.f32 %v1776, %v1777
      %v1779 = vand.u32 %v1778, 4294901760
      %1780 = vmatmul.mubr.f32.gmra.mxu0 %v1779
      %v1781 = vpop.f32.mrf.mxu0
      %v1782 = vadd.f32 %v1603, %v1781
      %v1783 = vpop.f32.mrf.mxu0
      %1784 = vmatprep.mubr.f32.mxu0 0.0
      %v1785 = vand.u32 %v1591, 4294901760
      %v1786 = vsub.f32 %v1591, %v1785
      %v1787 = vand.u32 %v1786, 4294901760
      %v1788 = vsub.f32 %v1786, %v1787
      %v1789 = vand.u32 %v1788, 4294901760
      %1790 = vmatmul.mubr.f32.gmra.mxu0 %v1789
      %v1791 = vpop.f32.mrf.mxu0
      %v1792 = vadd.f32 %v1603, %v1791
      %v1793 = vpop.f32.mrf.mxu0
      %1794 = vmatprep.mubr.f32.mxu0 0.0
      %v1795 = vand.u32 %v1592, 4294901760
      %v1796 = vsub.f32 %v1592, %v1795
      %v1797 = vand.u32 %v1796, 4294901760
      %v1798 = vsub.f32 %v1796, %v1797
      %v1799 = vand.u32 %v1798, 4294901760
      %1800 = vmatmul.mubr.f32.gmra.mxu0 %v1799
      %v1801 = vpop.f32.mrf.mxu0
      %v1802 = vadd.f32 %v1603, %v1801
      %v1803 = vpop.f32.mrf.mxu0
      %1804 = vmatprep.mubr.f32.mxu0 0.0
      %v1805 = vand.u32 %v1593, 4294901760
      %v1806 = vsub.f32 %v1593, %v1805
      %v1807 = vand.u32 %v1806, 4294901760
      %v1808 = vsub.f32 %v1806, %v1807
      %v1809 = vand.u32 %v1808, 4294901760
      %1810 = vmatmul.mubr.f32.gmra.mxu0 %v1809
      %v1811 = vpop.f32.mrf.mxu0
      %v1812 = vadd.f32 %v1603, %v1811
      %v1813 = vpop.f32.mrf.mxu0
      %1814 = vmatprep.mubr.f32.mxu0 0.0
      %v1815 = vand.u32 %v1594, 4294901760
      %v1816 = vsub.f32 %v1594, %v1815
      %v1817 = vand.u32 %v1816, 4294901760
      %v1818 = vsub.f32 %v1816, %v1817
      %v1819 = vand.u32 %v1818, 4294901760
      %1820 = vmatmul.mubr.f32.gmra.mxu0 %v1819
      %v1821 = vpop.f32.mrf.mxu0
      %v1822 = vadd.f32 %v1603, %v1821
      %v1823 = vpop.f32.mrf.mxu0
      %1824 = vmatprep.mubr.f32.mxu0 0.0
      %v1825 = vand.u32 %v1595, 4294901760
      %v1826 = vsub.f32 %v1595, %v1825
      %v1827 = vand.u32 %v1826, 4294901760
      %v1828 = vsub.f32 %v1826, %v1827
      %v1829 = vand.u32 %v1828, 4294901760
      %1830 = vmatmul.mubr.f32.gmra.mxu0 %v1829
      %v1831 = vpop.f32.mrf.mxu0
      %v1832 = vadd.f32 %v1603, %v1831
      %v1833 = vpop.f32.mrf.mxu0
      %1834 = vmatprep.mubr.f32.mxu0 0.0
      %v1835 = vand.u32 %v1596, 4294901760
      %v1836 = vsub.f32 %v1596, %v1835
      %v1837 = vand.u32 %v1836, 4294901760
      %v1838 = vsub.f32 %v1836, %v1837
      %v1839 = vand.u32 %v1838, 4294901760
      %1840 = vmatmul.mubr.f32.gmra.mxu0 %v1839
      %v1841 = vpop.f32.mrf.mxu0
      %v1842 = vadd.f32 %v1603, %v1841
      %v1843 = vpop.f32.mrf.mxu0
      %1844 = vmatprep.mubr.f32.mxu0 0.0
      %v1845 = vand.u32 %v1597, 4294901760
      %v1846 = vsub.f32 %v1597, %v1845
      %v1847 = vand.u32 %v1846, 4294901760
      %v1848 = vsub.f32 %v1846, %v1847
      %v1849 = vand.u32 %v1848, 4294901760
      %1850 = vmatmul.mubr.f32.gmra.mxu0 %v1849
      %v1851 = vpop.f32.mrf.mxu0
      %v1852 = vadd.f32 %v1603, %v1851
      %v1853 = vpop.f32.mrf.mxu0
      %1854 = vmatprep.mubr.f32.mxu0 0.0
      %v1855 = vand.u32 %v1598, 4294901760
      %v1856 = vsub.f32 %v1598, %v1855
      %v1857 = vand.u32 %v1856, 4294901760
      %v1858 = vsub.f32 %v1856, %v1857
      %v1859 = vand.u32 %v1858, 4294901760
      %1860 = vmatmul.mubr.f32.gmra.mxu0 %v1859
      %v1861 = vpop.f32.mrf.mxu0
      %v1862 = vadd.f32 %v1603, %v1861
      %v1863 = vpop.f32.mrf.mxu0
      %1864 = vmatprep.mubr.f32.mxu0 0.0
      %v1865 = vand.u32 %v1599, 4294901760
      %v1866 = vsub.f32 %v1599, %v1865
      %v1867 = vand.u32 %v1866, 4294901760
      %v1868 = vsub.f32 %v1866, %v1867
      %v1869 = vand.u32 %v1868, 4294901760
      %1870 = vmatmul.mubr.f32.gmra.mxu0 %v1869
      %v1871 = vpop.f32.mrf.mxu0
      %v1872 = vadd.f32 %v1603, %v1871
      %v1873 = vpop.f32.mrf.mxu0
      %1874 = vdwg.mxu0
      %1875 = vmatprep.subr.mxu0 0.0
      %v1876 = vand.u32 %v264, 4294901760
      %v1877 = vsub.f32 %v264, %v1876
      %v1878 = vand.u32 %v1877, 4294901760
      %v1879 = vsub.f32 %v1877, %v1878
      %v1880 = vand.u32 %v1879, 4294901760
      %1881 = vmatpush1.msra.mxu0 %v1880
      %1882 = vmatprep.subr.mxu0 0.0
      %v1883 = vand.u32 %v263, 4294901760
      %v1884 = vsub.f32 %v263, %v1883
      %v1885 = vand.u32 %v1884, 4294901760
      %v1886 = vsub.f32 %v1884, %v1885
      %v1887 = vand.u32 %v1886, 4294901760
      %1888 = vmatpush1.msra.mxu0 %v1887
      %1889 = vmatprep.subr.mxu0 0.0
      %v1890 = vand.u32 %v262, 4294901760
      %v1891 = vsub.f32 %v262, %v1890
      %v1892 = vand.u32 %v1891, 4294901760
      %v1893 = vsub.f32 %v1891, %v1892
      %v1894 = vand.u32 %v1893, 4294901760
      %1895 = vmatpush1.msra.mxu0 %v1894
      %1896 = vmatprep.subr.mxu0 0.0
      %v1897 = vand.u32 %v261, 4294901760
      %v1898 = vsub.f32 %v261, %v1897
      %v1899 = vand.u32 %v1898, 4294901760
      %v1900 = vsub.f32 %v1898, %v1899
      %v1901 = vand.u32 %v1900, 4294901760
      %1902 = vmatpush1.msra.mxu0 %v1901
      %1903 = vmatprep.subr.mxu0 0.0
      %v1904 = vand.u32 %v260, 4294901760
      %v1905 = vsub.f32 %v260, %v1904
      %v1906 = vand.u32 %v1905, 4294901760
      %v1907 = vsub.f32 %v1905, %v1906
      %v1908 = vand.u32 %v1907, 4294901760
      %1909 = vmatpush1.msra.mxu0 %v1908
      %1910 = vmatprep.subr.mxu0 0.0
      %v1911 = vand.u32 %v259, 4294901760
      %v1912 = vsub.f32 %v259, %v1911
      %v1913 = vand.u32 %v1912, 4294901760
      %v1914 = vsub.f32 %v1912, %v1913
      %v1915 = vand.u32 %v1914, 4294901760
      %1916 = vmatpush1.msra.mxu0 %v1915
      %1917 = vmatprep.subr.mxu0 0.0
      %v1918 = vand.u32 %v258, 4294901760
      %v1919 = vsub.f32 %v258, %v1918
      %v1920 = vand.u32 %v1919, 4294901760
      %v1921 = vsub.f32 %v1919, %v1920
      %v1922 = vand.u32 %v1921, 4294901760
      %1923 = vmatpush1.msra.mxu0 %v1922
      %1924 = vmatprep.subr.mxu0 0.0
      %v1925 = vand.u32 %v257, 4294901760
      %v1926 = vsub.f32 %v257, %v1925
      %v1927 = vand.u32 %v1926, 4294901760
      %v1928 = vsub.f32 %v1926, %v1927
      %v1929 = vand.u32 %v1928, 4294901760
      %1930 = vmatpush1.msra.mxu0 %v1929
      %1931 = vmatprep.subr.mxu0 0.0
      %v1932 = vand.u32 %v256, 4294901760
      %v1933 = vsub.f32 %v256, %v1932
      %v1934 = vand.u32 %v1933, 4294901760
      %v1935 = vsub.f32 %v1933, %v1934
      %v1936 = vand.u32 %v1935, 4294901760
      %1937 = vmatpush1.msra.mxu0 %v1936
      %1938 = vmatprep.subr.mxu0 0.0
      %v1939 = vand.u32 %v255, 4294901760
      %v1940 = vsub.f32 %v255, %v1939
      %v1941 = vand.u32 %v1940, 4294901760
      %v1942 = vsub.f32 %v1940, %v1941
      %v1943 = vand.u32 %v1942, 4294901760
      %1944 = vmatpush1.msra.mxu0 %v1943
      %1945 = vmatprep.subr.mxu0 0.0
      %v1946 = vand.u32 %v254, 4294901760
      %v1947 = vsub.f32 %v254, %v1946
      %v1948 = vand.u32 %v1947, 4294901760
      %v1949 = vsub.f32 %v1947, %v1948
      %v1950 = vand.u32 %v1949, 4294901760
      %1951 = vmatpush1.msra.mxu0 %v1950
      %1952 = vmatprep.subr.mxu0 0.0
      %v1953 = vand.u32 %v253, 4294901760
      %v1954 = vsub.f32 %v253, %v1953
      %v1955 = vand.u32 %v1954, 4294901760
      %v1956 = vsub.f32 %v1954, %v1955
      %v1957 = vand.u32 %v1956, 4294901760
      %1958 = vmatpush1.msra.mxu0 %v1957
      %1959 = vmatprep.subr.mxu0 0.0
      %v1960 = vand.u32 %v252, 4294901760
      %v1961 = vsub.f32 %v252, %v1960
      %v1962 = vand.u32 %v1961, 4294901760
      %v1963 = vsub.f32 %v1961, %v1962
      %v1964 = vand.u32 %v1963, 4294901760
      %1965 = vmatpush1.msra.mxu0 %v1964
      %1966 = vmatprep.subr.mxu0 0.0
      %v1967 = vand.u32 %v251, 4294901760
      %v1968 = vsub.f32 %v251, %v1967
      %v1969 = vand.u32 %v1968, 4294901760
      %v1970 = vsub.f32 %v1968, %v1969
      %v1971 = vand.u32 %v1970, 4294901760
      %1972 = vmatpush1.msra.mxu0 %v1971
      %1973 = vmatprep.subr.mxu0 0.0
      %v1974 = vand.u32 %v250, 4294901760
      %v1975 = vsub.f32 %v250, %v1974
      %v1976 = vand.u32 %v1975, 4294901760
      %v1977 = vsub.f32 %v1975, %v1976
      %v1978 = vand.u32 %v1977, 4294901760
      %1979 = vmatpush1.msra.mxu0 %v1978
      %1980 = vmatprep.subr.mxu0 0.0
      %v1981 = vand.u32 %v249, 4294901760
      %v1982 = vsub.f32 %v249, %v1981
      %v1983 = vand.u32 %v1982, 4294901760
      %v1984 = vsub.f32 %v1982, %v1983
      %v1985 = vand.u32 %v1984, 4294901760
      %1986 = vmatpush1.msra.mxu0 %v1985
      %1987 = vmatprep.subr.mxu0 0.0
      %1988 = vmatpush2.msra.mxu0 0.0
      %1989 = vmatprep.subr.mxu0 0.0
      %1990 = vmatpush2.msra.mxu0 0.0
      %1991 = vmatprep.subr.mxu0 0.0
      %1992 = vmatpush2.msra.mxu0 0.0
      %1993 = vmatprep.subr.mxu0 0.0
      %1994 = vmatpush2.msra.mxu0 0.0
      %1995 = vmatprep.subr.mxu0 0.0
      %1996 = vmatpush2.msra.mxu0 0.0
      %1997 = vmatprep.subr.mxu0 0.0
      %1998 = vmatpush2.msra.mxu0 0.0
      %1999 = vmatprep.subr.mxu0 0.0
      %2000 = vmatpush2.msra.mxu0 0.0
      %2001 = vmatprep.subr.mxu0 0.0
      %2002 = vmatpush2.msra.mxu0 0.0
      %2003 = vmatprep.subr.mxu0 0.0
      %2004 = vmatpush2.msra.mxu0 0.0
      %2005 = vmatprep.subr.mxu0 0.0
      %2006 = vmatpush2.msra.mxu0 0.0
      %2007 = vmatprep.subr.mxu0 0.0
      %2008 = vmatpush2.msra.mxu0 0.0
      %2009 = vmatprep.subr.mxu0 0.0
      %2010 = vmatpush2.msra.mxu0 0.0
      %2011 = vmatprep.subr.mxu0 0.0
      %2012 = vmatpush2.msra.mxu0 0.0
      %2013 = vmatprep.subr.mxu0 0.0
      %2014 = vmatpush2.msra.mxu0 0.0
      %2015 = vmatprep.subr.mxu0 0.0
      %2016 = vmatpush2.msra.mxu0 0.0
      %2017 = vmatprep.subr.mxu0 0.0
      %2018 = vmatpush2.msra.mxu0 0.0
      %2019 = vmatprep.mubr.f32.mxu0 0.0
      %v2020 = vand.u32 %v1581, 4294901760
      %2021 = vmatmul.mubr.f32.gmra.mxu0 %v2020
      %v2022 = vpop.f32.mrf.mxu0
      %v2023 = vadd.f32 %v1692, %v2022
      %v2024 = vpop.f32.mrf.mxu0
      %2025 = vmatprep.mubr.f32.mxu0 0.0
      %v2026 = vand.u32 %v1582, 4294901760
      %2027 = vmatmul.mubr.f32.gmra.mxu0 %v2026
      %v2028 = vpop.f32.mrf.mxu0
      %v2029 = vadd.f32 %v1702, %v2028
      %v2030 = vpop.f32.mrf.mxu0
      %2031 = vmatprep.mubr.f32.mxu0 0.0
      %v2032 = vand.u32 %v1583, 4294901760
      %2033 = vmatmul.mubr.f32.gmra.mxu0 %v2032
      %v2034 = vpop.f32.mrf.mxu0
      %v2035 = vadd.f32 %v1712, %v2034
      %v2036 = vpop.f32.mrf.mxu0
      %2037 = vmatprep.mubr.f32.mxu0 0.0
      %v2038 = vand.u32 %v1584, 4294901760
      %2039 = vmatmul.mubr.f32.gmra.mxu0 %v2038
      %v2040 = vpop.f32.mrf.mxu0
      %v2041 = vadd.f32 %v1722, %v2040
      %v2042 = vpop.f32.mrf.mxu0
      %2043 = vmatprep.mubr.f32.mxu0 0.0
      %v2044 = vand.u32 %v1585, 4294901760
      %2045 = vmatmul.mubr.f32.gmra.mxu0 %v2044
      %v2046 = vpop.f32.mrf.mxu0
      %v2047 = vadd.f32 %v1732, %v2046
      %v2048 = vpop.f32.mrf.mxu0
      %2049 = vmatprep.mubr.f32.mxu0 0.0
      %v2050 = vand.u32 %v1586, 4294901760
      %2051 = vmatmul.mubr.f32.gmra.mxu0 %v2050
      %v2052 = vpop.f32.mrf.mxu0
      %v2053 = vadd.f32 %v1742, %v2052
      %v2054 = vpop.f32.mrf.mxu0
      %2055 = vmatprep.mubr.f32.mxu0 0.0
      %v2056 = vand.u32 %v1587, 4294901760
      %2057 = vmatmul.mubr.f32.gmra.mxu0 %v2056
      %v2058 = vpop.f32.mrf.mxu0
      %v2059 = vadd.f32 %v1752, %v2058
      %v2060 = vpop.f32.mrf.mxu0
      %2061 = vmatprep.mubr.f32.mxu0 0.0
      %v2062 = vand.u32 %v1588, 4294901760
      %2063 = vmatmul.mubr.f32.gmra.mxu0 %v2062
      %v2064 = vpop.f32.mrf.mxu0
      %v2065 = vadd.f32 %v1762, %v2064
      %v2066 = vpop.f32.mrf.mxu0
      %2067 = vmatprep.mubr.f32.mxu0 0.0
      %v2068 = vand.u32 %v1589, 4294901760
      %2069 = vmatmul.mubr.f32.gmra.mxu0 %v2068
      %v2070 = vpop.f32.mrf.mxu0
      %v2071 = vadd.f32 %v1772, %v2070
      %v2072 = vpop.f32.mrf.mxu0
      %2073 = vmatprep.mubr.f32.mxu0 0.0
      %v2074 = vand.u32 %v1590, 4294901760
      %2075 = vmatmul.mubr.f32.gmra.mxu0 %v2074
      %v2076 = vpop.f32.mrf.mxu0
      %v2077 = vadd.f32 %v1782, %v2076
      %v2078 = vpop.f32.mrf.mxu0
      %2079 = vmatprep.mubr.f32.mxu0 0.0
      %v2080 = vand.u32 %v1591, 4294901760
      %2081 = vmatmul.mubr.f32.gmra.mxu0 %v2080
      %v2082 = vpop.f32.mrf.mxu0
      %v2083 = vadd.f32 %v1792, %v2082
      %v2084 = vpop.f32.mrf.mxu0
      %2085 = vmatprep.mubr.f32.mxu0 0.0
      %v2086 = vand.u32 %v1592, 4294901760
      %2087 = vmatmul.mubr.f32.gmra.mxu0 %v2086
      %v2088 = vpop.f32.mrf.mxu0
      %v2089 = vadd.f32 %v1802, %v2088
      %v2090 = vpop.f32.mrf.mxu0
      %2091 = vmatprep.mubr.f32.mxu0 0.0
      %v2092 = vand.u32 %v1593, 4294901760
      %2093 = vmatmul.mubr.f32.gmra.mxu0 %v2092
      %v2094 = vpop.f32.mrf.mxu0
      %v2095 = vadd.f32 %v1812, %v2094
      %v2096 = vpop.f32.mrf.mxu0
      %2097 = vmatprep.mubr.f32.mxu0 0.0
      %v2098 = vand.u32 %v1594, 4294901760
      %2099 = vmatmul.mubr.f32.gmra.mxu0 %v2098
      %v2100 = vpop.f32.mrf.mxu0
      %v2101 = vadd.f32 %v1822, %v2100
      %v2102 = vpop.f32.mrf.mxu0
      %2103 = vmatprep.mubr.f32.mxu0 0.0
      %v2104 = vand.u32 %v1595, 4294901760
      %2105 = vmatmul.mubr.f32.gmra.mxu0 %v2104
      %v2106 = vpop.f32.mrf.mxu0
      %v2107 = vadd.f32 %v1832, %v2106
      %v2108 = vpop.f32.mrf.mxu0
      %2109 = vmatprep.mubr.f32.mxu0 0.0
      %v2110 = vand.u32 %v1596, 4294901760
      %2111 = vmatmul.mubr.f32.gmra.mxu0 %v2110
      %v2112 = vpop.f32.mrf.mxu0
      %v2113 = vadd.f32 %v1842, %v2112
      %v2114 = vpop.f32.mrf.mxu0
      %2115 = vmatprep.mubr.f32.mxu0 0.0
      %v2116 = vand.u32 %v1597, 4294901760
      %2117 = vmatmul.mubr.f32.gmra.mxu0 %v2116
      %v2118 = vpop.f32.mrf.mxu0
      %v2119 = vadd.f32 %v1852, %v2118
      %v2120 = vpop.f32.mrf.mxu0
      %2121 = vmatprep.mubr.f32.mxu0 0.0
      %v2122 = vand.u32 %v1598, 4294901760
      %2123 = vmatmul.mubr.f32.gmra.mxu0 %v2122
      %v2124 = vpop.f32.mrf.mxu0
      %v2125 = vadd.f32 %v1862, %v2124
      %v2126 = vpop.f32.mrf.mxu0
      %2127 = vmatprep.mubr.f32.mxu0 0.0
      %v2128 = vand.u32 %v1599, 4294901760
      %2129 = vmatmul.mubr.f32.gmra.mxu0 %v2128
      %v2130 = vpop.f32.mrf.mxu0
      %v2131 = vadd.f32 %v1872, %v2130
      %v2132 = vpop.f32.mrf.mxu0
      %2133 = vdwg.mxu0
      %2134 = vmatprep.subr.mxu0 0.0
      %v2135 = vand.u32 %v264, 4294901760
      %v2136 = vsub.f32 %v264, %v2135
      %2137 = vmatpush1.msra.mxu0 %v2136
      %2138 = vmatprep.subr.mxu0 0.0
      %v2139 = vand.u32 %v263, 4294901760
      %v2140 = vsub.f32 %v263, %v2139
      %2141 = vmatpush1.msra.mxu0 %v2140
      %2142 = vmatprep.subr.mxu0 0.0
      %v2143 = vand.u32 %v262, 4294901760
      %v2144 = vsub.f32 %v262, %v2143
      %2145 = vmatpush1.msra.mxu0 %v2144
      %2146 = vmatprep.subr.mxu0 0.0
      %v2147 = vand.u32 %v261, 4294901760
      %v2148 = vsub.f32 %v261, %v2147
      %2149 = vmatpush1.msra.mxu0 %v2148
      %2150 = vmatprep.subr.mxu0 0.0
      %v2151 = vand.u32 %v260, 4294901760
      %v2152 = vsub.f32 %v260, %v2151
      %2153 = vmatpush1.msra.mxu0 %v2152
      %2154 = vmatprep.subr.mxu0 0.0
      %v2155 = vand.u32 %v259, 4294901760
      %v2156 = vsub.f32 %v259, %v2155
      %2157 = vmatpush1.msra.mxu0 %v2156
      %2158 = vmatprep.subr.mxu0 0.0
      %v2159 = vand.u32 %v258, 4294901760
      %v2160 = vsub.f32 %v258, %v2159
      %2161 = vmatpush1.msra.mxu0 %v2160
      %2162 = vmatprep.subr.mxu0 0.0
      %v2163 = vand.u32 %v257, 4294901760
      %v2164 = vsub.f32 %v257, %v2163
      %2165 = vmatpush1.msra.mxu0 %v2164
      %2166 = vmatprep.subr.mxu0 0.0
      %v2167 = vand.u32 %v256, 4294901760
      %v2168 = vsub.f32 %v256, %v2167
      %2169 = vmatpush1.msra.mxu0 %v2168
      %2170 = vmatprep.subr.mxu0 0.0
      %v2171 = vand.u32 %v255, 4294901760
      %v2172 = vsub.f32 %v255, %v2171
      %2173 = vmatpush1.msra.mxu0 %v2172
      %2174 = vmatprep.subr.mxu0 0.0
      %v2175 = vand.u32 %v254, 4294901760
      %v2176 = vsub.f32 %v254, %v2175
      %2177 = vmatpush1.msra.mxu0 %v2176
      %2178 = vmatprep.subr.mxu0 0.0
      %v2179 = vand.u32 %v253, 4294901760
      %v2180 = vsub.f32 %v253, %v2179
      %2181 = vmatpush1.msra.mxu0 %v2180
      %2182 = vmatprep.subr.mxu0 0.0
      %v2183 = vand.u32 %v252, 4294901760
      %v2184 = vsub.f32 %v252, %v2183
      %2185 = vmatpush1.msra.mxu0 %v2184
      %2186 = vmatprep.subr.mxu0 0.0
      %v2187 = vand.u32 %v251, 4294901760
      %v2188 = vsub.f32 %v251, %v2187
      %2189 = vmatpush1.msra.mxu0 %v2188
      %2190 = vmatprep.subr.mxu0 0.0
      %v2191 = vand.u32 %v250, 4294901760
      %v2192 = vsub.f32 %v250, %v2191
      %2193 = vmatpush1.msra.mxu0 %v2192
      %2194 = vmatprep.subr.mxu0 0.0
      %v2195 = vand.u32 %v249, 4294901760
      %v2196 = vsub.f32 %v249, %v2195
      %2197 = vmatpush1.msra.mxu0 %v2196
      %2198 = vmatprep.subr.mxu0 0.0
      %2199 = vmatpush2.msra.mxu0 0.0
      %2200 = vmatprep.subr.mxu0 0.0
      %2201 = vmatpush2.msra.mxu0 0.0
      %2202 = vmatprep.subr.mxu0 0.0
      %2203 = vmatpush2.msra.mxu0 0.0
      %2204 = vmatprep.subr.mxu0 0.0
      %2205 = vmatpush2.msra.mxu0 0.0
      %2206 = vmatprep.subr.mxu0 0.0
      %2207 = vmatpush2.msra.mxu0 0.0
      %2208 = vmatprep.subr.mxu0 0.0
      %2209 = vmatpush2.msra.mxu0 0.0
      %2210 = vmatprep.subr.mxu0 0.0
      %2211 = vmatpush2.msra.mxu0 0.0
      %2212 = vmatprep.subr.mxu0 0.0
      %2213 = vmatpush2.msra.mxu0 0.0
      %2214 = vmatprep.subr.mxu0 0.0
      %2215 = vmatpush2.msra.mxu0 0.0
      %2216 = vmatprep.subr.mxu0 0.0
      %2217 = vmatpush2.msra.mxu0 0.0
      %2218 = vmatprep.subr.mxu0 0.0
      %2219 = vmatpush2.msra.mxu0 0.0
      %2220 = vmatprep.subr.mxu0 0.0
      %2221 = vmatpush2.msra.mxu0 0.0
      %2222 = vmatprep.subr.mxu0 0.0
      %2223 = vmatpush2.msra.mxu0 0.0
      %2224 = vmatprep.subr.mxu0 0.0
      %2225 = vmatpush2.msra.mxu0 0.0
      %2226 = vmatprep.subr.mxu0 0.0
      %2227 = vmatpush2.msra.mxu0 0.0
      %2228 = vmatprep.subr.mxu0 0.0
      %2229 = vmatpush2.msra.mxu0 0.0
      %2230 = vmatprep.mubr.f32.mxu0 0.0
      %v2231 = vand.u32 %v1581, 4294901760
      %v2232 = vsub.f32 %v1581, %v2231
      %2233 = vmatmul.mubr.f32.gmra.mxu0 %v2232
      %v2234 = vpop.f32.mrf.mxu0
      %v2235 = vadd.f32 %v2023, %v2234
      %v2236 = vpop.f32.mrf.mxu0
      %2237 = vmatprep.mubr.f32.mxu0 0.0
      %v2238 = vand.u32 %v1582, 4294901760
      %v2239 = vsub.f32 %v1582, %v2238
      %2240 = vmatmul.mubr.f32.gmra.mxu0 %v2239
      %v2241 = vpop.f32.mrf.mxu0
      %v2242 = vadd.f32 %v2029, %v2241
      %v2243 = vpop.f32.mrf.mxu0
      %2244 = vmatprep.mubr.f32.mxu0 0.0
      %v2245 = vand.u32 %v1583, 4294901760
      %v2246 = vsub.f32 %v1583, %v2245
      %2247 = vmatmul.mubr.f32.gmra.mxu0 %v2246
      %v2248 = vpop.f32.mrf.mxu0
      %v2249 = vadd.f32 %v2035, %v2248
      %v2250 = vpop.f32.mrf.mxu0
      %2251 = vmatprep.mubr.f32.mxu0 0.0
      %v2252 = vand.u32 %v1584, 4294901760
      %v2253 = vsub.f32 %v1584, %v2252
      %2254 = vmatmul.mubr.f32.gmra.mxu0 %v2253
      %v2255 = vpop.f32.mrf.mxu0
      %v2256 = vadd.f32 %v2041, %v2255
      %v2257 = vpop.f32.mrf.mxu0
      %2258 = vmatprep.mubr.f32.mxu0 0.0
      %v2259 = vand.u32 %v1585, 4294901760
      %v2260 = vsub.f32 %v1585, %v2259
      %2261 = vmatmul.mubr.f32.gmra.mxu0 %v2260
      %v2262 = vpop.f32.mrf.mxu0
      %v2263 = vadd.f32 %v2047, %v2262
      %v2264 = vpop.f32.mrf.mxu0
      %2265 = vmatprep.mubr.f32.mxu0 0.0
      %v2266 = vand.u32 %v1586, 4294901760
      %v2267 = vsub.f32 %v1586, %v2266
      %2268 = vmatmul.mubr.f32.gmra.mxu0 %v2267
      %v2269 = vpop.f32.mrf.mxu0
      %v2270 = vadd.f32 %v2053, %v2269
      %v2271 = vpop.f32.mrf.mxu0
      %2272 = vmatprep.mubr.f32.mxu0 0.0
      %v2273 = vand.u32 %v1587, 4294901760
      %v2274 = vsub.f32 %v1587, %v2273
      %2275 = vmatmul.mubr.f32.gmra.mxu0 %v2274
      %v2276 = vpop.f32.mrf.mxu0
      %v2277 = vadd.f32 %v2059, %v2276
      %v2278 = vpop.f32.mrf.mxu0
      %2279 = vmatprep.mubr.f32.mxu0 0.0
      %v2280 = vand.u32 %v1588, 4294901760
      %v2281 = vsub.f32 %v1588, %v2280
      %2282 = vmatmul.mubr.f32.gmra.mxu0 %v2281
      %v2283 = vpop.f32.mrf.mxu0
      %v2284 = vadd.f32 %v2065, %v2283
      %v2285 = vpop.f32.mrf.mxu0
      %2286 = vmatprep.mubr.f32.mxu0 0.0
      %v2287 = vand.u32 %v1589, 4294901760
      %v2288 = vsub.f32 %v1589, %v2287
      %2289 = vmatmul.mubr.f32.gmra.mxu0 %v2288
      %v2290 = vpop.f32.mrf.mxu0
      %v2291 = vadd.f32 %v2071, %v2290
      %v2292 = vpop.f32.mrf.mxu0
      %2293 = vmatprep.mubr.f32.mxu0 0.0
      %v2294 = vand.u32 %v1590, 4294901760
      %v2295 = vsub.f32 %v1590, %v2294
      %2296 = vmatmul.mubr.f32.gmra.mxu0 %v2295
      %v2297 = vpop.f32.mrf.mxu0
      %v2298 = vadd.f32 %v2077, %v2297
      %v2299 = vpop.f32.mrf.mxu0
      %2300 = vmatprep.mubr.f32.mxu0 0.0
      %v2301 = vand.u32 %v1591, 4294901760
      %v2302 = vsub.f32 %v1591, %v2301
      %2303 = vmatmul.mubr.f32.gmra.mxu0 %v2302
      %v2304 = vpop.f32.mrf.mxu0
      %v2305 = vadd.f32 %v2083, %v2304
      %v2306 = vpop.f32.mrf.mxu0
      %2307 = vmatprep.mubr.f32.mxu0 0.0
      %v2308 = vand.u32 %v1592, 4294901760
      %v2309 = vsub.f32 %v1592, %v2308
      %2310 = vmatmul.mubr.f32.gmra.mxu0 %v2309
      %v2311 = vpop.f32.mrf.mxu0
      %v2312 = vadd.f32 %v2089, %v2311
      %v2313 = vpop.f32.mrf.mxu0
      %2314 = vmatprep.mubr.f32.mxu0 0.0
      %v2315 = vand.u32 %v1593, 4294901760
      %v2316 = vsub.f32 %v1593, %v2315
      %2317 = vmatmul.mubr.f32.gmra.mxu0 %v2316
      %v2318 = vpop.f32.mrf.mxu0
      %v2319 = vadd.f32 %v2095, %v2318
      %v2320 = vpop.f32.mrf.mxu0
      %2321 = vmatprep.mubr.f32.mxu0 0.0
      %v2322 = vand.u32 %v1594, 4294901760
      %v2323 = vsub.f32 %v1594, %v2322
      %2324 = vmatmul.mubr.f32.gmra.mxu0 %v2323
      %v2325 = vpop.f32.mrf.mxu0
      %v2326 = vadd.f32 %v2101, %v2325
      %v2327 = vpop.f32.mrf.mxu0
      %2328 = vmatprep.mubr.f32.mxu0 0.0
      %v2329 = vand.u32 %v1595, 4294901760
      %v2330 = vsub.f32 %v1595, %v2329
      %2331 = vmatmul.mubr.f32.gmra.mxu0 %v2330
      %v2332 = vpop.f32.mrf.mxu0
      %v2333 = vadd.f32 %v2107, %v2332
      %v2334 = vpop.f32.mrf.mxu0
      %2335 = vmatprep.mubr.f32.mxu0 0.0
      %v2336 = vand.u32 %v1596, 4294901760
      %v2337 = vsub.f32 %v1596, %v2336
      %2338 = vmatmul.mubr.f32.gmra.mxu0 %v2337
      %v2339 = vpop.f32.mrf.mxu0
      %v2340 = vadd.f32 %v2113, %v2339
      %v2341 = vpop.f32.mrf.mxu0
      %2342 = vmatprep.mubr.f32.mxu0 0.0
      %v2343 = vand.u32 %v1597, 4294901760
      %v2344 = vsub.f32 %v1597, %v2343
      %2345 = vmatmul.mubr.f32.gmra.mxu0 %v2344
      %v2346 = vpop.f32.mrf.mxu0
      %v2347 = vadd.f32 %v2119, %v2346
      %v2348 = vpop.f32.mrf.mxu0
      %2349 = vmatprep.mubr.f32.mxu0 0.0
      %v2350 = vand.u32 %v1598, 4294901760
      %v2351 = vsub.f32 %v1598, %v2350
      %2352 = vmatmul.mubr.f32.gmra.mxu0 %v2351
      %v2353 = vpop.f32.mrf.mxu0
      %v2354 = vadd.f32 %v2125, %v2353
      %v2355 = vpop.f32.mrf.mxu0
      %2356 = vmatprep.mubr.f32.mxu0 0.0
      %v2357 = vand.u32 %v1599, 4294901760
      %v2358 = vsub.f32 %v1599, %v2357
      %2359 = vmatmul.mubr.f32.gmra.mxu0 %v2358
      %v2360 = vpop.f32.mrf.mxu0
      %v2361 = vadd.f32 %v2131, %v2360
      %v2362 = vpop.f32.mrf.mxu0
      %2363 = vdwg.mxu0
      %2364 = vmatprep.subr.mxu0 0.0
      %v2365 = vand.u32 %v264, 4294901760
      %2366 = vmatpush1.msra.mxu0 %v2365
      %2367 = vmatprep.subr.mxu0 0.0
      %v2368 = vand.u32 %v263, 4294901760
      %2369 = vmatpush1.msra.mxu0 %v2368
      %2370 = vmatprep.subr.mxu0 0.0
      %v2371 = vand.u32 %v262, 4294901760
      %2372 = vmatpush1.msra.mxu0 %v2371
      %2373 = vmatprep.subr.mxu0 0.0
      %v2374 = vand.u32 %v261, 4294901760
      %2375 = vmatpush1.msra.mxu0 %v2374
      %2376 = vmatprep.subr.mxu0 0.0
      %v2377 = vand.u32 %v260, 4294901760
      %2378 = vmatpush1.msra.mxu0 %v2377
      %2379 = vmatprep.subr.mxu0 0.0
      %v2380 = vand.u32 %v259, 4294901760
      %2381 = vmatpush1.msra.mxu0 %v2380
      %2382 = vmatprep.subr.mxu0 0.0
      %v2383 = vand.u32 %v258, 4294901760
      %2384 = vmatpush1.msra.mxu0 %v2383
      %2385 = vmatprep.subr.mxu0 0.0
      %v2386 = vand.u32 %v257, 4294901760
      %2387 = vmatpush1.msra.mxu0 %v2386
      %2388 = vmatprep.subr.mxu0 0.0
      %v2389 = vand.u32 %v256, 4294901760
      %2390 = vmatpush1.msra.mxu0 %v2389
      %2391 = vmatprep.subr.mxu0 0.0
      %v2392 = vand.u32 %v255, 4294901760
      %2393 = vmatpush1.msra.mxu0 %v2392
      %2394 = vmatprep.subr.mxu0 0.0
      %v2395 = vand.u32 %v254, 4294901760
      %2396 = vmatpush1.msra.mxu0 %v2395
      %2397 = vmatprep.subr.mxu0 0.0
      %v2398 = vand.u32 %v253, 4294901760
      %2399 = vmatpush1.msra.mxu0 %v2398
      %2400 = vmatprep.subr.mxu0 0.0
      %v2401 = vand.u32 %v252, 4294901760
      %2402 = vmatpush1.msra.mxu0 %v2401
      %2403 = vmatprep.subr.mxu0 0.0
      %v2404 = vand.u32 %v251, 4294901760
      %2405 = vmatpush1.msra.mxu0 %v2404
      %2406 = vmatprep.subr.mxu0 0.0
      %v2407 = vand.u32 %v250, 4294901760
      %2408 = vmatpush1.msra.mxu0 %v2407
      %2409 = vmatprep.subr.mxu0 0.0
      %v2410 = vand.u32 %v249, 4294901760
      %2411 = vmatpush1.msra.mxu0 %v2410
      %2412 = vmatprep.subr.mxu0 0.0
      %2413 = vmatpush2.msra.mxu0 0.0
      %2414 = vmatprep.subr.mxu0 0.0
      %2415 = vmatpush2.msra.mxu0 0.0
      %2416 = vmatprep.subr.mxu0 0.0
      %2417 = vmatpush2.msra.mxu0 0.0
      %2418 = vmatprep.subr.mxu0 0.0
      %2419 = vmatpush2.msra.mxu0 0.0
      %2420 = vmatprep.subr.mxu0 0.0
      %2421 = vmatpush2.msra.mxu0 0.0
      %2422 = vmatprep.subr.mxu0 0.0
      %2423 = vmatpush2.msra.mxu0 0.0
      %2424 = vmatprep.subr.mxu0 0.0
      %2425 = vmatpush2.msra.mxu0 0.0
      %2426 = vmatprep.subr.mxu0 0.0
      %2427 = vmatpush2.msra.mxu0 0.0
      %2428 = vmatprep.subr.mxu0 0.0
      %2429 = vmatpush2.msra.mxu0 0.0
      %2430 = vmatprep.subr.mxu0 0.0
      %2431 = vmatpush2.msra.mxu0 0.0
      %2432 = vmatprep.subr.mxu0 0.0
      %2433 = vmatpush2.msra.mxu0 0.0
      %2434 = vmatprep.subr.mxu0 0.0
      %2435 = vmatpush2.msra.mxu0 0.0
      %2436 = vmatprep.subr.mxu0 0.0
      %2437 = vmatpush2.msra.mxu0 0.0
      %2438 = vmatprep.subr.mxu0 0.0
      %2439 = vmatpush2.msra.mxu0 0.0
      %2440 = vmatprep.subr.mxu0 0.0
      %2441 = vmatpush2.msra.mxu0 0.0
      %2442 = vmatprep.subr.mxu0 0.0
      %2443 = vmatpush2.msra.mxu0 0.0
      %2444 = vmatprep.mubr.f32.mxu0 0.0
      %v2445 = vand.u32 %v1581, 4294901760
      %v2446 = vsub.f32 %v1581, %v2445
      %v2447 = vand.u32 %v2446, 4294901760
      %2448 = vmatmul.mubr.f32.gmra.mxu0 %v2447
      %v2449 = vpop.f32.mrf.mxu0
      %v2450 = vadd.f32 %v2235, %v2449
      %v2451 = vpop.f32.mrf.mxu0
      %2452 = vmatprep.mubr.f32.mxu0 0.0
      %v2453 = vand.u32 %v1582, 4294901760
      %v2454 = vsub.f32 %v1582, %v2453
      %v2455 = vand.u32 %v2454, 4294901760
      %2456 = vmatmul.mubr.f32.gmra.mxu0 %v2455
      %v2457 = vpop.f32.mrf.mxu0
      %v2458 = vadd.f32 %v2242, %v2457
      %v2459 = vpop.f32.mrf.mxu0
      %2460 = vmatprep.mubr.f32.mxu0 0.0
      %v2461 = vand.u32 %v1583, 4294901760
      %v2462 = vsub.f32 %v1583, %v2461
      %v2463 = vand.u32 %v2462, 4294901760
      %2464 = vmatmul.mubr.f32.gmra.mxu0 %v2463
      %v2465 = vpop.f32.mrf.mxu0
      %v2466 = vadd.f32 %v2249, %v2465
      %v2467 = vpop.f32.mrf.mxu0
      %2468 = vmatprep.mubr.f32.mxu0 0.0
      %v2469 = vand.u32 %v1584, 4294901760
      %v2470 = vsub.f32 %v1584, %v2469
      %v2471 = vand.u32 %v2470, 4294901760
      %2472 = vmatmul.mubr.f32.gmra.mxu0 %v2471
      %v2473 = vpop.f32.mrf.mxu0
      %v2474 = vadd.f32 %v2256, %v2473
      %v2475 = vpop.f32.mrf.mxu0
      %2476 = vmatprep.mubr.f32.mxu0 0.0
      %v2477 = vand.u32 %v1585, 4294901760
      %v2478 = vsub.f32 %v1585, %v2477
      %v2479 = vand.u32 %v2478, 4294901760
      %2480 = vmatmul.mubr.f32.gmra.mxu0 %v2479
      %v2481 = vpop.f32.mrf.mxu0
      %v2482 = vadd.f32 %v2263, %v2481
      %v2483 = vpop.f32.mrf.mxu0
      %2484 = vmatprep.mubr.f32.mxu0 0.0
      %v2485 = vand.u32 %v1586, 4294901760
      %v2486 = vsub.f32 %v1586, %v2485
      %v2487 = vand.u32 %v2486, 4294901760
      %2488 = vmatmul.mubr.f32.gmra.mxu0 %v2487
      %v2489 = vpop.f32.mrf.mxu0
      %v2490 = vadd.f32 %v2270, %v2489
      %v2491 = vpop.f32.mrf.mxu0
      %2492 = vmatprep.mubr.f32.mxu0 0.0
      %v2493 = vand.u32 %v1587, 4294901760
      %v2494 = vsub.f32 %v1587, %v2493
      %v2495 = vand.u32 %v2494, 4294901760
      %2496 = vmatmul.mubr.f32.gmra.mxu0 %v2495
      %v2497 = vpop.f32.mrf.mxu0
      %v2498 = vadd.f32 %v2277, %v2497
      %v2499 = vpop.f32.mrf.mxu0
      %2500 = vmatprep.mubr.f32.mxu0 0.0
      %v2501 = vand.u32 %v1588, 4294901760
      %v2502 = vsub.f32 %v1588, %v2501
      %v2503 = vand.u32 %v2502, 4294901760
      %2504 = vmatmul.mubr.f32.gmra.mxu0 %v2503
      %v2505 = vpop.f32.mrf.mxu0
      %v2506 = vadd.f32 %v2284, %v2505
      %v2507 = vpop.f32.mrf.mxu0
      %2508 = vmatprep.mubr.f32.mxu0 0.0
      %v2509 = vand.u32 %v1589, 4294901760
      %v2510 = vsub.f32 %v1589, %v2509
      %v2511 = vand.u32 %v2510, 4294901760
      %2512 = vmatmul.mubr.f32.gmra.mxu0 %v2511
      %v2513 = vpop.f32.mrf.mxu0
      %v2514 = vadd.f32 %v2291, %v2513
      %v2515 = vpop.f32.mrf.mxu0
      %2516 = vmatprep.mubr.f32.mxu0 0.0
      %v2517 = vand.u32 %v1590, 4294901760
      %v2518 = vsub.f32 %v1590, %v2517
      %v2519 = vand.u32 %v2518, 4294901760
      %2520 = vmatmul.mubr.f32.gmra.mxu0 %v2519
      %v2521 = vpop.f32.mrf.mxu0
      %v2522 = vadd.f32 %v2298, %v2521
      %v2523 = vpop.f32.mrf.mxu0
      %2524 = vmatprep.mubr.f32.mxu0 0.0
      %v2525 = vand.u32 %v1591, 4294901760
      %v2526 = vsub.f32 %v1591, %v2525
      %v2527 = vand.u32 %v2526, 4294901760
      %2528 = vmatmul.mubr.f32.gmra.mxu0 %v2527
      %v2529 = vpop.f32.mrf.mxu0
      %v2530 = vadd.f32 %v2305, %v2529
      %v2531 = vpop.f32.mrf.mxu0
      %2532 = vmatprep.mubr.f32.mxu0 0.0
      %v2533 = vand.u32 %v1592, 4294901760
      %v2534 = vsub.f32 %v1592, %v2533
      %v2535 = vand.u32 %v2534, 4294901760
      %2536 = vmatmul.mubr.f32.gmra.mxu0 %v2535
      %v2537 = vpop.f32.mrf.mxu0
      %v2538 = vadd.f32 %v2312, %v2537
      %v2539 = vpop.f32.mrf.mxu0
      %2540 = vmatprep.mubr.f32.mxu0 0.0
      %v2541 = vand.u32 %v1593, 4294901760
      %v2542 = vsub.f32 %v1593, %v2541
      %v2543 = vand.u32 %v2542, 4294901760
      %2544 = vmatmul.mubr.f32.gmra.mxu0 %v2543
      %v2545 = vpop.f32.mrf.mxu0
      %v2546 = vadd.f32 %v2319, %v2545
      %v2547 = vpop.f32.mrf.mxu0
      %2548 = vmatprep.mubr.f32.mxu0 0.0
      %v2549 = vand.u32 %v1594, 4294901760
      %v2550 = vsub.f32 %v1594, %v2549
      %v2551 = vand.u32 %v2550, 4294901760
      %2552 = vmatmul.mubr.f32.gmra.mxu0 %v2551
      %v2553 = vpop.f32.mrf.mxu0
      %v2554 = vadd.f32 %v2326, %v2553
      %v2555 = vpop.f32.mrf.mxu0
      %2556 = vmatprep.mubr.f32.mxu0 0.0
      %v2557 = vand.u32 %v1595, 4294901760
      %v2558 = vsub.f32 %v1595, %v2557
      %v2559 = vand.u32 %v2558, 4294901760
      %2560 = vmatmul.mubr.f32.gmra.mxu0 %v2559
      %v2561 = vpop.f32.mrf.mxu0
      %v2562 = vadd.f32 %v2333, %v2561
      %v2563 = vpop.f32.mrf.mxu0
      %2564 = vmatprep.mubr.f32.mxu0 0.0
      %v2565 = vand.u32 %v1596, 4294901760
      %v2566 = vsub.f32 %v1596, %v2565
      %v2567 = vand.u32 %v2566, 4294901760
      %2568 = vmatmul.mubr.f32.gmra.mxu0 %v2567
      %v2569 = vpop.f32.mrf.mxu0
      %v2570 = vadd.f32 %v2340, %v2569
      %v2571 = vpop.f32.mrf.mxu0
      %2572 = vmatprep.mubr.f32.mxu0 0.0
      %v2573 = vand.u32 %v1597, 4294901760
      %v2574 = vsub.f32 %v1597, %v2573
      %v2575 = vand.u32 %v2574, 4294901760
      %2576 = vmatmul.mubr.f32.gmra.mxu0 %v2575
      %v2577 = vpop.f32.mrf.mxu0
      %v2578 = vadd.f32 %v2347, %v2577
      %v2579 = vpop.f32.mrf.mxu0
      %2580 = vmatprep.mubr.f32.mxu0 0.0
      %v2581 = vand.u32 %v1598, 4294901760
      %v2582 = vsub.f32 %v1598, %v2581
      %v2583 = vand.u32 %v2582, 4294901760
      %2584 = vmatmul.mubr.f32.gmra.mxu0 %v2583
      %v2585 = vpop.f32.mrf.mxu0
      %v2586 = vadd.f32 %v2354, %v2585
      %v2587 = vpop.f32.mrf.mxu0
      %2588 = vmatprep.mubr.f32.mxu0 0.0
      %v2589 = vand.u32 %v1599, 4294901760
      %v2590 = vsub.f32 %v1599, %v2589
      %v2591 = vand.u32 %v2590, 4294901760
      %2592 = vmatmul.mubr.f32.gmra.mxu0 %v2591
      %v2593 = vpop.f32.mrf.mxu0
      %v2594 = vadd.f32 %v2361, %v2593
      %v2595 = vpop.f32.mrf.mxu0
      %2596 = vdwg.mxu0
      %2597 = vmatprep.subr.mxu0 0.0
      %v2598 = vand.u32 %v264, 4294901760
      %v2599 = vsub.f32 %v264, %v2598
      %v2600 = vand.u32 %v2599, 4294901760
      %2601 = vmatpush1.msra.mxu0 %v2600
      %2602 = vmatprep.subr.mxu0 0.0
      %v2603 = vand.u32 %v263, 4294901760
      %v2604 = vsub.f32 %v263, %v2603
      %v2605 = vand.u32 %v2604, 4294901760
      %2606 = vmatpush1.msra.mxu0 %v2605
      %2607 = vmatprep.subr.mxu0 0.0
      %v2608 = vand.u32 %v262, 4294901760
      %v2609 = vsub.f32 %v262, %v2608
      %v2610 = vand.u32 %v2609, 4294901760
      %2611 = vmatpush1.msra.mxu0 %v2610
      %2612 = vmatprep.subr.mxu0 0.0
      %v2613 = vand.u32 %v261, 4294901760
      %v2614 = vsub.f32 %v261, %v2613
      %v2615 = vand.u32 %v2614, 4294901760
      %2616 = vmatpush1.msra.mxu0 %v2615
      %2617 = vmatprep.subr.mxu0 0.0
      %v2618 = vand.u32 %v260, 4294901760
      %v2619 = vsub.f32 %v260, %v2618
      %v2620 = vand.u32 %v2619, 4294901760
      %2621 = vmatpush1.msra.mxu0 %v2620
      %2622 = vmatprep.subr.mxu0 0.0
      %v2623 = vand.u32 %v259, 4294901760
      %v2624 = vsub.f32 %v259, %v2623
      %v2625 = vand.u32 %v2624, 4294901760
      %2626 = vmatpush1.msra.mxu0 %v2625
      %2627 = vmatprep.subr.mxu0 0.0
      %v2628 = vand.u32 %v258, 4294901760
      %v2629 = vsub.f32 %v258, %v2628
      %v2630 = vand.u32 %v2629, 4294901760
      %2631 = vmatpush1.msra.mxu0 %v2630
      %2632 = vmatprep.subr.mxu0 0.0
      %v2633 = vand.u32 %v257, 4294901760
      %v2634 = vsub.f32 %v257, %v2633
      %v2635 = vand.u32 %v2634, 4294901760
      %2636 = vmatpush1.msra.mxu0 %v2635
      %2637 = vmatprep.subr.mxu0 0.0
      %v2638 = vand.u32 %v256, 4294901760
      %v2639 = vsub.f32 %v256, %v2638
      %v2640 = vand.u32 %v2639, 4294901760
      %2641 = vmatpush1.msra.mxu0 %v2640
      %2642 = vmatprep.subr.mxu0 0.0
      %v2643 = vand.u32 %v255, 4294901760
      %v2644 = vsub.f32 %v255, %v2643
      %v2645 = vand.u32 %v2644, 4294901760
      %2646 = vmatpush1.msra.mxu0 %v2645
      %2647 = vmatprep.subr.mxu0 0.0
      %v2648 = vand.u32 %v254, 4294901760
      %v2649 = vsub.f32 %v254, %v2648
      %v2650 = vand.u32 %v2649, 4294901760
      %2651 = vmatpush1.msra.mxu0 %v2650
      %2652 = vmatprep.subr.mxu0 0.0
      %v2653 = vand.u32 %v253, 4294901760
      %v2654 = vsub.f32 %v253, %v2653
      %v2655 = vand.u32 %v2654, 4294901760
      %2656 = vmatpush1.msra.mxu0 %v2655
      %2657 = vmatprep.subr.mxu0 0.0
      %v2658 = vand.u32 %v252, 4294901760
      %v2659 = vsub.f32 %v252, %v2658
      %v2660 = vand.u32 %v2659, 4294901760
      %2661 = vmatpush1.msra.mxu0 %v2660
      %2662 = vmatprep.subr.mxu0 0.0
      %v2663 = vand.u32 %v251, 4294901760
      %v2664 = vsub.f32 %v251, %v2663
      %v2665 = vand.u32 %v2664, 4294901760
      %2666 = vmatpush1.msra.mxu0 %v2665
      %2667 = vmatprep.subr.mxu0 0.0
      %v2668 = vand.u32 %v250, 4294901760
      %v2669 = vsub.f32 %v250, %v2668
      %v2670 = vand.u32 %v2669, 4294901760
      %2671 = vmatpush1.msra.mxu0 %v2670
      %2672 = vmatprep.subr.mxu0 0.0
      %v2673 = vand.u32 %v249, 4294901760
      %v2674 = vsub.f32 %v249, %v2673
      %v2675 = vand.u32 %v2674, 4294901760
      %2676 = vmatpush1.msra.mxu0 %v2675
      %2677 = vmatprep.subr.mxu0 0.0
      %2678 = vmatpush2.msra.mxu0 0.0
      %2679 = vmatprep.subr.mxu0 0.0
      %2680 = vmatpush2.msra.mxu0 0.0
      %2681 = vmatprep.subr.mxu0 0.0
      %2682 = vmatpush2.msra.mxu0 0.0
      %2683 = vmatprep.subr.mxu0 0.0
      %2684 = vmatpush2.msra.mxu0 0.0
      %2685 = vmatprep.subr.mxu0 0.0
      %2686 = vmatpush2.msra.mxu0 0.0
      %2687 = vmatprep.subr.mxu0 0.0
      %2688 = vmatpush2.msra.mxu0 0.0
      %2689 = vmatprep.subr.mxu0 0.0
      %2690 = vmatpush2.msra.mxu0 0.0
      %2691 = vmatprep.subr.mxu0 0.0
      %2692 = vmatpush2.msra.mxu0 0.0
      %2693 = vmatprep.subr.mxu0 0.0
      %2694 = vmatpush2.msra.mxu0 0.0
      %2695 = vmatprep.subr.mxu0 0.0
      %2696 = vmatpush2.msra.mxu0 0.0
      %2697 = vmatprep.subr.mxu0 0.0
      %2698 = vmatpush2.msra.mxu0 0.0
      %2699 = vmatprep.subr.mxu0 0.0
      %2700 = vmatpush2.msra.mxu0 0.0
      %2701 = vmatprep.subr.mxu0 0.0
      %2702 = vmatpush2.msra.mxu0 0.0
      %2703 = vmatprep.subr.mxu0 0.0
      %2704 = vmatpush2.msra.mxu0 0.0
      %2705 = vmatprep.subr.mxu0 0.0
      %2706 = vmatpush2.msra.mxu0 0.0
      %2707 = vmatprep.subr.mxu0 0.0
      %2708 = vmatpush2.msra.mxu0 0.0
      %2709 = vmatprep.mubr.f32.mxu0 0.0
      %v2710 = vand.u32 %v1581, 4294901760
      %2711 = vmatmul.mubr.f32.gmra.mxu0 %v2710
      %v2712 = vpop.f32.mrf.mxu0
      %v2713 = vadd.f32 %v2450, %v2712
      %v2714 = vpop.f32.mrf.mxu0
      %2715 = vmatprep.mubr.f32.mxu0 0.0
      %v2716 = vand.u32 %v1582, 4294901760
      %2717 = vmatmul.mubr.f32.gmra.mxu0 %v2716
      %v2718 = vpop.f32.mrf.mxu0
      %v2719 = vadd.f32 %v2458, %v2718
      %v2720 = vpop.f32.mrf.mxu0
      %2721 = vmatprep.mubr.f32.mxu0 0.0
      %v2722 = vand.u32 %v1583, 4294901760
      %2723 = vmatmul.mubr.f32.gmra.mxu0 %v2722
      %v2724 = vpop.f32.mrf.mxu0
      %v2725 = vadd.f32 %v2466, %v2724
      %v2726 = vpop.f32.mrf.mxu0
      %2727 = vmatprep.mubr.f32.mxu0 0.0
      %v2728 = vand.u32 %v1584, 4294901760
      %2729 = vmatmul.mubr.f32.gmra.mxu0 %v2728
      %v2730 = vpop.f32.mrf.mxu0
      %v2731 = vadd.f32 %v2474, %v2730
      %v2732 = vpop.f32.mrf.mxu0
      %2733 = vmatprep.mubr.f32.mxu0 0.0
      %v2734 = vand.u32 %v1585, 4294901760
      %2735 = vmatmul.mubr.f32.gmra.mxu0 %v2734
      %v2736 = vpop.f32.mrf.mxu0
      %v2737 = vadd.f32 %v2482, %v2736
      %v2738 = vpop.f32.mrf.mxu0
      %2739 = vmatprep.mubr.f32.mxu0 0.0
      %v2740 = vand.u32 %v1586, 4294901760
      %2741 = vmatmul.mubr.f32.gmra.mxu0 %v2740
      %v2742 = vpop.f32.mrf.mxu0
      %v2743 = vadd.f32 %v2490, %v2742
      %v2744 = vpop.f32.mrf.mxu0
      %2745 = vmatprep.mubr.f32.mxu0 0.0
      %v2746 = vand.u32 %v1587, 4294901760
      %2747 = vmatmul.mubr.f32.gmra.mxu0 %v2746
      %v2748 = vpop.f32.mrf.mxu0
      %v2749 = vadd.f32 %v2498, %v2748
      %v2750 = vpop.f32.mrf.mxu0
      %2751 = vmatprep.mubr.f32.mxu0 0.0
      %v2752 = vand.u32 %v1588, 4294901760
      %2753 = vmatmul.mubr.f32.gmra.mxu0 %v2752
      %v2754 = vpop.f32.mrf.mxu0
      %v2755 = vadd.f32 %v2506, %v2754
      %v2756 = vpop.f32.mrf.mxu0
      %2757 = vmatprep.mubr.f32.mxu0 0.0
      %v2758 = vand.u32 %v1589, 4294901760
      %2759 = vmatmul.mubr.f32.gmra.mxu0 %v2758
      %v2760 = vpop.f32.mrf.mxu0
      %v2761 = vadd.f32 %v2514, %v2760
      %v2762 = vpop.f32.mrf.mxu0
      %2763 = vmatprep.mubr.f32.mxu0 0.0
      %v2764 = vand.u32 %v1590, 4294901760
      %2765 = vmatmul.mubr.f32.gmra.mxu0 %v2764
      %v2766 = vpop.f32.mrf.mxu0
      %v2767 = vadd.f32 %v2522, %v2766
      %v2768 = vpop.f32.mrf.mxu0
      %2769 = vmatprep.mubr.f32.mxu0 0.0
      %v2770 = vand.u32 %v1591, 4294901760
      %2771 = vmatmul.mubr.f32.gmra.mxu0 %v2770
      %v2772 = vpop.f32.mrf.mxu0
      %v2773 = vadd.f32 %v2530, %v2772
      %v2774 = vpop.f32.mrf.mxu0
      %2775 = vmatprep.mubr.f32.mxu0 0.0
      %v2776 = vand.u32 %v1592, 4294901760
      %2777 = vmatmul.mubr.f32.gmra.mxu0 %v2776
      %v2778 = vpop.f32.mrf.mxu0
      %v2779 = vadd.f32 %v2538, %v2778
      %v2780 = vpop.f32.mrf.mxu0
      %2781 = vmatprep.mubr.f32.mxu0 0.0
      %v2782 = vand.u32 %v1593, 4294901760
      %2783 = vmatmul.mubr.f32.gmra.mxu0 %v2782
      %v2784 = vpop.f32.mrf.mxu0
      %v2785 = vadd.f32 %v2546, %v2784
      %v2786 = vpop.f32.mrf.mxu0
      %2787 = vmatprep.mubr.f32.mxu0 0.0
      %v2788 = vand.u32 %v1594, 4294901760
      %2789 = vmatmul.mubr.f32.gmra.mxu0 %v2788
      %v2790 = vpop.f32.mrf.mxu0
      %v2791 = vadd.f32 %v2554, %v2790
      %v2792 = vpop.f32.mrf.mxu0
      %2793 = vmatprep.mubr.f32.mxu0 0.0
      %v2794 = vand.u32 %v1595, 4294901760
      %2795 = vmatmul.mubr.f32.gmra.mxu0 %v2794
      %v2796 = vpop.f32.mrf.mxu0
      %v2797 = vadd.f32 %v2562, %v2796
      %v2798 = vpop.f32.mrf.mxu0
      %2799 = vmatprep.mubr.f32.mxu0 0.0
      %v2800 = vand.u32 %v1596, 4294901760
      %2801 = vmatmul.mubr.f32.gmra.mxu0 %v2800
      %v2802 = vpop.f32.mrf.mxu0
      %v2803 = vadd.f32 %v2570, %v2802
      %v2804 = vpop.f32.mrf.mxu0
      %2805 = vmatprep.mubr.f32.mxu0 0.0
      %v2806 = vand.u32 %v1597, 4294901760
      %2807 = vmatmul.mubr.f32.gmra.mxu0 %v2806
      %v2808 = vpop.f32.mrf.mxu0
      %v2809 = vadd.f32 %v2578, %v2808
      %v2810 = vpop.f32.mrf.mxu0
      %2811 = vmatprep.mubr.f32.mxu0 0.0
      %v2812 = vand.u32 %v1598, 4294901760
      %2813 = vmatmul.mubr.f32.gmra.mxu0 %v2812
      %v2814 = vpop.f32.mrf.mxu0
      %v2815 = vadd.f32 %v2586, %v2814
      %v2816 = vpop.f32.mrf.mxu0
      %2817 = vmatprep.mubr.f32.mxu0 0.0
      %v2818 = vand.u32 %v1599, 4294901760
      %2819 = vmatmul.mubr.f32.gmra.mxu0 %v2818
      %v2820 = vpop.f32.mrf.mxu0
      %v2821 = vadd.f32 %v2594, %v2820
      %v2822 = vpop.f32.mrf.mxu0
      %2823 = vdwg.mxu0
      %2824 = vmatprep.subr.mxu0 0.0
      %v2825 = vand.u32 %v264, 4294901760
      %2826 = vmatpush1.msra.mxu0 %v2825
      %2827 = vmatprep.subr.mxu0 0.0
      %v2828 = vand.u32 %v263, 4294901760
      %2829 = vmatpush1.msra.mxu0 %v2828
      %2830 = vmatprep.subr.mxu0 0.0
      %v2831 = vand.u32 %v262, 4294901760
      %2832 = vmatpush1.msra.mxu0 %v2831
      %2833 = vmatprep.subr.mxu0 0.0
      %v2834 = vand.u32 %v261, 4294901760
      %2835 = vmatpush1.msra.mxu0 %v2834
      %2836 = vmatprep.subr.mxu0 0.0
      %v2837 = vand.u32 %v260, 4294901760
      %2838 = vmatpush1.msra.mxu0 %v2837
      %2839 = vmatprep.subr.mxu0 0.0
      %v2840 = vand.u32 %v259, 4294901760
      %2841 = vmatpush1.msra.mxu0 %v2840
      %2842 = vmatprep.subr.mxu0 0.0
      %v2843 = vand.u32 %v258, 4294901760
      %2844 = vmatpush1.msra.mxu0 %v2843
      %2845 = vmatprep.subr.mxu0 0.0
      %v2846 = vand.u32 %v257, 4294901760
      %2847 = vmatpush1.msra.mxu0 %v2846
      %2848 = vmatprep.subr.mxu0 0.0
      %v2849 = vand.u32 %v256, 4294901760
      %2850 = vmatpush1.msra.mxu0 %v2849
      %2851 = vmatprep.subr.mxu0 0.0
      %v2852 = vand.u32 %v255, 4294901760
      %2853 = vmatpush1.msra.mxu0 %v2852
      %2854 = vmatprep.subr.mxu0 0.0
      %v2855 = vand.u32 %v254, 4294901760
      %2856 = vmatpush1.msra.mxu0 %v2855
      %2857 = vmatprep.subr.mxu0 0.0
      %v2858 = vand.u32 %v253, 4294901760
      %2859 = vmatpush1.msra.mxu0 %v2858
      %2860 = vmatprep.subr.mxu0 0.0
      %v2861 = vand.u32 %v252, 4294901760
      %2862 = vmatpush1.msra.mxu0 %v2861
      %2863 = vmatprep.subr.mxu0 0.0
      %v2864 = vand.u32 %v251, 4294901760
      %2865 = vmatpush1.msra.mxu0 %v2864
      %2866 = vmatprep.subr.mxu0 0.0
      %v2867 = vand.u32 %v250, 4294901760
      %2868 = vmatpush1.msra.mxu0 %v2867
      %2869 = vmatprep.subr.mxu0 0.0
      %v2870 = vand.u32 %v249, 4294901760
      %2871 = vmatpush1.msra.mxu0 %v2870
      %2872 = vmatprep.subr.mxu0 0.0
      %2873 = vmatpush2.msra.mxu0 0.0
      %2874 = vmatprep.subr.mxu0 0.0
      %2875 = vmatpush2.msra.mxu0 0.0
      %2876 = vmatprep.subr.mxu0 0.0
      %2877 = vmatpush2.msra.mxu0 0.0
      %2878 = vmatprep.subr.mxu0 0.0
      %2879 = vmatpush2.msra.mxu0 0.0
      %2880 = vmatprep.subr.mxu0 0.0
      %2881 = vmatpush2.msra.mxu0 0.0
      %2882 = vmatprep.subr.mxu0 0.0
      %2883 = vmatpush2.msra.mxu0 0.0
      %2884 = vmatprep.subr.mxu0 0.0
      %2885 = vmatpush2.msra.mxu0 0.0
      %2886 = vmatprep.subr.mxu0 0.0
      %2887 = vmatpush2.msra.mxu0 0.0
      %2888 = vmatprep.subr.mxu0 0.0
      %2889 = vmatpush2.msra.mxu0 0.0
      %2890 = vmatprep.subr.mxu0 0.0
      %2891 = vmatpush2.msra.mxu0 0.0
      %2892 = vmatprep.subr.mxu0 0.0
      %2893 = vmatpush2.msra.mxu0 0.0
      %2894 = vmatprep.subr.mxu0 0.0
      %2895 = vmatpush2.msra.mxu0 0.0
      %2896 = vmatprep.subr.mxu0 0.0
      %2897 = vmatpush2.msra.mxu0 0.0
      %2898 = vmatprep.subr.mxu0 0.0
      %2899 = vmatpush2.msra.mxu0 0.0
      %2900 = vmatprep.subr.mxu0 0.0
      %2901 = vmatpush2.msra.mxu0 0.0
      %2902 = vmatprep.subr.mxu0 0.0
      %2903 = vmatpush2.msra.mxu0 0.0
      %2904 = vmatprep.mubr.f32.mxu0 0.0
      %v2905 = vand.u32 %v1581, 4294901760
      %2906 = vmatmul.mubr.f32.gmra.mxu0 %v2905
      %v2907 = vpop.f32.mrf.mxu0
      %v2908 = vadd.f32 %v2713, %v2907
      %v2909 = vpop.f32.mrf.mxu0
      %2910 = vmatprep.mubr.f32.mxu0 0.0
      %v2911 = vand.u32 %v1582, 4294901760
      %2912 = vmatmul.mubr.f32.gmra.mxu0 %v2911
      %v2913 = vpop.f32.mrf.mxu0
      %v2914 = vadd.f32 %v2719, %v2913
      %v2915 = vpop.f32.mrf.mxu0
      %2916 = vmatprep.mubr.f32.mxu0 0.0
      %v2917 = vand.u32 %v1583, 4294901760
      %2918 = vmatmul.mubr.f32.gmra.mxu0 %v2917
      %v2919 = vpop.f32.mrf.mxu0
      %v2920 = vadd.f32 %v2725, %v2919
      %v2921 = vpop.f32.mrf.mxu0
      %2922 = vmatprep.mubr.f32.mxu0 0.0
      %v2923 = vand.u32 %v1584, 4294901760
      %2924 = vmatmul.mubr.f32.gmra.mxu0 %v2923
      %v2925 = vpop.f32.mrf.mxu0
      %v2926 = vadd.f32 %v2731, %v2925
      %v2927 = vpop.f32.mrf.mxu0
      %2928 = vmatprep.mubr.f32.mxu0 0.0
      %v2929 = vand.u32 %v1585, 4294901760
      %2930 = vmatmul.mubr.f32.gmra.mxu0 %v2929
      %v2931 = vpop.f32.mrf.mxu0
      %v2932 = vadd.f32 %v2737, %v2931
      %v2933 = vpop.f32.mrf.mxu0
      %2934 = vmatprep.mubr.f32.mxu0 0.0
      %v2935 = vand.u32 %v1586, 4294901760
      %2936 = vmatmul.mubr.f32.gmra.mxu0 %v2935
      %v2937 = vpop.f32.mrf.mxu0
      %v2938 = vadd.f32 %v2743, %v2937
      %v2939 = vpop.f32.mrf.mxu0
      %2940 = vmatprep.mubr.f32.mxu0 0.0
      %v2941 = vand.u32 %v1587, 4294901760
      %2942 = vmatmul.mubr.f32.gmra.mxu0 %v2941
      %v2943 = vpop.f32.mrf.mxu0
      %v2944 = vadd.f32 %v2749, %v2943
      %v2945 = vpop.f32.mrf.mxu0
      %2946 = vmatprep.mubr.f32.mxu0 0.0
      %v2947 = vand.u32 %v1588, 4294901760
      %2948 = vmatmul.mubr.f32.gmra.mxu0 %v2947
      %v2949 = vpop.f32.mrf.mxu0
      %v2950 = vadd.f32 %v2755, %v2949
      %v2951 = vpop.f32.mrf.mxu0
      %2952 = vmatprep.mubr.f32.mxu0 0.0
      %v2953 = vand.u32 %v1589, 4294901760
      %2954 = vmatmul.mubr.f32.gmra.mxu0 %v2953
      %v2955 = vpop.f32.mrf.mxu0
      %v2956 = vadd.f32 %v2761, %v2955
      %v2957 = vpop.f32.mrf.mxu0
      %2958 = vmatprep.mubr.f32.mxu0 0.0
      %v2959 = vand.u32 %v1590, 4294901760
      %2960 = vmatmul.mubr.f32.gmra.mxu0 %v2959
      %v2961 = vpop.f32.mrf.mxu0
      %v2962 = vadd.f32 %v2767, %v2961
      %v2963 = vpop.f32.mrf.mxu0
      %2964 = vmatprep.mubr.f32.mxu0 0.0
      %v2965 = vand.u32 %v1591, 4294901760
      %2966 = vmatmul.mubr.f32.gmra.mxu0 %v2965
      %v2967 = vpop.f32.mrf.mxu0
      %v2968 = vadd.f32 %v2773, %v2967
      %v2969 = vpop.f32.mrf.mxu0
      %2970 = vmatprep.mubr.f32.mxu0 0.0
      %v2971 = vand.u32 %v1592, 4294901760
      %2972 = vmatmul.mubr.f32.gmra.mxu0 %v2971
      %v2973 = vpop.f32.mrf.mxu0
      %v2974 = vadd.f32 %v2779, %v2973
      %v2975 = vpop.f32.mrf.mxu0
      %2976 = vmatprep.mubr.f32.mxu0 0.0
      %v2977 = vand.u32 %v1593, 4294901760
      %2978 = vmatmul.mubr.f32.gmra.mxu0 %v2977
      %v2979 = vpop.f32.mrf.mxu0
      %v2980 = vadd.f32 %v2785, %v2979
      %v2981 = vpop.f32.mrf.mxu0
      %2982 = vmatprep.mubr.f32.mxu0 0.0
      %v2983 = vand.u32 %v1594, 4294901760
      %2984 = vmatmul.mubr.f32.gmra.mxu0 %v2983
      %v2985 = vpop.f32.mrf.mxu0
      %v2986 = vadd.f32 %v2791, %v2985
      %v2987 = vpop.f32.mrf.mxu0
      %2988 = vmatprep.mubr.f32.mxu0 0.0
      %v2989 = vand.u32 %v1595, 4294901760
      %2990 = vmatmul.mubr.f32.gmra.mxu0 %v2989
      %v2991 = vpop.f32.mrf.mxu0
      %v2992 = vadd.f32 %v2797, %v2991
      %v2993 = vpop.f32.mrf.mxu0
      %2994 = vmatprep.mubr.f32.mxu0 0.0
      %v2995 = vand.u32 %v1596, 4294901760
      %2996 = vmatmul.mubr.f32.gmra.mxu0 %v2995
      %v2997 = vpop.f32.mrf.mxu0
      %v2998 = vadd.f32 %v2803, %v2997
      %v2999 = vpop.f32.mrf.mxu0
      %3000 = vmatprep.mubr.f32.mxu0 0.0
      %v3001 = vand.u32 %v1597, 4294901760
      %3002 = vmatmul.mubr.f32.gmra.mxu0 %v3001
      %v3003 = vpop.f32.mrf.mxu0
      %v3004 = vadd.f32 %v2809, %v3003
      %v3005 = vpop.f32.mrf.mxu0
      %3006 = vmatprep.mubr.f32.mxu0 0.0
      %v3007 = vand.u32 %v1598, 4294901760
      %3008 = vmatmul.mubr.f32.gmra.mxu0 %v3007
      %v3009 = vpop.f32.mrf.mxu0
      %v3010 = vadd.f32 %v2815, %v3009
      %v3011 = vpop.f32.mrf.mxu0
      %3012 = vmatprep.mubr.f32.mxu0 0.0
      %v3013 = vand.u32 %v1599, 4294901760
      %3014 = vmatmul.mubr.f32.gmra.mxu0 %v3013
      %v3015 = vpop.f32.mrf.mxu0
      %v3016 = vadd.f32 %v2821, %v3015
      %v3017 = vpop.f32.mrf.mxu0
      %3018 = vdwg.mxu0
      %v3019 = vmax.f32 %v2908, 0.0
      %v3020 = vmax.f32 %v2914, 0.0
      %v3021 = vmax.f32 %v2920, 0.0
      %v3022 = vmax.f32 %v2926, 0.0
      %v3023 = vmax.f32 %v2932, 0.0
      %v3024 = vmax.f32 %v2938, 0.0
      %v3025 = vmax.f32 %v2944, 0.0
      %v3026 = vmax.f32 %v2950, 0.0
      %v3027 = vmax.f32 %v2956, 0.0
      %v3028 = vmax.f32 %v2962, 0.0
      %v3029 = vmax.f32 %v2968, 0.0
      %v3030 = vmax.f32 %v2974, 0.0
      %v3031 = vmax.f32 %v2980, 0.0
      %v3032 = vmax.f32 %v2986, 0.0
      %v3033 = vmax.f32 %v2992, 0.0
      %v3034 = vmax.f32 %v2998, 0.0
      %v3035 = vmax.f32 %v3004, 0.0
      %v3036 = vmax.f32 %v3010, 0.0
      %v3037 = vmax.f32 %v3016, 0.0
      %v3038 = vlaneseq
      %v3039 = vshrl.u32 %v3038, 7
      %v3040 = vsub.s32 2, %v3039
      %v3041 = vrot.slane %v281, %v3040
      %3042 = vmatprep.subr.mxu0 0.0
      %v3043 = vand.u32 %v280, 4294901760
      %3044 = vmatpush1.msra.mxu0 %v3043
      %3045 = vmatprep.subr.mxu0 0.0
      %v3046 = vand.u32 %v279, 4294901760
      %3047 = vmatpush1.msra.mxu0 %v3046
      %3048 = vmatprep.subr.mxu0 0.0
      %v3049 = vand.u32 %v278, 4294901760
      %3050 = vmatpush1.msra.mxu0 %v3049
      %3051 = vmatprep.subr.mxu0 0.0
      %v3052 = vand.u32 %v277, 4294901760
      %3053 = vmatpush1.msra.mxu0 %v3052
      %3054 = vmatprep.subr.mxu0 0.0
      %v3055 = vand.u32 %v276, 4294901760
      %3056 = vmatpush1.msra.mxu0 %v3055
      %3057 = vmatprep.subr.mxu0 0.0
      %v3058 = vand.u32 %v275, 4294901760
      %3059 = vmatpush1.msra.mxu0 %v3058
      %3060 = vmatprep.subr.mxu0 0.0
      %v3061 = vand.u32 %v274, 4294901760
      %3062 = vmatpush1.msra.mxu0 %v3061
      %3063 = vmatprep.subr.mxu0 0.0
      %v3064 = vand.u32 %v273, 4294901760
      %3065 = vmatpush1.msra.mxu0 %v3064
      %3066 = vmatprep.subr.mxu0 0.0
      %v3067 = vand.u32 %v272, 4294901760
      %3068 = vmatpush1.msra.mxu0 %v3067
      %3069 = vmatprep.subr.mxu0 0.0
      %v3070 = vand.u32 %v271, 4294901760
      %3071 = vmatpush1.msra.mxu0 %v3070
      %3072 = vmatprep.subr.mxu0 0.0
      %v3073 = vand.u32 %v270, 4294901760
      %3074 = vmatpush1.msra.mxu0 %v3073
      %3075 = vmatprep.subr.mxu0 0.0
      %v3076 = vand.u32 %v269, 4294901760
      %3077 = vmatpush1.msra.mxu0 %v3076
      %3078 = vmatprep.subr.mxu0 0.0
      %v3079 = vand.u32 %v268, 4294901760
      %3080 = vmatpush1.msra.mxu0 %v3079
      %3081 = vmatprep.subr.mxu0 0.0
      %v3082 = vand.u32 %v267, 4294901760
      %3083 = vmatpush1.msra.mxu0 %v3082
      %3084 = vmatprep.subr.mxu0 0.0
      %v3085 = vand.u32 %v266, 4294901760
      %3086 = vmatpush1.msra.mxu0 %v3085
      %3087 = vmatprep.subr.mxu0 0.0
      %v3088 = vand.u32 %v265, 4294901760
      %3089 = vmatpush1.msra.mxu0 %v3088
      %3090 = vmatprep.subr.mxu0 0.0
      %3091 = vmatpush2.msra.mxu0 0.0
      %3092 = vmatprep.subr.mxu0 0.0
      %3093 = vmatpush2.msra.mxu0 0.0
      %3094 = vmatprep.subr.mxu0 0.0
      %3095 = vmatpush2.msra.mxu0 0.0
      %3096 = vmatprep.subr.mxu0 0.0
      %3097 = vmatpush2.msra.mxu0 0.0
      %3098 = vmatprep.subr.mxu0 0.0
      %3099 = vmatpush2.msra.mxu0 0.0
      %3100 = vmatprep.subr.mxu0 0.0
      %3101 = vmatpush2.msra.mxu0 0.0
      %3102 = vmatprep.subr.mxu0 0.0
      %3103 = vmatpush2.msra.mxu0 0.0
      %3104 = vmatprep.subr.mxu0 0.0
      %3105 = vmatpush2.msra.mxu0 0.0
      %3106 = vmatprep.subr.mxu0 0.0
      %3107 = vmatpush2.msra.mxu0 0.0
      %3108 = vmatprep.subr.mxu0 0.0
      %3109 = vmatpush2.msra.mxu0 0.0
      %3110 = vmatprep.subr.mxu0 0.0
      %3111 = vmatpush2.msra.mxu0 0.0
      %3112 = vmatprep.subr.mxu0 0.0
      %3113 = vmatpush2.msra.mxu0 0.0
      %3114 = vmatprep.subr.mxu0 0.0
      %3115 = vmatpush2.msra.mxu0 0.0
      %3116 = vmatprep.subr.mxu0 0.0
      %3117 = vmatpush2.msra.mxu0 0.0
      %3118 = vmatprep.subr.mxu0 0.0
      %3119 = vmatpush2.msra.mxu0 0.0
      %3120 = vmatprep.subr.mxu0 0.0
      %3121 = vmatpush2.msra.mxu0 0.0
      %3122 = vmatprep.mubr.f32.mxu0 0.0
      %v3123 = vand.u32 %v3019, 4294901760
      %v3124 = vsub.f32 %v3019, %v3123
      %v3125 = vand.u32 %v3124, 4294901760
      %v3126 = vsub.f32 %v3124, %v3125
      %v3127 = vand.u32 %v3126, 4294901760
      %3128 = vmatmul.mubr.f32.gmra.mxu0 %v3127
      %v3129 = vpop.f32.mrf.mxu0
      %v3130 = vadd.f32 %v3041, %v3129
      %v3131 = vpop.f32.mrf.mxu0
      %3132 = vmatprep.mubr.f32.mxu0 0.0
      %v3133 = vand.u32 %v3020, 4294901760
      %v3134 = vsub.f32 %v3020, %v3133
      %v3135 = vand.u32 %v3134, 4294901760
      %v3136 = vsub.f32 %v3134, %v3135
      %v3137 = vand.u32 %v3136, 4294901760
      %3138 = vmatmul.mubr.f32.gmra.mxu0 %v3137
      %v3139 = vpop.f32.mrf.mxu0
      %v3140 = vadd.f32 %v3041, %v3139
      %v3141 = vpop.f32.mrf.mxu0
      %3142 = vmatprep.mubr.f32.mxu0 0.0
      %v3143 = vand.u32 %v3021, 4294901760
      %v3144 = vsub.f32 %v3021, %v3143
      %v3145 = vand.u32 %v3144, 4294901760
      %v3146 = vsub.f32 %v3144, %v3145
      %v3147 = vand.u32 %v3146, 4294901760
      %3148 = vmatmul.mubr.f32.gmra.mxu0 %v3147
      %v3149 = vpop.f32.mrf.mxu0
      %v3150 = vadd.f32 %v3041, %v3149
      %v3151 = vpop.f32.mrf.mxu0
      %3152 = vmatprep.mubr.f32.mxu0 0.0
      %v3153 = vand.u32 %v3022, 4294901760
      %v3154 = vsub.f32 %v3022, %v3153
      %v3155 = vand.u32 %v3154, 4294901760
      %v3156 = vsub.f32 %v3154, %v3155
      %v3157 = vand.u32 %v3156, 4294901760
      %3158 = vmatmul.mubr.f32.gmra.mxu0 %v3157
      %v3159 = vpop.f32.mrf.mxu0
      %v3160 = vadd.f32 %v3041, %v3159
      %v3161 = vpop.f32.mrf.mxu0
      %3162 = vmatprep.mubr.f32.mxu0 0.0
      %v3163 = vand.u32 %v3023, 4294901760
      %v3164 = vsub.f32 %v3023, %v3163
      %v3165 = vand.u32 %v3164, 4294901760
      %v3166 = vsub.f32 %v3164, %v3165
      %v3167 = vand.u32 %v3166, 4294901760
      %3168 = vmatmul.mubr.f32.gmra.mxu0 %v3167
      %v3169 = vpop.f32.mrf.mxu0
      %v3170 = vadd.f32 %v3041, %v3169
      %v3171 = vpop.f32.mrf.mxu0
      %3172 = vmatprep.mubr.f32.mxu0 0.0
      %v3173 = vand.u32 %v3024, 4294901760
      %v3174 = vsub.f32 %v3024, %v3173
      %v3175 = vand.u32 %v3174, 4294901760
      %v3176 = vsub.f32 %v3174, %v3175
      %v3177 = vand.u32 %v3176, 4294901760
      %3178 = vmatmul.mubr.f32.gmra.mxu0 %v3177
      %v3179 = vpop.f32.mrf.mxu0
      %v3180 = vadd.f32 %v3041, %v3179
      %v3181 = vpop.f32.mrf.mxu0
      %3182 = vmatprep.mubr.f32.mxu0 0.0
      %v3183 = vand.u32 %v3025, 4294901760
      %v3184 = vsub.f32 %v3025, %v3183
      %v3185 = vand.u32 %v3184, 4294901760
      %v3186 = vsub.f32 %v3184, %v3185
      %v3187 = vand.u32 %v3186, 4294901760
      %3188 = vmatmul.mubr.f32.gmra.mxu0 %v3187
      %v3189 = vpop.f32.mrf.mxu0
      %v3190 = vadd.f32 %v3041, %v3189
      %v3191 = vpop.f32.mrf.mxu0
      %3192 = vmatprep.mubr.f32.mxu0 0.0
      %v3193 = vand.u32 %v3026, 4294901760
      %v3194 = vsub.f32 %v3026, %v3193
      %v3195 = vand.u32 %v3194, 4294901760
      %v3196 = vsub.f32 %v3194, %v3195
      %v3197 = vand.u32 %v3196, 4294901760
      %3198 = vmatmul.mubr.f32.gmra.mxu0 %v3197
      %v3199 = vpop.f32.mrf.mxu0
      %v3200 = vadd.f32 %v3041, %v3199
      %v3201 = vpop.f32.mrf.mxu0
      %3202 = vmatprep.mubr.f32.mxu0 0.0
      %v3203 = vand.u32 %v3027, 4294901760
      %v3204 = vsub.f32 %v3027, %v3203
      %v3205 = vand.u32 %v3204, 4294901760
      %v3206 = vsub.f32 %v3204, %v3205
      %v3207 = vand.u32 %v3206, 4294901760
      %3208 = vmatmul.mubr.f32.gmra.mxu0 %v3207
      %v3209 = vpop.f32.mrf.mxu0
      %v3210 = vadd.f32 %v3041, %v3209
      %v3211 = vpop.f32.mrf.mxu0
      %3212 = vmatprep.mubr.f32.mxu0 0.0
      %v3213 = vand.u32 %v3028, 4294901760
      %v3214 = vsub.f32 %v3028, %v3213
      %v3215 = vand.u32 %v3214, 4294901760
      %v3216 = vsub.f32 %v3214, %v3215
      %v3217 = vand.u32 %v3216, 4294901760
      %3218 = vmatmul.mubr.f32.gmra.mxu0 %v3217
      %v3219 = vpop.f32.mrf.mxu0
      %v3220 = vadd.f32 %v3041, %v3219
      %v3221 = vpop.f32.mrf.mxu0
      %3222 = vmatprep.mubr.f32.mxu0 0.0
      %v3223 = vand.u32 %v3029, 4294901760
      %v3224 = vsub.f32 %v3029, %v3223
      %v3225 = vand.u32 %v3224, 4294901760
      %v3226 = vsub.f32 %v3224, %v3225
      %v3227 = vand.u32 %v3226, 4294901760
      %3228 = vmatmul.mubr.f32.gmra.mxu0 %v3227
      %v3229 = vpop.f32.mrf.mxu0
      %v3230 = vadd.f32 %v3041, %v3229
      %v3231 = vpop.f32.mrf.mxu0
      %3232 = vmatprep.mubr.f32.mxu0 0.0
      %v3233 = vand.u32 %v3030, 4294901760
      %v3234 = vsub.f32 %v3030, %v3233
      %v3235 = vand.u32 %v3234, 4294901760
      %v3236 = vsub.f32 %v3234, %v3235
      %v3237 = vand.u32 %v3236, 4294901760
      %3238 = vmatmul.mubr.f32.gmra.mxu0 %v3237
      %v3239 = vpop.f32.mrf.mxu0
      %v3240 = vadd.f32 %v3041, %v3239
      %v3241 = vpop.f32.mrf.mxu0
      %3242 = vmatprep.mubr.f32.mxu0 0.0
      %v3243 = vand.u32 %v3031, 4294901760
      %v3244 = vsub.f32 %v3031, %v3243
      %v3245 = vand.u32 %v3244, 4294901760
      %v3246 = vsub.f32 %v3244, %v3245
      %v3247 = vand.u32 %v3246, 4294901760
      %3248 = vmatmul.mubr.f32.gmra.mxu0 %v3247
      %v3249 = vpop.f32.mrf.mxu0
      %v3250 = vadd.f32 %v3041, %v3249
      %v3251 = vpop.f32.mrf.mxu0
      %3252 = vmatprep.mubr.f32.mxu0 0.0
      %v3253 = vand.u32 %v3032, 4294901760
      %v3254 = vsub.f32 %v3032, %v3253
      %v3255 = vand.u32 %v3254, 4294901760
      %v3256 = vsub.f32 %v3254, %v3255
      %v3257 = vand.u32 %v3256, 4294901760
      %3258 = vmatmul.mubr.f32.gmra.mxu0 %v3257
      %v3259 = vpop.f32.mrf.mxu0
      %v3260 = vadd.f32 %v3041, %v3259
      %v3261 = vpop.f32.mrf.mxu0
      %3262 = vmatprep.mubr.f32.mxu0 0.0
      %v3263 = vand.u32 %v3033, 4294901760
      %v3264 = vsub.f32 %v3033, %v3263
      %v3265 = vand.u32 %v3264, 4294901760
      %v3266 = vsub.f32 %v3264, %v3265
      %v3267 = vand.u32 %v3266, 4294901760
      %3268 = vmatmul.mubr.f32.gmra.mxu0 %v3267
      %v3269 = vpop.f32.mrf.mxu0
      %v3270 = vadd.f32 %v3041, %v3269
      %v3271 = vpop.f32.mrf.mxu0
      %3272 = vmatprep.mubr.f32.mxu0 0.0
      %v3273 = vand.u32 %v3034, 4294901760
      %v3274 = vsub.f32 %v3034, %v3273
      %v3275 = vand.u32 %v3274, 4294901760
      %v3276 = vsub.f32 %v3274, %v3275
      %v3277 = vand.u32 %v3276, 4294901760
      %3278 = vmatmul.mubr.f32.gmra.mxu0 %v3277
      %v3279 = vpop.f32.mrf.mxu0
      %v3280 = vadd.f32 %v3041, %v3279
      %v3281 = vpop.f32.mrf.mxu0
      %3282 = vmatprep.mubr.f32.mxu0 0.0
      %v3283 = vand.u32 %v3035, 4294901760
      %v3284 = vsub.f32 %v3035, %v3283
      %v3285 = vand.u32 %v3284, 4294901760
      %v3286 = vsub.f32 %v3284, %v3285
      %v3287 = vand.u32 %v3286, 4294901760
      %3288 = vmatmul.mubr.f32.gmra.mxu0 %v3287
      %v3289 = vpop.f32.mrf.mxu0
      %v3290 = vadd.f32 %v3041, %v3289
      %v3291 = vpop.f32.mrf.mxu0
      %3292 = vmatprep.mubr.f32.mxu0 0.0
      %v3293 = vand.u32 %v3036, 4294901760
      %v3294 = vsub.f32 %v3036, %v3293
      %v3295 = vand.u32 %v3294, 4294901760
      %v3296 = vsub.f32 %v3294, %v3295
      %v3297 = vand.u32 %v3296, 4294901760
      %3298 = vmatmul.mubr.f32.gmra.mxu0 %v3297
      %v3299 = vpop.f32.mrf.mxu0
      %v3300 = vadd.f32 %v3041, %v3299
      %v3301 = vpop.f32.mrf.mxu0
      %3302 = vmatprep.mubr.f32.mxu0 0.0
      %v3303 = vand.u32 %v3037, 4294901760
      %v3304 = vsub.f32 %v3037, %v3303
      %v3305 = vand.u32 %v3304, 4294901760
      %v3306 = vsub.f32 %v3304, %v3305
      %v3307 = vand.u32 %v3306, 4294901760
      %3308 = vmatmul.mubr.f32.gmra.mxu0 %v3307
      %v3309 = vpop.f32.mrf.mxu0
      %v3310 = vadd.f32 %v3041, %v3309
      %v3311 = vpop.f32.mrf.mxu0
      %3312 = vdwg.mxu0
      %3313 = vmatprep.subr.mxu0 0.0
      %v3314 = vand.u32 %v280, 4294901760
      %v3315 = vsub.f32 %v280, %v3314
      %v3316 = vand.u32 %v3315, 4294901760
      %v3317 = vsub.f32 %v3315, %v3316
      %v3318 = vand.u32 %v3317, 4294901760
      %3319 = vmatpush1.msra.mxu0 %v3318
      %3320 = vmatprep.subr.mxu0 0.0
      %v3321 = vand.u32 %v279, 4294901760
      %v3322 = vsub.f32 %v279, %v3321
      %v3323 = vand.u32 %v3322, 4294901760
      %v3324 = vsub.f32 %v3322, %v3323
      %v3325 = vand.u32 %v3324, 4294901760
      %3326 = vmatpush1.msra.mxu0 %v3325
      %3327 = vmatprep.subr.mxu0 0.0
      %v3328 = vand.u32 %v278, 4294901760
      %v3329 = vsub.f32 %v278, %v3328
      %v3330 = vand.u32 %v3329, 4294901760
      %v3331 = vsub.f32 %v3329, %v3330
      %v3332 = vand.u32 %v3331, 4294901760
      %3333 = vmatpush1.msra.mxu0 %v3332
      %3334 = vmatprep.subr.mxu0 0.0
      %v3335 = vand.u32 %v277, 4294901760
      %v3336 = vsub.f32 %v277, %v3335
      %v3337 = vand.u32 %v3336, 4294901760
      %v3338 = vsub.f32 %v3336, %v3337
      %v3339 = vand.u32 %v3338, 4294901760
      %3340 = vmatpush1.msra.mxu0 %v3339
      %3341 = vmatprep.subr.mxu0 0.0
      %v3342 = vand.u32 %v276, 4294901760
      %v3343 = vsub.f32 %v276, %v3342
      %v3344 = vand.u32 %v3343, 4294901760
      %v3345 = vsub.f32 %v3343, %v3344
      %v3346 = vand.u32 %v3345, 4294901760
      %3347 = vmatpush1.msra.mxu0 %v3346
      %3348 = vmatprep.subr.mxu0 0.0
      %v3349 = vand.u32 %v275, 4294901760
      %v3350 = vsub.f32 %v275, %v3349
      %v3351 = vand.u32 %v3350, 4294901760
      %v3352 = vsub.f32 %v3350, %v3351
      %v3353 = vand.u32 %v3352, 4294901760
      %3354 = vmatpush1.msra.mxu0 %v3353
      %3355 = vmatprep.subr.mxu0 0.0
      %v3356 = vand.u32 %v274, 4294901760
      %v3357 = vsub.f32 %v274, %v3356
      %v3358 = vand.u32 %v3357, 4294901760
      %v3359 = vsub.f32 %v3357, %v3358
      %v3360 = vand.u32 %v3359, 4294901760
      %3361 = vmatpush1.msra.mxu0 %v3360
      %3362 = vmatprep.subr.mxu0 0.0
      %v3363 = vand.u32 %v273, 4294901760
      %v3364 = vsub.f32 %v273, %v3363
      %v3365 = vand.u32 %v3364, 4294901760
      %v3366 = vsub.f32 %v3364, %v3365
      %v3367 = vand.u32 %v3366, 4294901760
      %3368 = vmatpush1.msra.mxu0 %v3367
      %3369 = vmatprep.subr.mxu0 0.0
      %v3370 = vand.u32 %v272, 4294901760
      %v3371 = vsub.f32 %v272, %v3370
      %v3372 = vand.u32 %v3371, 4294901760
      %v3373 = vsub.f32 %v3371, %v3372
      %v3374 = vand.u32 %v3373, 4294901760
      %3375 = vmatpush1.msra.mxu0 %v3374
      %3376 = vmatprep.subr.mxu0 0.0
      %v3377 = vand.u32 %v271, 4294901760
      %v3378 = vsub.f32 %v271, %v3377
      %v3379 = vand.u32 %v3378, 4294901760
      %v3380 = vsub.f32 %v3378, %v3379
      %v3381 = vand.u32 %v3380, 4294901760
      %3382 = vmatpush1.msra.mxu0 %v3381
      %3383 = vmatprep.subr.mxu0 0.0
      %v3384 = vand.u32 %v270, 4294901760
      %v3385 = vsub.f32 %v270, %v3384
      %v3386 = vand.u32 %v3385, 4294901760
      %v3387 = vsub.f32 %v3385, %v3386
      %v3388 = vand.u32 %v3387, 4294901760
      %3389 = vmatpush1.msra.mxu0 %v3388
      %3390 = vmatprep.subr.mxu0 0.0
      %v3391 = vand.u32 %v269, 4294901760
      %v3392 = vsub.f32 %v269, %v3391
      %v3393 = vand.u32 %v3392, 4294901760
      %v3394 = vsub.f32 %v3392, %v3393
      %v3395 = vand.u32 %v3394, 4294901760
      %3396 = vmatpush1.msra.mxu0 %v3395
      %3397 = vmatprep.subr.mxu0 0.0
      %v3398 = vand.u32 %v268, 4294901760
      %v3399 = vsub.f32 %v268, %v3398
      %v3400 = vand.u32 %v3399, 4294901760
      %v3401 = vsub.f32 %v3399, %v3400
      %v3402 = vand.u32 %v3401, 4294901760
      %3403 = vmatpush1.msra.mxu0 %v3402
      %3404 = vmatprep.subr.mxu0 0.0
      %v3405 = vand.u32 %v267, 4294901760
      %v3406 = vsub.f32 %v267, %v3405
      %v3407 = vand.u32 %v3406, 4294901760
      %v3408 = vsub.f32 %v3406, %v3407
      %v3409 = vand.u32 %v3408, 4294901760
      %3410 = vmatpush1.msra.mxu0 %v3409
      %3411 = vmatprep.subr.mxu0 0.0
      %v3412 = vand.u32 %v266, 4294901760
      %v3413 = vsub.f32 %v266, %v3412
      %v3414 = vand.u32 %v3413, 4294901760
      %v3415 = vsub.f32 %v3413, %v3414
      %v3416 = vand.u32 %v3415, 4294901760
      %3417 = vmatpush1.msra.mxu0 %v3416
      %3418 = vmatprep.subr.mxu0 0.0
      %v3419 = vand.u32 %v265, 4294901760
      %v3420 = vsub.f32 %v265, %v3419
      %v3421 = vand.u32 %v3420, 4294901760
      %v3422 = vsub.f32 %v3420, %v3421
      %v3423 = vand.u32 %v3422, 4294901760
      %3424 = vmatpush1.msra.mxu0 %v3423
      %3425 = vmatprep.subr.mxu0 0.0
      %3426 = vmatpush2.msra.mxu0 0.0
      %3427 = vmatprep.subr.mxu0 0.0
      %3428 = vmatpush2.msra.mxu0 0.0
      %3429 = vmatprep.subr.mxu0 0.0
      %3430 = vmatpush2.msra.mxu0 0.0
      %3431 = vmatprep.subr.mxu0 0.0
      %3432 = vmatpush2.msra.mxu0 0.0
      %3433 = vmatprep.subr.mxu0 0.0
      %3434 = vmatpush2.msra.mxu0 0.0
      %3435 = vmatprep.subr.mxu0 0.0
      %3436 = vmatpush2.msra.mxu0 0.0
      %3437 = vmatprep.subr.mxu0 0.0
      %3438 = vmatpush2.msra.mxu0 0.0
      %3439 = vmatprep.subr.mxu0 0.0
      %3440 = vmatpush2.msra.mxu0 0.0
      %3441 = vmatprep.subr.mxu0 0.0
      %3442 = vmatpush2.msra.mxu0 0.0
      %3443 = vmatprep.subr.mxu0 0.0
      %3444 = vmatpush2.msra.mxu0 0.0
      %3445 = vmatprep.subr.mxu0 0.0
      %3446 = vmatpush2.msra.mxu0 0.0
      %3447 = vmatprep.subr.mxu0 0.0
      %3448 = vmatpush2.msra.mxu0 0.0
      %3449 = vmatprep.subr.mxu0 0.0
      %3450 = vmatpush2.msra.mxu0 0.0
      %3451 = vmatprep.subr.mxu0 0.0
      %3452 = vmatpush2.msra.mxu0 0.0
      %3453 = vmatprep.subr.mxu0 0.0
      %3454 = vmatpush2.msra.mxu0 0.0
      %3455 = vmatprep.subr.mxu0 0.0
      %3456 = vmatpush2.msra.mxu0 0.0
      %3457 = vmatprep.mubr.f32.mxu0 0.0
      %v3458 = vand.u32 %v3019, 4294901760
      %3459 = vmatmul.mubr.f32.gmra.mxu0 %v3458
      %v3460 = vpop.f32.mrf.mxu0
      %v3461 = vadd.f32 %v3130, %v3460
      %v3462 = vpop.f32.mrf.mxu0
      %3463 = vmatprep.mubr.f32.mxu0 0.0
      %v3464 = vand.u32 %v3020, 4294901760
      %3465 = vmatmul.mubr.f32.gmra.mxu0 %v3464
      %v3466 = vpop.f32.mrf.mxu0
      %v3467 = vadd.f32 %v3140, %v3466
      %v3468 = vpop.f32.mrf.mxu0
      %3469 = vmatprep.mubr.f32.mxu0 0.0
      %v3470 = vand.u32 %v3021, 4294901760
      %3471 = vmatmul.mubr.f32.gmra.mxu0 %v3470
      %v3472 = vpop.f32.mrf.mxu0
      %v3473 = vadd.f32 %v3150, %v3472
      %v3474 = vpop.f32.mrf.mxu0
      %3475 = vmatprep.mubr.f32.mxu0 0.0
      %v3476 = vand.u32 %v3022, 4294901760
      %3477 = vmatmul.mubr.f32.gmra.mxu0 %v3476
      %v3478 = vpop.f32.mrf.mxu0
      %v3479 = vadd.f32 %v3160, %v3478
      %v3480 = vpop.f32.mrf.mxu0
      %3481 = vmatprep.mubr.f32.mxu0 0.0
      %v3482 = vand.u32 %v3023, 4294901760
      %3483 = vmatmul.mubr.f32.gmra.mxu0 %v3482
      %v3484 = vpop.f32.mrf.mxu0
      %v3485 = vadd.f32 %v3170, %v3484
      %v3486 = vpop.f32.mrf.mxu0
      %3487 = vmatprep.mubr.f32.mxu0 0.0
      %v3488 = vand.u32 %v3024, 4294901760
      %3489 = vmatmul.mubr.f32.gmra.mxu0 %v3488
      %v3490 = vpop.f32.mrf.mxu0
      %v3491 = vadd.f32 %v3180, %v3490
      %v3492 = vpop.f32.mrf.mxu0
      %3493 = vmatprep.mubr.f32.mxu0 0.0
      %v3494 = vand.u32 %v3025, 4294901760
      %3495 = vmatmul.mubr.f32.gmra.mxu0 %v3494
      %v3496 = vpop.f32.mrf.mxu0
      %v3497 = vadd.f32 %v3190, %v3496
      %v3498 = vpop.f32.mrf.mxu0
      %3499 = vmatprep.mubr.f32.mxu0 0.0
      %v3500 = vand.u32 %v3026, 4294901760
      %3501 = vmatmul.mubr.f32.gmra.mxu0 %v3500
      %v3502 = vpop.f32.mrf.mxu0
      %v3503 = vadd.f32 %v3200, %v3502
      %v3504 = vpop.f32.mrf.mxu0
      %3505 = vmatprep.mubr.f32.mxu0 0.0
      %v3506 = vand.u32 %v3027, 4294901760
      %3507 = vmatmul.mubr.f32.gmra.mxu0 %v3506
      %v3508 = vpop.f32.mrf.mxu0
      %v3509 = vadd.f32 %v3210, %v3508
      %v3510 = vpop.f32.mrf.mxu0
      %3511 = vmatprep.mubr.f32.mxu0 0.0
      %v3512 = vand.u32 %v3028, 4294901760
      %3513 = vmatmul.mubr.f32.gmra.mxu0 %v3512
      %v3514 = vpop.f32.mrf.mxu0
      %v3515 = vadd.f32 %v3220, %v3514
      %v3516 = vpop.f32.mrf.mxu0
      %3517 = vmatprep.mubr.f32.mxu0 0.0
      %v3518 = vand.u32 %v3029, 4294901760
      %3519 = vmatmul.mubr.f32.gmra.mxu0 %v3518
      %v3520 = vpop.f32.mrf.mxu0
      %v3521 = vadd.f32 %v3230, %v3520
      %v3522 = vpop.f32.mrf.mxu0
      %3523 = vmatprep.mubr.f32.mxu0 0.0
      %v3524 = vand.u32 %v3030, 4294901760
      %3525 = vmatmul.mubr.f32.gmra.mxu0 %v3524
      %v3526 = vpop.f32.mrf.mxu0
      %v3527 = vadd.f32 %v3240, %v3526
      %v3528 = vpop.f32.mrf.mxu0
      %3529 = vmatprep.mubr.f32.mxu0 0.0
      %v3530 = vand.u32 %v3031, 4294901760
      %3531 = vmatmul.mubr.f32.gmra.mxu0 %v3530
      %v3532 = vpop.f32.mrf.mxu0
      %v3533 = vadd.f32 %v3250, %v3532
      %v3534 = vpop.f32.mrf.mxu0
      %3535 = vmatprep.mubr.f32.mxu0 0.0
      %v3536 = vand.u32 %v3032, 4294901760
      %3537 = vmatmul.mubr.f32.gmra.mxu0 %v3536
      %v3538 = vpop.f32.mrf.mxu0
      %v3539 = vadd.f32 %v3260, %v3538
      %v3540 = vpop.f32.mrf.mxu0
      %3541 = vmatprep.mubr.f32.mxu0 0.0
      %v3542 = vand.u32 %v3033, 4294901760
      %3543 = vmatmul.mubr.f32.gmra.mxu0 %v3542
      %v3544 = vpop.f32.mrf.mxu0
      %v3545 = vadd.f32 %v3270, %v3544
      %v3546 = vpop.f32.mrf.mxu0
      %3547 = vmatprep.mubr.f32.mxu0 0.0
      %v3548 = vand.u32 %v3034, 4294901760
      %3549 = vmatmul.mubr.f32.gmra.mxu0 %v3548
      %v3550 = vpop.f32.mrf.mxu0
      %v3551 = vadd.f32 %v3280, %v3550
      %v3552 = vpop.f32.mrf.mxu0
      %3553 = vmatprep.mubr.f32.mxu0 0.0
      %v3554 = vand.u32 %v3035, 4294901760
      %3555 = vmatmul.mubr.f32.gmra.mxu0 %v3554
      %v3556 = vpop.f32.mrf.mxu0
      %v3557 = vadd.f32 %v3290, %v3556
      %v3558 = vpop.f32.mrf.mxu0
      %3559 = vmatprep.mubr.f32.mxu0 0.0
      %v3560 = vand.u32 %v3036, 4294901760
      %3561 = vmatmul.mubr.f32.gmra.mxu0 %v3560
      %v3562 = vpop.f32.mrf.mxu0
      %v3563 = vadd.f32 %v3300, %v3562
      %v3564 = vpop.f32.mrf.mxu0
      %3565 = vmatprep.mubr.f32.mxu0 0.0
      %v3566 = vand.u32 %v3037, 4294901760
      %3567 = vmatmul.mubr.f32.gmra.mxu0 %v3566
      %v3568 = vpop.f32.mrf.mxu0
      %v3569 = vadd.f32 %v3310, %v3568
      %v3570 = vpop.f32.mrf.mxu0
      %3571 = vdwg.mxu0
      %3572 = vmatprep.subr.mxu0 0.0
      %v3573 = vand.u32 %v280, 4294901760
      %v3574 = vsub.f32 %v280, %v3573
      %3575 = vmatpush1.msra.mxu0 %v3574
      %3576 = vmatprep.subr.mxu0 0.0
      %v3577 = vand.u32 %v279, 4294901760
      %v3578 = vsub.f32 %v279, %v3577
      %3579 = vmatpush1.msra.mxu0 %v3578
      %3580 = vmatprep.subr.mxu0 0.0
      %v3581 = vand.u32 %v278, 4294901760
      %v3582 = vsub.f32 %v278, %v3581
      %3583 = vmatpush1.msra.mxu0 %v3582
      %3584 = vmatprep.subr.mxu0 0.0
      %v3585 = vand.u32 %v277, 4294901760
      %v3586 = vsub.f32 %v277, %v3585
      %3587 = vmatpush1.msra.mxu0 %v3586
      %3588 = vmatprep.subr.mxu0 0.0
      %v3589 = vand.u32 %v276, 4294901760
      %v3590 = vsub.f32 %v276, %v3589
      %3591 = vmatpush1.msra.mxu0 %v3590
      %3592 = vmatprep.subr.mxu0 0.0
      %v3593 = vand.u32 %v275, 4294901760
      %v3594 = vsub.f32 %v275, %v3593
      %3595 = vmatpush1.msra.mxu0 %v3594
      %3596 = vmatprep.subr.mxu0 0.0
      %v3597 = vand.u32 %v274, 4294901760
      %v3598 = vsub.f32 %v274, %v3597
      %3599 = vmatpush1.msra.mxu0 %v3598
      %3600 = vmatprep.subr.mxu0 0.0
      %v3601 = vand.u32 %v273, 4294901760
      %v3602 = vsub.f32 %v273, %v3601
      %3603 = vmatpush1.msra.mxu0 %v3602
      %3604 = vmatprep.subr.mxu0 0.0
      %v3605 = vand.u32 %v272, 4294901760
      %v3606 = vsub.f32 %v272, %v3605
      %3607 = vmatpush1.msra.mxu0 %v3606
      %3608 = vmatprep.subr.mxu0 0.0
      %v3609 = vand.u32 %v271, 4294901760
      %v3610 = vsub.f32 %v271, %v3609
      %3611 = vmatpush1.msra.mxu0 %v3610
      %3612 = vmatprep.subr.mxu0 0.0
      %v3613 = vand.u32 %v270, 4294901760
      %v3614 = vsub.f32 %v270, %v3613
      %3615 = vmatpush1.msra.mxu0 %v3614
      %3616 = vmatprep.subr.mxu0 0.0
      %v3617 = vand.u32 %v269, 4294901760
      %v3618 = vsub.f32 %v269, %v3617
      %3619 = vmatpush1.msra.mxu0 %v3618
      %3620 = vmatprep.subr.mxu0 0.0
      %v3621 = vand.u32 %v268, 4294901760
      %v3622 = vsub.f32 %v268, %v3621
      %3623 = vmatpush1.msra.mxu0 %v3622
      %3624 = vmatprep.subr.mxu0 0.0
      %v3625 = vand.u32 %v267, 4294901760
      %v3626 = vsub.f32 %v267, %v3625
      %3627 = vmatpush1.msra.mxu0 %v3626
      %3628 = vmatprep.subr.mxu0 0.0
      %v3629 = vand.u32 %v266, 4294901760
      %v3630 = vsub.f32 %v266, %v3629
      %3631 = vmatpush1.msra.mxu0 %v3630
      %3632 = vmatprep.subr.mxu0 0.0
      %v3633 = vand.u32 %v265, 4294901760
      %v3634 = vsub.f32 %v265, %v3633
      %3635 = vmatpush1.msra.mxu0 %v3634
      %3636 = vmatprep.subr.mxu0 0.0
      %3637 = vmatpush2.msra.mxu0 0.0
      %3638 = vmatprep.subr.mxu0 0.0
      %3639 = vmatpush2.msra.mxu0 0.0
      %3640 = vmatprep.subr.mxu0 0.0
      %3641 = vmatpush2.msra.mxu0 0.0
      %3642 = vmatprep.subr.mxu0 0.0
      %3643 = vmatpush2.msra.mxu0 0.0
      %3644 = vmatprep.subr.mxu0 0.0
      %3645 = vmatpush2.msra.mxu0 0.0
      %3646 = vmatprep.subr.mxu0 0.0
      %3647 = vmatpush2.msra.mxu0 0.0
      %3648 = vmatprep.subr.mxu0 0.0
      %3649 = vmatpush2.msra.mxu0 0.0
      %3650 = vmatprep.subr.mxu0 0.0
      %3651 = vmatpush2.msra.mxu0 0.0
      %3652 = vmatprep.subr.mxu0 0.0
      %3653 = vmatpush2.msra.mxu0 0.0
      %3654 = vmatprep.subr.mxu0 0.0
      %3655 = vmatpush2.msra.mxu0 0.0
      %3656 = vmatprep.subr.mxu0 0.0
      %3657 = vmatpush2.msra.mxu0 0.0
      %3658 = vmatprep.subr.mxu0 0.0
      %3659 = vmatpush2.msra.mxu0 0.0
      %3660 = vmatprep.subr.mxu0 0.0
      %3661 = vmatpush2.msra.mxu0 0.0
      %3662 = vmatprep.subr.mxu0 0.0
      %3663 = vmatpush2.msra.mxu0 0.0
      %3664 = vmatprep.subr.mxu0 0.0
      %3665 = vmatpush2.msra.mxu0 0.0
      %3666 = vmatprep.subr.mxu0 0.0
      %3667 = vmatpush2.msra.mxu0 0.0
      %3668 = vmatprep.mubr.f32.mxu0 0.0
      %v3669 = vand.u32 %v3019, 4294901760
      %v3670 = vsub.f32 %v3019, %v3669
      %3671 = vmatmul.mubr.f32.gmra.mxu0 %v3670
      %v3672 = vpop.f32.mrf.mxu0
      %v3673 = vadd.f32 %v3461, %v3672
      %v3674 = vpop.f32.mrf.mxu0
      %3675 = vmatprep.mubr.f32.mxu0 0.0
      %v3676 = vand.u32 %v3020, 4294901760
      %v3677 = vsub.f32 %v3020, %v3676
      %3678 = vmatmul.mubr.f32.gmra.mxu0 %v3677
      %v3679 = vpop.f32.mrf.mxu0
      %v3680 = vadd.f32 %v3467, %v3679
      %v3681 = vpop.f32.mrf.mxu0
      %3682 = vmatprep.mubr.f32.mxu0 0.0
      %v3683 = vand.u32 %v3021, 4294901760
      %v3684 = vsub.f32 %v3021, %v3683
      %3685 = vmatmul.mubr.f32.gmra.mxu0 %v3684
      %v3686 = vpop.f32.mrf.mxu0
      %v3687 = vadd.f32 %v3473, %v3686
      %v3688 = vpop.f32.mrf.mxu0
      %3689 = vmatprep.mubr.f32.mxu0 0.0
      %v3690 = vand.u32 %v3022, 4294901760
      %v3691 = vsub.f32 %v3022, %v3690
      %3692 = vmatmul.mubr.f32.gmra.mxu0 %v3691
      %v3693 = vpop.f32.mrf.mxu0
      %v3694 = vadd.f32 %v3479, %v3693
      %v3695 = vpop.f32.mrf.mxu0
      %3696 = vmatprep.mubr.f32.mxu0 0.0
      %v3697 = vand.u32 %v3023, 4294901760
      %v3698 = vsub.f32 %v3023, %v3697
      %3699 = vmatmul.mubr.f32.gmra.mxu0 %v3698
      %v3700 = vpop.f32.mrf.mxu0
      %v3701 = vadd.f32 %v3485, %v3700
      %v3702 = vpop.f32.mrf.mxu0
      %3703 = vmatprep.mubr.f32.mxu0 0.0
      %v3704 = vand.u32 %v3024, 4294901760
      %v3705 = vsub.f32 %v3024, %v3704
      %3706 = vmatmul.mubr.f32.gmra.mxu0 %v3705
      %v3707 = vpop.f32.mrf.mxu0
      %v3708 = vadd.f32 %v3491, %v3707
      %v3709 = vpop.f32.mrf.mxu0
      %3710 = vmatprep.mubr.f32.mxu0 0.0
      %v3711 = vand.u32 %v3025, 4294901760
      %v3712 = vsub.f32 %v3025, %v3711
      %3713 = vmatmul.mubr.f32.gmra.mxu0 %v3712
      %v3714 = vpop.f32.mrf.mxu0
      %v3715 = vadd.f32 %v3497, %v3714
      %v3716 = vpop.f32.mrf.mxu0
      %3717 = vmatprep.mubr.f32.mxu0 0.0
      %v3718 = vand.u32 %v3026, 4294901760
      %v3719 = vsub.f32 %v3026, %v3718
      %3720 = vmatmul.mubr.f32.gmra.mxu0 %v3719
      %v3721 = vpop.f32.mrf.mxu0
      %v3722 = vadd.f32 %v3503, %v3721
      %v3723 = vpop.f32.mrf.mxu0
      %3724 = vmatprep.mubr.f32.mxu0 0.0
      %v3725 = vand.u32 %v3027, 4294901760
      %v3726 = vsub.f32 %v3027, %v3725
      %3727 = vmatmul.mubr.f32.gmra.mxu0 %v3726
      %v3728 = vpop.f32.mrf.mxu0
      %v3729 = vadd.f32 %v3509, %v3728
      %v3730 = vpop.f32.mrf.mxu0
      %3731 = vmatprep.mubr.f32.mxu0 0.0
      %v3732 = vand.u32 %v3028, 4294901760
      %v3733 = vsub.f32 %v3028, %v3732
      %3734 = vmatmul.mubr.f32.gmra.mxu0 %v3733
      %v3735 = vpop.f32.mrf.mxu0
      %v3736 = vadd.f32 %v3515, %v3735
      %v3737 = vpop.f32.mrf.mxu0
      %3738 = vmatprep.mubr.f32.mxu0 0.0
      %v3739 = vand.u32 %v3029, 4294901760
      %v3740 = vsub.f32 %v3029, %v3739
      %3741 = vmatmul.mubr.f32.gmra.mxu0 %v3740
      %v3742 = vpop.f32.mrf.mxu0
      %v3743 = vadd.f32 %v3521, %v3742
      %v3744 = vpop.f32.mrf.mxu0
      %3745 = vmatprep.mubr.f32.mxu0 0.0
      %v3746 = vand.u32 %v3030, 4294901760
      %v3747 = vsub.f32 %v3030, %v3746
      %3748 = vmatmul.mubr.f32.gmra.mxu0 %v3747
      %v3749 = vpop.f32.mrf.mxu0
      %v3750 = vadd.f32 %v3527, %v3749
      %v3751 = vpop.f32.mrf.mxu0
      %3752 = vmatprep.mubr.f32.mxu0 0.0
      %v3753 = vand.u32 %v3031, 4294901760
      %v3754 = vsub.f32 %v3031, %v3753
      %3755 = vmatmul.mubr.f32.gmra.mxu0 %v3754
      %v3756 = vpop.f32.mrf.mxu0
      %v3757 = vadd.f32 %v3533, %v3756
      %v3758 = vpop.f32.mrf.mxu0
      %3759 = vmatprep.mubr.f32.mxu0 0.0
      %v3760 = vand.u32 %v3032, 4294901760
      %v3761 = vsub.f32 %v3032, %v3760
      %3762 = vmatmul.mubr.f32.gmra.mxu0 %v3761
      %v3763 = vpop.f32.mrf.mxu0
      %v3764 = vadd.f32 %v3539, %v3763
      %v3765 = vpop.f32.mrf.mxu0
      %3766 = vmatprep.mubr.f32.mxu0 0.0
      %v3767 = vand.u32 %v3033, 4294901760
      %v3768 = vsub.f32 %v3033, %v3767
      %3769 = vmatmul.mubr.f32.gmra.mxu0 %v3768
      %v3770 = vpop.f32.mrf.mxu0
      %v3771 = vadd.f32 %v3545, %v3770
      %v3772 = vpop.f32.mrf.mxu0
      %3773 = vmatprep.mubr.f32.mxu0 0.0
      %v3774 = vand.u32 %v3034, 4294901760
      %v3775 = vsub.f32 %v3034, %v3774
      %3776 = vmatmul.mubr.f32.gmra.mxu0 %v3775
      %v3777 = vpop.f32.mrf.mxu0
      %v3778 = vadd.f32 %v3551, %v3777
      %v3779 = vpop.f32.mrf.mxu0
      %3780 = vmatprep.mubr.f32.mxu0 0.0
      %v3781 = vand.u32 %v3035, 4294901760
      %v3782 = vsub.f32 %v3035, %v3781
      %3783 = vmatmul.mubr.f32.gmra.mxu0 %v3782
      %v3784 = vpop.f32.mrf.mxu0
      %v3785 = vadd.f32 %v3557, %v3784
      %v3786 = vpop.f32.mrf.mxu0
      %3787 = vmatprep.mubr.f32.mxu0 0.0
      %v3788 = vand.u32 %v3036, 4294901760
      %v3789 = vsub.f32 %v3036, %v3788
      %3790 = vmatmul.mubr.f32.gmra.mxu0 %v3789
      %v3791 = vpop.f32.mrf.mxu0
      %v3792 = vadd.f32 %v3563, %v3791
      %v3793 = vpop.f32.mrf.mxu0
      %3794 = vmatprep.mubr.f32.mxu0 0.0
      %v3795 = vand.u32 %v3037, 4294901760
      %v3796 = vsub.f32 %v3037, %v3795
      %3797 = vmatmul.mubr.f32.gmra.mxu0 %v3796
      %v3798 = vpop.f32.mrf.mxu0
      %v3799 = vadd.f32 %v3569, %v3798
      %v3800 = vpop.f32.mrf.mxu0
      %3801 = vdwg.mxu0
      %3802 = vmatprep.subr.mxu0 0.0
      %v3803 = vand.u32 %v280, 4294901760
      %3804 = vmatpush1.msra.mxu0 %v3803
      %3805 = vmatprep.subr.mxu0 0.0
      %v3806 = vand.u32 %v279, 4294901760
      %3807 = vmatpush1.msra.mxu0 %v3806
      %3808 = vmatprep.subr.mxu0 0.0
      %v3809 = vand.u32 %v278, 4294901760
      %3810 = vmatpush1.msra.mxu0 %v3809
      %3811 = vmatprep.subr.mxu0 0.0
      %v3812 = vand.u32 %v277, 4294901760
      %3813 = vmatpush1.msra.mxu0 %v3812
      %3814 = vmatprep.subr.mxu0 0.0
      %v3815 = vand.u32 %v276, 4294901760
      %3816 = vmatpush1.msra.mxu0 %v3815
      %3817 = vmatprep.subr.mxu0 0.0
      %v3818 = vand.u32 %v275, 4294901760
      %3819 = vmatpush1.msra.mxu0 %v3818
      %3820 = vmatprep.subr.mxu0 0.0
      %v3821 = vand.u32 %v274, 4294901760
      %3822 = vmatpush1.msra.mxu0 %v3821
      %3823 = vmatprep.subr.mxu0 0.0
      %v3824 = vand.u32 %v273, 4294901760
      %3825 = vmatpush1.msra.mxu0 %v3824
      %3826 = vmatprep.subr.mxu0 0.0
      %v3827 = vand.u32 %v272, 4294901760
      %3828 = vmatpush1.msra.mxu0 %v3827
      %3829 = vmatprep.subr.mxu0 0.0
      %v3830 = vand.u32 %v271, 4294901760
      %3831 = vmatpush1.msra.mxu0 %v3830
      %3832 = vmatprep.subr.mxu0 0.0
      %v3833 = vand.u32 %v270, 4294901760
      %3834 = vmatpush1.msra.mxu0 %v3833
      %3835 = vmatprep.subr.mxu0 0.0
      %v3836 = vand.u32 %v269, 4294901760
      %3837 = vmatpush1.msra.mxu0 %v3836
      %3838 = vmatprep.subr.mxu0 0.0
      %v3839 = vand.u32 %v268, 4294901760
      %3840 = vmatpush1.msra.mxu0 %v3839
      %3841 = vmatprep.subr.mxu0 0.0
      %v3842 = vand.u32 %v267, 4294901760
      %3843 = vmatpush1.msra.mxu0 %v3842
      %3844 = vmatprep.subr.mxu0 0.0
      %v3845 = vand.u32 %v266, 4294901760
      %3846 = vmatpush1.msra.mxu0 %v3845
      %3847 = vmatprep.subr.mxu0 0.0
      %v3848 = vand.u32 %v265, 4294901760
      %3849 = vmatpush1.msra.mxu0 %v3848
      %3850 = vmatprep.subr.mxu0 0.0
      %3851 = vmatpush2.msra.mxu0 0.0
      %3852 = vmatprep.subr.mxu0 0.0
      %3853 = vmatpush2.msra.mxu0 0.0
      %3854 = vmatprep.subr.mxu0 0.0
      %3855 = vmatpush2.msra.mxu0 0.0
      %3856 = vmatprep.subr.mxu0 0.0
      %3857 = vmatpush2.msra.mxu0 0.0
      %3858 = vmatprep.subr.mxu0 0.0
      %3859 = vmatpush2.msra.mxu0 0.0
      %3860 = vmatprep.subr.mxu0 0.0
      %3861 = vmatpush2.msra.mxu0 0.0
      %3862 = vmatprep.subr.mxu0 0.0
      %3863 = vmatpush2.msra.mxu0 0.0
      %3864 = vmatprep.subr.mxu0 0.0
      %3865 = vmatpush2.msra.mxu0 0.0
      %3866 = vmatprep.subr.mxu0 0.0
      %3867 = vmatpush2.msra.mxu0 0.0
      %3868 = vmatprep.subr.mxu0 0.0
      %3869 = vmatpush2.msra.mxu0 0.0
      %3870 = vmatprep.subr.mxu0 0.0
      %3871 = vmatpush2.msra.mxu0 0.0
      %3872 = vmatprep.subr.mxu0 0.0
      %3873 = vmatpush2.msra.mxu0 0.0
      %3874 = vmatprep.subr.mxu0 0.0
      %3875 = vmatpush2.msra.mxu0 0.0
      %3876 = vmatprep.subr.mxu0 0.0
      %3877 = vmatpush2.msra.mxu0 0.0
      %3878 = vmatprep.subr.mxu0 0.0
      %3879 = vmatpush2.msra.mxu0 0.0
      %3880 = vmatprep.subr.mxu0 0.0
      %3881 = vmatpush2.msra.mxu0 0.0
      %3882 = vmatprep.mubr.f32.mxu0 0.0
      %v3883 = vand.u32 %v3019, 4294901760
      %v3884 = vsub.f32 %v3019, %v3883
      %v3885 = vand.u32 %v3884, 4294901760
      %3886 = vmatmul.mubr.f32.gmra.mxu0 %v3885
      %v3887 = vpop.f32.mrf.mxu0
      %v3888 = vadd.f32 %v3673, %v3887
      %v3889 = vpop.f32.mrf.mxu0
      %3890 = vmatprep.mubr.f32.mxu0 0.0
      %v3891 = vand.u32 %v3020, 4294901760
      %v3892 = vsub.f32 %v3020, %v3891
      %v3893 = vand.u32 %v3892, 4294901760
      %3894 = vmatmul.mubr.f32.gmra.mxu0 %v3893
      %v3895 = vpop.f32.mrf.mxu0
      %v3896 = vadd.f32 %v3680, %v3895
      %v3897 = vpop.f32.mrf.mxu0
      %3898 = vmatprep.mubr.f32.mxu0 0.0
      %v3899 = vand.u32 %v3021, 4294901760
      %v3900 = vsub.f32 %v3021, %v3899
      %v3901 = vand.u32 %v3900, 4294901760
      %3902 = vmatmul.mubr.f32.gmra.mxu0 %v3901
      %v3903 = vpop.f32.mrf.mxu0
      %v3904 = vadd.f32 %v3687, %v3903
      %v3905 = vpop.f32.mrf.mxu0
      %3906 = vmatprep.mubr.f32.mxu0 0.0
      %v3907 = vand.u32 %v3022, 4294901760
      %v3908 = vsub.f32 %v3022, %v3907
      %v3909 = vand.u32 %v3908, 4294901760
      %3910 = vmatmul.mubr.f32.gmra.mxu0 %v3909
      %v3911 = vpop.f32.mrf.mxu0
      %v3912 = vadd.f32 %v3694, %v3911
      %v3913 = vpop.f32.mrf.mxu0
      %3914 = vmatprep.mubr.f32.mxu0 0.0
      %v3915 = vand.u32 %v3023, 4294901760
      %v3916 = vsub.f32 %v3023, %v3915
      %v3917 = vand.u32 %v3916, 4294901760
      %3918 = vmatmul.mubr.f32.gmra.mxu0 %v3917
      %v3919 = vpop.f32.mrf.mxu0
      %v3920 = vadd.f32 %v3701, %v3919
      %v3921 = vpop.f32.mrf.mxu0
      %3922 = vmatprep.mubr.f32.mxu0 0.0
      %v3923 = vand.u32 %v3024, 4294901760
      %v3924 = vsub.f32 %v3024, %v3923
      %v3925 = vand.u32 %v3924, 4294901760
      %3926 = vmatmul.mubr.f32.gmra.mxu0 %v3925
      %v3927 = vpop.f32.mrf.mxu0
      %v3928 = vadd.f32 %v3708, %v3927
      %v3929 = vpop.f32.mrf.mxu0
      %3930 = vmatprep.mubr.f32.mxu0 0.0
      %v3931 = vand.u32 %v3025, 4294901760
      %v3932 = vsub.f32 %v3025, %v3931
      %v3933 = vand.u32 %v3932, 4294901760
      %3934 = vmatmul.mubr.f32.gmra.mxu0 %v3933
      %v3935 = vpop.f32.mrf.mxu0
      %v3936 = vadd.f32 %v3715, %v3935
      %v3937 = vpop.f32.mrf.mxu0
      %3938 = vmatprep.mubr.f32.mxu0 0.0
      %v3939 = vand.u32 %v3026, 4294901760
      %v3940 = vsub.f32 %v3026, %v3939
      %v3941 = vand.u32 %v3940, 4294901760
      %3942 = vmatmul.mubr.f32.gmra.mxu0 %v3941
      %v3943 = vpop.f32.mrf.mxu0
      %v3944 = vadd.f32 %v3722, %v3943
      %v3945 = vpop.f32.mrf.mxu0
      %3946 = vmatprep.mubr.f32.mxu0 0.0
      %v3947 = vand.u32 %v3027, 4294901760
      %v3948 = vsub.f32 %v3027, %v3947
      %v3949 = vand.u32 %v3948, 4294901760
      %3950 = vmatmul.mubr.f32.gmra.mxu0 %v3949
      %v3951 = vpop.f32.mrf.mxu0
      %v3952 = vadd.f32 %v3729, %v3951
      %v3953 = vpop.f32.mrf.mxu0
      %3954 = vmatprep.mubr.f32.mxu0 0.0
      %v3955 = vand.u32 %v3028, 4294901760
      %v3956 = vsub.f32 %v3028, %v3955
      %v3957 = vand.u32 %v3956, 4294901760
      %3958 = vmatmul.mubr.f32.gmra.mxu0 %v3957
      %v3959 = vpop.f32.mrf.mxu0
      %v3960 = vadd.f32 %v3736, %v3959
      %v3961 = vpop.f32.mrf.mxu0
      %3962 = vmatprep.mubr.f32.mxu0 0.0
      %v3963 = vand.u32 %v3029, 4294901760
      %v3964 = vsub.f32 %v3029, %v3963
      %v3965 = vand.u32 %v3964, 4294901760
      %3966 = vmatmul.mubr.f32.gmra.mxu0 %v3965
      %v3967 = vpop.f32.mrf.mxu0
      %v3968 = vadd.f32 %v3743, %v3967
      %v3969 = vpop.f32.mrf.mxu0
      %3970 = vmatprep.mubr.f32.mxu0 0.0
      %v3971 = vand.u32 %v3030, 4294901760
      %v3972 = vsub.f32 %v3030, %v3971
      %v3973 = vand.u32 %v3972, 4294901760
      %3974 = vmatmul.mubr.f32.gmra.mxu0 %v3973
      %v3975 = vpop.f32.mrf.mxu0
      %v3976 = vadd.f32 %v3750, %v3975
      %v3977 = vpop.f32.mrf.mxu0
      %3978 = vmatprep.mubr.f32.mxu0 0.0
      %v3979 = vand.u32 %v3031, 4294901760
      %v3980 = vsub.f32 %v3031, %v3979
      %v3981 = vand.u32 %v3980, 4294901760
      %3982 = vmatmul.mubr.f32.gmra.mxu0 %v3981
      %v3983 = vpop.f32.mrf.mxu0
      %v3984 = vadd.f32 %v3757, %v3983
      %v3985 = vpop.f32.mrf.mxu0
      %3986 = vmatprep.mubr.f32.mxu0 0.0
      %v3987 = vand.u32 %v3032, 4294901760
      %v3988 = vsub.f32 %v3032, %v3987
      %v3989 = vand.u32 %v3988, 4294901760
      %3990 = vmatmul.mubr.f32.gmra.mxu0 %v3989
      %v3991 = vpop.f32.mrf.mxu0
      %v3992 = vadd.f32 %v3764, %v3991
      %v3993 = vpop.f32.mrf.mxu0
      %3994 = vmatprep.mubr.f32.mxu0 0.0
      %v3995 = vand.u32 %v3033, 4294901760
      %v3996 = vsub.f32 %v3033, %v3995
      %v3997 = vand.u32 %v3996, 4294901760
      %3998 = vmatmul.mubr.f32.gmra.mxu0 %v3997
      %v3999 = vpop.f32.mrf.mxu0
      %v4000 = vadd.f32 %v3771, %v3999
      %v4001 = vpop.f32.mrf.mxu0
      %4002 = vmatprep.mubr.f32.mxu0 0.0
      %v4003 = vand.u32 %v3034, 4294901760
      %v4004 = vsub.f32 %v3034, %v4003
      %v4005 = vand.u32 %v4004, 4294901760
      %4006 = vmatmul.mubr.f32.gmra.mxu0 %v4005
      %v4007 = vpop.f32.mrf.mxu0
      %v4008 = vadd.f32 %v3778, %v4007
      %v4009 = vpop.f32.mrf.mxu0
      %4010 = vmatprep.mubr.f32.mxu0 0.0
      %v4011 = vand.u32 %v3035, 4294901760
      %v4012 = vsub.f32 %v3035, %v4011
      %v4013 = vand.u32 %v4012, 4294901760
      %4014 = vmatmul.mubr.f32.gmra.mxu0 %v4013
      %v4015 = vpop.f32.mrf.mxu0
      %v4016 = vadd.f32 %v3785, %v4015
      %v4017 = vpop.f32.mrf.mxu0
      %4018 = vmatprep.mubr.f32.mxu0 0.0
      %v4019 = vand.u32 %v3036, 4294901760
      %v4020 = vsub.f32 %v3036, %v4019
      %v4021 = vand.u32 %v4020, 4294901760
      %4022 = vmatmul.mubr.f32.gmra.mxu0 %v4021
      %v4023 = vpop.f32.mrf.mxu0
      %v4024 = vadd.f32 %v3792, %v4023
      %v4025 = vpop.f32.mrf.mxu0
      %4026 = vmatprep.mubr.f32.mxu0 0.0
      %v4027 = vand.u32 %v3037, 4294901760
      %v4028 = vsub.f32 %v3037, %v4027
      %v4029 = vand.u32 %v4028, 4294901760
      %4030 = vmatmul.mubr.f32.gmra.mxu0 %v4029
      %v4031 = vpop.f32.mrf.mxu0
      %v4032 = vadd.f32 %v3799, %v4031
      %v4033 = vpop.f32.mrf.mxu0
      %4034 = vdwg.mxu0
      %4035 = vmatprep.subr.mxu0 0.0
      %v4036 = vand.u32 %v280, 4294901760
      %v4037 = vsub.f32 %v280, %v4036
      %v4038 = vand.u32 %v4037, 4294901760
      %4039 = vmatpush1.msra.mxu0 %v4038
      %4040 = vmatprep.subr.mxu0 0.0
      %v4041 = vand.u32 %v279, 4294901760
      %v4042 = vsub.f32 %v279, %v4041
      %v4043 = vand.u32 %v4042, 4294901760
      %4044 = vmatpush1.msra.mxu0 %v4043
      %4045 = vmatprep.subr.mxu0 0.0
      %v4046 = vand.u32 %v278, 4294901760
      %v4047 = vsub.f32 %v278, %v4046
      %v4048 = vand.u32 %v4047, 4294901760
      %4049 = vmatpush1.msra.mxu0 %v4048
      %4050 = vmatprep.subr.mxu0 0.0
      %v4051 = vand.u32 %v277, 4294901760
      %v4052 = vsub.f32 %v277, %v4051
      %v4053 = vand.u32 %v4052, 4294901760
      %4054 = vmatpush1.msra.mxu0 %v4053
      %4055 = vmatprep.subr.mxu0 0.0
      %v4056 = vand.u32 %v276, 4294901760
      %v4057 = vsub.f32 %v276, %v4056
      %v4058 = vand.u32 %v4057, 4294901760
      %4059 = vmatpush1.msra.mxu0 %v4058
      %4060 = vmatprep.subr.mxu0 0.0
      %v4061 = vand.u32 %v275, 4294901760
      %v4062 = vsub.f32 %v275, %v4061
      %v4063 = vand.u32 %v4062, 4294901760
      %4064 = vmatpush1.msra.mxu0 %v4063
      %4065 = vmatprep.subr.mxu0 0.0
      %v4066 = vand.u32 %v274, 4294901760
      %v4067 = vsub.f32 %v274, %v4066
      %v4068 = vand.u32 %v4067, 4294901760
      %4069 = vmatpush1.msra.mxu0 %v4068
      %4070 = vmatprep.subr.mxu0 0.0
      %v4071 = vand.u32 %v273, 4294901760
      %v4072 = vsub.f32 %v273, %v4071
      %v4073 = vand.u32 %v4072, 4294901760
      %4074 = vmatpush1.msra.mxu0 %v4073
      %4075 = vmatprep.subr.mxu0 0.0
      %v4076 = vand.u32 %v272, 4294901760
      %v4077 = vsub.f32 %v272, %v4076
      %v4078 = vand.u32 %v4077, 4294901760
      %4079 = vmatpush1.msra.mxu0 %v4078
      %4080 = vmatprep.subr.mxu0 0.0
      %v4081 = vand.u32 %v271, 4294901760
      %v4082 = vsub.f32 %v271, %v4081
      %v4083 = vand.u32 %v4082, 4294901760
      %4084 = vmatpush1.msra.mxu0 %v4083
      %4085 = vmatprep.subr.mxu0 0.0
      %v4086 = vand.u32 %v270, 4294901760
      %v4087 = vsub.f32 %v270, %v4086
      %v4088 = vand.u32 %v4087, 4294901760
      %4089 = vmatpush1.msra.mxu0 %v4088
      %4090 = vmatprep.subr.mxu0 0.0
      %v4091 = vand.u32 %v269, 4294901760
      %v4092 = vsub.f32 %v269, %v4091
      %v4093 = vand.u32 %v4092, 4294901760
      %4094 = vmatpush1.msra.mxu0 %v4093
      %4095 = vmatprep.subr.mxu0 0.0
      %v4096 = vand.u32 %v268, 4294901760
      %v4097 = vsub.f32 %v268, %v4096
      %v4098 = vand.u32 %v4097, 4294901760
      %4099 = vmatpush1.msra.mxu0 %v4098
      %4100 = vmatprep.subr.mxu0 0.0
      %v4101 = vand.u32 %v267, 4294901760
      %v4102 = vsub.f32 %v267, %v4101
      %v4103 = vand.u32 %v4102, 4294901760
      %4104 = vmatpush1.msra.mxu0 %v4103
      %4105 = vmatprep.subr.mxu0 0.0
      %v4106 = vand.u32 %v266, 4294901760
      %v4107 = vsub.f32 %v266, %v4106
      %v4108 = vand.u32 %v4107, 4294901760
      %4109 = vmatpush1.msra.mxu0 %v4108
      %4110 = vmatprep.subr.mxu0 0.0
      %v4111 = vand.u32 %v265, 4294901760
      %v4112 = vsub.f32 %v265, %v4111
      %v4113 = vand.u32 %v4112, 4294901760
      %4114 = vmatpush1.msra.mxu0 %v4113
      %4115 = vmatprep.subr.mxu0 0.0
      %4116 = vmatpush2.msra.mxu0 0.0
      %4117 = vmatprep.subr.mxu0 0.0
      %4118 = vmatpush2.msra.mxu0 0.0
      %4119 = vmatprep.subr.mxu0 0.0
      %4120 = vmatpush2.msra.mxu0 0.0
      %4121 = vmatprep.subr.mxu0 0.0
      %4122 = vmatpush2.msra.mxu0 0.0
      %4123 = vmatprep.subr.mxu0 0.0
      %4124 = vmatpush2.msra.mxu0 0.0
      %4125 = vmatprep.subr.mxu0 0.0
      %4126 = vmatpush2.msra.mxu0 0.0
      %4127 = vmatprep.subr.mxu0 0.0
      %4128 = vmatpush2.msra.mxu0 0.0
      %4129 = vmatprep.subr.mxu0 0.0
      %4130 = vmatpush2.msra.mxu0 0.0
      %4131 = vmatprep.subr.mxu0 0.0
      %4132 = vmatpush2.msra.mxu0 0.0
      %4133 = vmatprep.subr.mxu0 0.0
      %4134 = vmatpush2.msra.mxu0 0.0
      %4135 = vmatprep.subr.mxu0 0.0
      %4136 = vmatpush2.msra.mxu0 0.0
      %4137 = vmatprep.subr.mxu0 0.0
      %4138 = vmatpush2.msra.mxu0 0.0
      %4139 = vmatprep.subr.mxu0 0.0
      %4140 = vmatpush2.msra.mxu0 0.0
      %4141 = vmatprep.subr.mxu0 0.0
      %4142 = vmatpush2.msra.mxu0 0.0
      %4143 = vmatprep.subr.mxu0 0.0
      %4144 = vmatpush2.msra.mxu0 0.0
      %4145 = vmatprep.subr.mxu0 0.0
      %4146 = vmatpush2.msra.mxu0 0.0
      %4147 = vmatprep.mubr.f32.mxu0 0.0
      %v4148 = vand.u32 %v3019, 4294901760
      %4149 = vmatmul.mubr.f32.gmra.mxu0 %v4148
      %v4150 = vpop.f32.mrf.mxu0
      %v4151 = vadd.f32 %v3888, %v4150
      %v4152 = vpop.f32.mrf.mxu0
      %4153 = vmatprep.mubr.f32.mxu0 0.0
      %v4154 = vand.u32 %v3020, 4294901760
      %4155 = vmatmul.mubr.f32.gmra.mxu0 %v4154
      %v4156 = vpop.f32.mrf.mxu0
      %v4157 = vadd.f32 %v3896, %v4156
      %v4158 = vpop.f32.mrf.mxu0
      %4159 = vmatprep.mubr.f32.mxu0 0.0
      %v4160 = vand.u32 %v3021, 4294901760
      %4161 = vmatmul.mubr.f32.gmra.mxu0 %v4160
      %v4162 = vpop.f32.mrf.mxu0
      %v4163 = vadd.f32 %v3904, %v4162
      %v4164 = vpop.f32.mrf.mxu0
      %4165 = vmatprep.mubr.f32.mxu0 0.0
      %v4166 = vand.u32 %v3022, 4294901760
      %4167 = vmatmul.mubr.f32.gmra.mxu0 %v4166
      %v4168 = vpop.f32.mrf.mxu0
      %v4169 = vadd.f32 %v3912, %v4168
      %v4170 = vpop.f32.mrf.mxu0
      %4171 = vmatprep.mubr.f32.mxu0 0.0
      %v4172 = vand.u32 %v3023, 4294901760
      %4173 = vmatmul.mubr.f32.gmra.mxu0 %v4172
      %v4174 = vpop.f32.mrf.mxu0
      %v4175 = vadd.f32 %v3920, %v4174
      %v4176 = vpop.f32.mrf.mxu0
      %4177 = vmatprep.mubr.f32.mxu0 0.0
      %v4178 = vand.u32 %v3024, 4294901760
      %4179 = vmatmul.mubr.f32.gmra.mxu0 %v4178
      %v4180 = vpop.f32.mrf.mxu0
      %v4181 = vadd.f32 %v3928, %v4180
      %v4182 = vpop.f32.mrf.mxu0
      %4183 = vmatprep.mubr.f32.mxu0 0.0
      %v4184 = vand.u32 %v3025, 4294901760
      %4185 = vmatmul.mubr.f32.gmra.mxu0 %v4184
      %v4186 = vpop.f32.mrf.mxu0
      %v4187 = vadd.f32 %v3936, %v4186
      %v4188 = vpop.f32.mrf.mxu0
      %4189 = vmatprep.mubr.f32.mxu0 0.0
      %v4190 = vand.u32 %v3026, 4294901760
      %4191 = vmatmul.mubr.f32.gmra.mxu0 %v4190
      %v4192 = vpop.f32.mrf.mxu0
      %v4193 = vadd.f32 %v3944, %v4192
      %v4194 = vpop.f32.mrf.mxu0
      %4195 = vmatprep.mubr.f32.mxu0 0.0
      %v4196 = vand.u32 %v3027, 4294901760
      %4197 = vmatmul.mubr.f32.gmra.mxu0 %v4196
      %v4198 = vpop.f32.mrf.mxu0
      %v4199 = vadd.f32 %v3952, %v4198
      %v4200 = vpop.f32.mrf.mxu0
      %4201 = vmatprep.mubr.f32.mxu0 0.0
      %v4202 = vand.u32 %v3028, 4294901760
      %4203 = vmatmul.mubr.f32.gmra.mxu0 %v4202
      %v4204 = vpop.f32.mrf.mxu0
      %v4205 = vadd.f32 %v3960, %v4204
      %v4206 = vpop.f32.mrf.mxu0
      %4207 = vmatprep.mubr.f32.mxu0 0.0
      %v4208 = vand.u32 %v3029, 4294901760
      %4209 = vmatmul.mubr.f32.gmra.mxu0 %v4208
      %v4210 = vpop.f32.mrf.mxu0
      %v4211 = vadd.f32 %v3968, %v4210
      %v4212 = vpop.f32.mrf.mxu0
      %4213 = vmatprep.mubr.f32.mxu0 0.0
      %v4214 = vand.u32 %v3030, 4294901760
      %4215 = vmatmul.mubr.f32.gmra.mxu0 %v4214
      %v4216 = vpop.f32.mrf.mxu0
      %v4217 = vadd.f32 %v3976, %v4216
      %v4218 = vpop.f32.mrf.mxu0
      %4219 = vmatprep.mubr.f32.mxu0 0.0
      %v4220 = vand.u32 %v3031, 4294901760
      %4221 = vmatmul.mubr.f32.gmra.mxu0 %v4220
      %v4222 = vpop.f32.mrf.mxu0
      %v4223 = vadd.f32 %v3984, %v4222
      %v4224 = vpop.f32.mrf.mxu0
      %4225 = vmatprep.mubr.f32.mxu0 0.0
      %v4226 = vand.u32 %v3032, 4294901760
      %4227 = vmatmul.mubr.f32.gmra.mxu0 %v4226
      %v4228 = vpop.f32.mrf.mxu0
      %v4229 = vadd.f32 %v3992, %v4228
      %v4230 = vpop.f32.mrf.mxu0
      %4231 = vmatprep.mubr.f32.mxu0 0.0
      %v4232 = vand.u32 %v3033, 4294901760
      %4233 = vmatmul.mubr.f32.gmra.mxu0 %v4232
      %v4234 = vpop.f32.mrf.mxu0
      %v4235 = vadd.f32 %v4000, %v4234
      %v4236 = vpop.f32.mrf.mxu0
      %4237 = vmatprep.mubr.f32.mxu0 0.0
      %v4238 = vand.u32 %v3034, 4294901760
      %4239 = vmatmul.mubr.f32.gmra.mxu0 %v4238
      %v4240 = vpop.f32.mrf.mxu0
      %v4241 = vadd.f32 %v4008, %v4240
      %v4242 = vpop.f32.mrf.mxu0
      %4243 = vmatprep.mubr.f32.mxu0 0.0
      %v4244 = vand.u32 %v3035, 4294901760
      %4245 = vmatmul.mubr.f32.gmra.mxu0 %v4244
      %v4246 = vpop.f32.mrf.mxu0
      %v4247 = vadd.f32 %v4016, %v4246
      %v4248 = vpop.f32.mrf.mxu0
      %4249 = vmatprep.mubr.f32.mxu0 0.0
      %v4250 = vand.u32 %v3036, 4294901760
      %4251 = vmatmul.mubr.f32.gmra.mxu0 %v4250
      %v4252 = vpop.f32.mrf.mxu0
      %v4253 = vadd.f32 %v4024, %v4252
      %v4254 = vpop.f32.mrf.mxu0
      %4255 = vmatprep.mubr.f32.mxu0 0.0
      %v4256 = vand.u32 %v3037, 4294901760
      %4257 = vmatmul.mubr.f32.gmra.mxu0 %v4256
      %v4258 = vpop.f32.mrf.mxu0
      %v4259 = vadd.f32 %v4032, %v4258
      %v4260 = vpop.f32.mrf.mxu0
      %4261 = vdwg.mxu0
      %4262 = vmatprep.subr.mxu0 0.0
      %v4263 = vand.u32 %v280, 4294901760
      %4264 = vmatpush1.msra.mxu0 %v4263
      %4265 = vmatprep.subr.mxu0 0.0
      %v4266 = vand.u32 %v279, 4294901760
      %4267 = vmatpush1.msra.mxu0 %v4266
      %4268 = vmatprep.subr.mxu0 0.0
      %v4269 = vand.u32 %v278, 4294901760
      %4270 = vmatpush1.msra.mxu0 %v4269
      %4271 = vmatprep.subr.mxu0 0.0
      %v4272 = vand.u32 %v277, 4294901760
      %4273 = vmatpush1.msra.mxu0 %v4272
      %4274 = vmatprep.subr.mxu0 0.0
      %v4275 = vand.u32 %v276, 4294901760
      %4276 = vmatpush1.msra.mxu0 %v4275
      %4277 = vmatprep.subr.mxu0 0.0
      %v4278 = vand.u32 %v275, 4294901760
      %4279 = vmatpush1.msra.mxu0 %v4278
      %4280 = vmatprep.subr.mxu0 0.0
      %v4281 = vand.u32 %v274, 4294901760
      %4282 = vmatpush1.msra.mxu0 %v4281
      %4283 = vmatprep.subr.mxu0 0.0
      %v4284 = vand.u32 %v273, 4294901760
      %4285 = vmatpush1.msra.mxu0 %v4284
      %4286 = vmatprep.subr.mxu0 0.0
      %v4287 = vand.u32 %v272, 4294901760
      %4288 = vmatpush1.msra.mxu0 %v4287
      %4289 = vmatprep.subr.mxu0 0.0
      %v4290 = vand.u32 %v271, 4294901760
      %4291 = vmatpush1.msra.mxu0 %v4290
      %4292 = vmatprep.subr.mxu0 0.0
      %v4293 = vand.u32 %v270, 4294901760
      %4294 = vmatpush1.msra.mxu0 %v4293
      %4295 = vmatprep.subr.mxu0 0.0
      %v4296 = vand.u32 %v269, 4294901760
      %4297 = vmatpush1.msra.mxu0 %v4296
      %4298 = vmatprep.subr.mxu0 0.0
      %v4299 = vand.u32 %v268, 4294901760
      %4300 = vmatpush1.msra.mxu0 %v4299
      %4301 = vmatprep.subr.mxu0 0.0
      %v4302 = vand.u32 %v267, 4294901760
      %4303 = vmatpush1.msra.mxu0 %v4302
      %4304 = vmatprep.subr.mxu0 0.0
      %v4305 = vand.u32 %v266, 4294901760
      %4306 = vmatpush1.msra.mxu0 %v4305
      %4307 = vmatprep.subr.mxu0 0.0
      %v4308 = vand.u32 %v265, 4294901760
      %4309 = vmatpush1.msra.mxu0 %v4308
      %4310 = vmatprep.subr.mxu0 0.0
      %4311 = vmatpush2.msra.mxu0 0.0
      %4312 = vmatprep.subr.mxu0 0.0
      %4313 = vmatpush2.msra.mxu0 0.0
      %4314 = vmatprep.subr.mxu0 0.0
      %4315 = vmatpush2.msra.mxu0 0.0
      %4316 = vmatprep.subr.mxu0 0.0
      %4317 = vmatpush2.msra.mxu0 0.0
      %4318 = vmatprep.subr.mxu0 0.0
      %4319 = vmatpush2.msra.mxu0 0.0
      %4320 = vmatprep.subr.mxu0 0.0
      %4321 = vmatpush2.msra.mxu0 0.0
      %4322 = vmatprep.subr.mxu0 0.0
      %4323 = vmatpush2.msra.mxu0 0.0
      %4324 = vmatprep.subr.mxu0 0.0
      %4325 = vmatpush2.msra.mxu0 0.0
      %4326 = vmatprep.subr.mxu0 0.0
      %4327 = vmatpush2.msra.mxu0 0.0
      %4328 = vmatprep.subr.mxu0 0.0
      %4329 = vmatpush2.msra.mxu0 0.0
      %4330 = vmatprep.subr.mxu0 0.0
      %4331 = vmatpush2.msra.mxu0 0.0
      %4332 = vmatprep.subr.mxu0 0.0
      %4333 = vmatpush2.msra.mxu0 0.0
      %4334 = vmatprep.subr.mxu0 0.0
      %4335 = vmatpush2.msra.mxu0 0.0
      %4336 = vmatprep.subr.mxu0 0.0
      %4337 = vmatpush2.msra.mxu0 0.0
      %4338 = vmatprep.subr.mxu0 0.0
      %4339 = vmatpush2.msra.mxu0 0.0
      %4340 = vmatprep.subr.mxu0 0.0
      %4341 = vmatpush2.msra.mxu0 0.0
      %4342 = vmatprep.mubr.f32.mxu0 0.0
      %v4343 = vand.u32 %v3019, 4294901760
      %4344 = vmatmul.mubr.f32.gmra.mxu0 %v4343
      %v4345 = vpop.f32.mrf.mxu0
      %v4346 = vadd.f32 %v4151, %v4345
      %v4347 = vpop.f32.mrf.mxu0
      %4348 = vmatprep.mubr.f32.mxu0 0.0
      %v4349 = vand.u32 %v3020, 4294901760
      %4350 = vmatmul.mubr.f32.gmra.mxu0 %v4349
      %v4351 = vpop.f32.mrf.mxu0
      %v4352 = vadd.f32 %v4157, %v4351
      %v4353 = vpop.f32.mrf.mxu0
      %4354 = vmatprep.mubr.f32.mxu0 0.0
      %v4355 = vand.u32 %v3021, 4294901760
      %4356 = vmatmul.mubr.f32.gmra.mxu0 %v4355
      %v4357 = vpop.f32.mrf.mxu0
      %v4358 = vadd.f32 %v4163, %v4357
      %v4359 = vpop.f32.mrf.mxu0
      %4360 = vmatprep.mubr.f32.mxu0 0.0
      %v4361 = vand.u32 %v3022, 4294901760
      %4362 = vmatmul.mubr.f32.gmra.mxu0 %v4361
      %v4363 = vpop.f32.mrf.mxu0
      %v4364 = vadd.f32 %v4169, %v4363
      %v4365 = vpop.f32.mrf.mxu0
      %4366 = vmatprep.mubr.f32.mxu0 0.0
      %v4367 = vand.u32 %v3023, 4294901760
      %4368 = vmatmul.mubr.f32.gmra.mxu0 %v4367
      %v4369 = vpop.f32.mrf.mxu0
      %v4370 = vadd.f32 %v4175, %v4369
      %v4371 = vpop.f32.mrf.mxu0
      %4372 = vmatprep.mubr.f32.mxu0 0.0
      %v4373 = vand.u32 %v3024, 4294901760
      %4374 = vmatmul.mubr.f32.gmra.mxu0 %v4373
      %v4375 = vpop.f32.mrf.mxu0
      %v4376 = vadd.f32 %v4181, %v4375
      %v4377 = vpop.f32.mrf.mxu0
      %4378 = vmatprep.mubr.f32.mxu0 0.0
      %v4379 = vand.u32 %v3025, 4294901760
      %4380 = vmatmul.mubr.f32.gmra.mxu0 %v4379
      %v4381 = vpop.f32.mrf.mxu0
      %v4382 = vadd.f32 %v4187, %v4381
      %v4383 = vpop.f32.mrf.mxu0
      %4384 = vmatprep.mubr.f32.mxu0 0.0
      %v4385 = vand.u32 %v3026, 4294901760
      %4386 = vmatmul.mubr.f32.gmra.mxu0 %v4385
      %v4387 = vpop.f32.mrf.mxu0
      %v4388 = vadd.f32 %v4193, %v4387
      %v4389 = vpop.f32.mrf.mxu0
      %4390 = vmatprep.mubr.f32.mxu0 0.0
      %v4391 = vand.u32 %v3027, 4294901760
      %4392 = vmatmul.mubr.f32.gmra.mxu0 %v4391
      %v4393 = vpop.f32.mrf.mxu0
      %v4394 = vadd.f32 %v4199, %v4393
      %v4395 = vpop.f32.mrf.mxu0
      %4396 = vmatprep.mubr.f32.mxu0 0.0
      %v4397 = vand.u32 %v3028, 4294901760
      %4398 = vmatmul.mubr.f32.gmra.mxu0 %v4397
      %v4399 = vpop.f32.mrf.mxu0
      %v4400 = vadd.f32 %v4205, %v4399
      %v4401 = vpop.f32.mrf.mxu0
      %4402 = vmatprep.mubr.f32.mxu0 0.0
      %v4403 = vand.u32 %v3029, 4294901760
      %4404 = vmatmul.mubr.f32.gmra.mxu0 %v4403
      %v4405 = vpop.f32.mrf.mxu0
      %v4406 = vadd.f32 %v4211, %v4405
      %v4407 = vpop.f32.mrf.mxu0
      %4408 = vmatprep.mubr.f32.mxu0 0.0
      %v4409 = vand.u32 %v3030, 4294901760
      %4410 = vmatmul.mubr.f32.gmra.mxu0 %v4409
      %v4411 = vpop.f32.mrf.mxu0
      %v4412 = vadd.f32 %v4217, %v4411
      %v4413 = vpop.f32.mrf.mxu0
      %4414 = vmatprep.mubr.f32.mxu0 0.0
      %v4415 = vand.u32 %v3031, 4294901760
      %4416 = vmatmul.mubr.f32.gmra.mxu0 %v4415
      %v4417 = vpop.f32.mrf.mxu0
      %v4418 = vadd.f32 %v4223, %v4417
      %v4419 = vpop.f32.mrf.mxu0
      %4420 = vmatprep.mubr.f32.mxu0 0.0
      %v4421 = vand.u32 %v3032, 4294901760
      %4422 = vmatmul.mubr.f32.gmra.mxu0 %v4421
      %v4423 = vpop.f32.mrf.mxu0
      %v4424 = vadd.f32 %v4229, %v4423
      %v4425 = vpop.f32.mrf.mxu0
      %4426 = vmatprep.mubr.f32.mxu0 0.0
      %v4427 = vand.u32 %v3033, 4294901760
      %4428 = vmatmul.mubr.f32.gmra.mxu0 %v4427
      %v4429 = vpop.f32.mrf.mxu0
      %v4430 = vadd.f32 %v4235, %v4429
      %v4431 = vpop.f32.mrf.mxu0
      %4432 = vmatprep.mubr.f32.mxu0 0.0
      %v4433 = vand.u32 %v3034, 4294901760
      %4434 = vmatmul.mubr.f32.gmra.mxu0 %v4433
      %v4435 = vpop.f32.mrf.mxu0
      %v4436 = vadd.f32 %v4241, %v4435
      %v4437 = vpop.f32.mrf.mxu0
      %4438 = vmatprep.mubr.f32.mxu0 0.0
      %v4439 = vand.u32 %v3035, 4294901760
      %4440 = vmatmul.mubr.f32.gmra.mxu0 %v4439
      %v4441 = vpop.f32.mrf.mxu0
      %v4442 = vadd.f32 %v4247, %v4441
      %v4443 = vpop.f32.mrf.mxu0
      %4444 = vmatprep.mubr.f32.mxu0 0.0
      %v4445 = vand.u32 %v3036, 4294901760
      %4446 = vmatmul.mubr.f32.gmra.mxu0 %v4445
      %v4447 = vpop.f32.mrf.mxu0
      %v4448 = vadd.f32 %v4253, %v4447
      %v4449 = vpop.f32.mrf.mxu0
      %4450 = vmatprep.mubr.f32.mxu0 0.0
      %v4451 = vand.u32 %v3037, 4294901760
      %4452 = vmatmul.mubr.f32.gmra.mxu0 %v4451
      %v4453 = vpop.f32.mrf.mxu0
      %v4454 = vadd.f32 %v4259, %v4453
      %v4455 = vpop.f32.mrf.mxu0
      %4456 = vdwg.mxu0
      %v4457 = vtanh.pop %v4346
      %v4458 = vtanh.pop %v4352
      %v4459 = vtanh.pop %v4358
      %v4460 = vtanh.pop %v4364
      %v4461 = vtanh.pop %v4370
      %v4462 = vtanh.pop %v4376
      %v4463 = vtanh.pop %v4382
      %v4464 = vtanh.pop %v4388
      %v4465 = vtanh.pop %v4394
      %v4466 = vtanh.pop %v4400
      %v4467 = vtanh.pop %v4406
      %v4468 = vtanh.pop %v4412
      %v4469 = vtanh.pop %v4418
      %v4470 = vtanh.pop %v4424
      %v4471 = vtanh.pop %v4430
      %v4472 = vtanh.pop %v4436
      %v4473 = vtanh.pop %v4442
      %v4474 = vtanh.pop %v4448
      %v4475 = vtanh.pop %v4454
      %v4476 = vlaneseq
      %v4477 = vand.u32 %v4476, 127
      %vm4478 = vcmp.eq.s32.totalorder %v4477, 4
      %v4479 = vxor.u32 %v4457, 2147483648
      %v4480 = vxor.u32 %v4458, 2147483648
      %v4481 = vxor.u32 %v4459, 2147483648
      %v4482 = vxor.u32 %v4460, 2147483648
      %v4483 = vxor.u32 %v4461, 2147483648
      %v4484 = vxor.u32 %v4462, 2147483648
      %v4485 = vxor.u32 %v4463, 2147483648
      %v4486 = vxor.u32 %v4464, 2147483648
      %v4487 = vxor.u32 %v4465, 2147483648
      %v4488 = vxor.u32 %v4466, 2147483648
      %v4489 = vxor.u32 %v4467, 2147483648
      %v4490 = vxor.u32 %v4468, 2147483648
      %v4491 = vxor.u32 %v4469, 2147483648
      %v4492 = vxor.u32 %v4470, 2147483648
      %v4493 = vxor.u32 %v4471, 2147483648
      %v4494 = vxor.u32 %v4472, 2147483648
      %v4495 = vxor.u32 %v4473, 2147483648
      %v4496 = vxor.u32 %v4474, 2147483648
      %v4497 = vxor.u32 %v4475, 2147483648
      %v4498 = vmul.f32 %v4479, 1.442695
      %v4499 = vpow.pop %v4498
      %v4500 = vmul.f32 %v4480, 1.442695
      %v4501 = vpow.pop %v4500
      %v4502 = vmul.f32 %v4481, 1.442695
      %v4503 = vpow.pop %v4502
      %v4504 = vmul.f32 %v4482, 1.442695
      %v4505 = vpow.pop %v4504
      %v4506 = vmul.f32 %v4483, 1.442695
      %v4507 = vpow.pop %v4506
      %v4508 = vmul.f32 %v4484, 1.442695
      %v4509 = vpow.pop %v4508
      %v4510 = vmul.f32 %v4485, 1.442695
      %v4511 = vpow.pop %v4510
      %v4512 = vmul.f32 %v4486, 1.442695
      %v4513 = vpow.pop %v4512
      %v4514 = vmul.f32 %v4487, 1.442695
      %v4515 = vpow.pop %v4514
      %v4516 = vmul.f32 %v4488, 1.442695
      %v4517 = vpow.pop %v4516
      %v4518 = vmul.f32 %v4489, 1.442695
      %v4519 = vpow.pop %v4518
      %v4520 = vmul.f32 %v4490, 1.442695
      %v4521 = vpow.pop %v4520
      %v4522 = vmul.f32 %v4491, 1.442695
      %v4523 = vpow.pop %v4522
      %v4524 = vmul.f32 %v4492, 1.442695
      %v4525 = vpow.pop %v4524
      %v4526 = vmul.f32 %v4493, 1.442695
      %v4527 = vpow.pop %v4526
      %v4528 = vmul.f32 %v4494, 1.442695
      %v4529 = vpow.pop %v4528
      %v4530 = vmul.f32 %v4495, 1.442695
      %v4531 = vpow.pop %v4530
      %v4532 = vmul.f32 %v4496, 1.442695
      %v4533 = vpow.pop %v4532
      %v4534 = vmul.f32 %v4497, 1.442695
      %v4535 = vpow.pop %v4534
      %v4536 = vadd.f32 %v4499, 1.0
      %v4537 = vadd.f32 %v4501, 1.0
      %v4538 = vadd.f32 %v4503, 1.0
      %v4539 = vadd.f32 %v4505, 1.0
      %v4540 = vadd.f32 %v4507, 1.0
      %v4541 = vadd.f32 %v4509, 1.0
      %v4542 = vadd.f32 %v4511, 1.0
      %v4543 = vadd.f32 %v4513, 1.0
      %v4544 = vadd.f32 %v4515, 1.0
      %v4545 = vadd.f32 %v4517, 1.0
      %v4546 = vadd.f32 %v4519, 1.0
      %v4547 = vadd.f32 %v4521, 1.0
      %v4548 = vadd.f32 %v4523, 1.0
      %v4549 = vadd.f32 %v4525, 1.0
      %v4550 = vadd.f32 %v4527, 1.0
      %v4551 = vadd.f32 %v4529, 1.0
      %v4552 = vadd.f32 %v4531, 1.0
      %v4553 = vadd.f32 %v4533, 1.0
      %v4554 = vadd.f32 %v4535, 1.0
      %v4555 = vrcp.pop %v4536
      %v4556 = vmul.f32 1.0, %v4555
      %v4557 = vrcp.pop %v4537
      %v4558 = vmul.f32 1.0, %v4557
      %v4559 = vrcp.pop %v4538
      %v4560 = vmul.f32 1.0, %v4559
      %v4561 = vrcp.pop %v4539
      %v4562 = vmul.f32 1.0, %v4561
      %v4563 = vrcp.pop %v4540
      %v4564 = vmul.f32 1.0, %v4563
      %v4565 = vrcp.pop %v4541
      %v4566 = vmul.f32 1.0, %v4565
      %v4567 = vrcp.pop %v4542
      %v4568 = vmul.f32 1.0, %v4567
      %v4569 = vrcp.pop %v4543
      %v4570 = vmul.f32 1.0, %v4569
      %v4571 = vrcp.pop %v4544
      %v4572 = vmul.f32 1.0, %v4571
      %v4573 = vrcp.pop %v4545
      %v4574 = vmul.f32 1.0, %v4573
      %v4575 = vrcp.pop %v4546
      %v4576 = vmul.f32 1.0, %v4575
      %v4577 = vrcp.pop %v4547
      %v4578 = vmul.f32 1.0, %v4577
      %v4579 = vrcp.pop %v4548
      %v4580 = vmul.f32 1.0, %v4579
      %v4581 = vrcp.pop %v4549
      %v4582 = vmul.f32 1.0, %v4581
      %v4583 = vrcp.pop %v4550
      %v4584 = vmul.f32 1.0, %v4583
      %v4585 = vrcp.pop %v4551
      %v4586 = vmul.f32 1.0, %v4585
      %v4587 = vrcp.pop %v4552
      %v4588 = vmul.f32 1.0, %v4587
      %v4589 = vrcp.pop %v4553
      %v4590 = vmul.f32 1.0, %v4589
      %v4591 = vrcp.pop %v4554
      %v4592 = vmul.f32 1.0, %v4591
      %v4593 = vsel %vm4478, %v4556, %v4457
      %v4594 = vsel %vm4478, %v4558, %v4458
      %v4595 = vsel %vm4478, %v4560, %v4459
      %v4596 = vsel %vm4478, %v4562, %v4460
      %v4597 = vsel %vm4478, %v4564, %v4461
      %v4598 = vsel %vm4478, %v4566, %v4462
      %v4599 = vsel %vm4478, %v4568, %v4463
      %v4600 = vsel %vm4478, %v4570, %v4464
      %v4601 = vsel %vm4478, %v4572, %v4465
      %v4602 = vsel %vm4478, %v4574, %v4466
      %v4603 = vsel %vm4478, %v4576, %v4467
      %v4604 = vsel %vm4478, %v4578, %v4468
      %v4605 = vsel %vm4478, %v4580, %v4469
      %v4606 = vsel %vm4478, %v4582, %v4470
      %v4607 = vsel %vm4478, %v4584, %v4471
      %v4608 = vsel %vm4478, %v4586, %v4472
      %v4609 = vsel %vm4478, %v4588, %v4473
      %v4610 = vsel %vm4478, %v4590, %v4474
      %v4611 = vsel %vm4478, %v4592, %v4475
      %vm4612 = vcmask 64512
      %4613 = vst.msk [vmem:[%s226] sm:$0xff] %vm4612, %v4593
      %4614 = vst.msk [vmem:[%s226 + $0x8] sm:$0xff] %vm4612, %v4594
      %4615 = vst.msk [vmem:[%s226 + $0x10] sm:$0xff] %vm4612, %v4595
      %4616 = vst.msk [vmem:[%s226 + $0x18] sm:$0xff] %vm4612, %v4596
      %4617 = vst.msk [vmem:[%s226 + $0x20] sm:$0xff] %vm4612, %v4597
      %4618 = vst.msk [vmem:[%s226 + $0x28] sm:$0xff] %vm4612, %v4598
      %4619 = vst.msk [vmem:[%s226 + $0x30] sm:$0xff] %vm4612, %v4599
      %4620 = vst.msk [vmem:[%s226 + $0x38] sm:$0xff] %vm4612, %v4600
      %4621 = vst.msk [vmem:[%s226 + $0x40] sm:$0xff] %vm4612, %v4601
      %4622 = vst.msk [vmem:[%s226 + $0x48] sm:$0xff] %vm4612, %v4602
      %4623 = vst.msk [vmem:[%s226 + $0x50] sm:$0xff] %vm4612, %v4603
      %4624 = vst.msk [vmem:[%s226 + $0x58] sm:$0xff] %vm4612, %v4604
      %4625 = vst.msk [vmem:[%s226 + $0x60] sm:$0xff] %vm4612, %v4605
      %4626 = vst.msk [vmem:[%s226 + $0x68] sm:$0xff] %vm4612, %v4606
      %4627 = vst.msk [vmem:[%s226 + $0x70] sm:$0xff] %vm4612, %v4607
      %4628 = vst.msk [vmem:[%s226 + $0x78] sm:$0xff] %vm4612, %v4608
      %4629 = vst.msk [vmem:[%s226 + $0x80] sm:$0xff] %vm4612, %v4609
      %4630 = vst.msk [vmem:[%s226 + $0x88] sm:$0xff] %vm4612, %v4610
      %4631 = vst.msk [vmem:[%s226 + $0x90] sm:$0xff] %vm4612, %v4611
      %s4632 = smul.u32 19, %s16
      %p4633 = scmp.lt.s32.totalorder %s4632, 37
      %s4634 = scalar_select %p4633, %s4632, 37
      %s4635 = smul.addr %s4634, 8
      %s4636 = scalar_lea.vmem %s5, %s4635
      // Predicated region
      $region41: #{tpu_custom_call.1} parent=39 // pred_check
        %p4637 = pneg %p144
      $region42: #{tpu_custom_call.1} parent=39 // pred_check_branch
        %4639 = sbr.rel (%p4637) target = $region44
      $region43: #{tpu_custom_call.1} parent=39 // pred_region
        %s4640 = smul.u32 19, %s16
      $region44: #{tpu_custom_call.1} parent=39 // pred_fallthru
        _
    $region40: #{tpu_custom_call.1} parent=5 // pred_fallthru
      _
    %p4641 = scmp.le.s32.totalorder 2, %s11
    // Predicated region
    $region45: #{tpu_custom_call.1} parent=5 // pred_check
      %p4642 = pneg %p4641
    $region46: #{tpu_custom_call.1} parent=5 // pred_check_branch
      %4644 = sbr.rel (%p4642) target = $region48
    $region47: #{tpu_custom_call.1} parent=5 // pred_region
      %s4645 = ssub.s32 %s11, 2
      // Predicated region
      $region49: #{tpu_custom_call.1} parent=47 // pred_check
        %p4646 = pneg %p150
      $region50: #{tpu_custom_call.1} parent=47 // pred_check_branch
        %4648 = sbr.rel (%p4646) target = $region52
      $region51: #{tpu_custom_call.1} parent=47 // pred_region
        %s4649 = smul.u32 19, %s17
        %p4650 = scmp.lt.s32.totalorder %s4649, 37
        %s4651 = scalar_select %p4650, %s4649, 37
        %s4652 = smul.addr %s4651, 8
        %s4653 = scalar_lea.vmem %s5, %s4652
      $region52: #{tpu_custom_call.1} parent=47 // pred_fallthru
        _
    $region48: #{tpu_custom_call.1} parent=5 // pred_fallthru
      _
  $region6: #{tpu_custom_call.1} parent=0 // loop_footer
    %s15 = sadd.s32 1, %s11
  $region7: #{tpu_custom_call.1} parent=0 // loop_footer_branch
    %10 = sbr.rel target = $region3
  $region8: #{tpu_custom_call.1} parent=0 // loop_exit
    _

</llo_original>
